<compile_context>
chip_gen: v7x
topology: tpu7x:2x2x1
jax: 0.10.0
libtpu: 0.0.40
codegen_flags: <defaults>
</compile_context>

<pallas_src>
import functools

import jax
import jax.numpy as jnp
from jax.experimental import pallas as pl
from jax.experimental.pallas import tpu as pltpu


def _round_up(n, m):
    return ((n + m - 1) // m) * m


def _tv3d_kernel(lut_ref, out_ref, *, dim):
    D = dim
    R = 3 * D          # valid rows: row = c*D + b
    C = D * D          # valid cols: col = g*D + r
    x = lut_ref[...]   # (R_pad, C_pad) f32, zero padded past (R, C)
    R_pad, C_pad = x.shape

    row = jax.lax.broadcasted_iota(jnp.int32, (R_pad, C_pad), 0)
    col = jax.lax.broadcasted_iota(jnp.int32, (R_pad, C_pad), 1)

    # Decompose col -> (g, r) and row -> (c, b) without integer div/mod:
    # reciprocal-multiply + truncate is exact here (margin 0.5/D >> f32 rounding).
    inv_d = 1.0 / D
    g_idx = ((col.astype(jnp.float32) + 0.5) * inv_d).astype(jnp.int32)
    r_idx = col - D * g_idx
    b_q = ((row.astype(jnp.float32) + 0.5) * inv_d).astype(jnp.int32)
    b_idx = row - D * b_q

    in_bounds = (row < R) & (col < C)

    # Neighbor values via XLU rolls (positive shift of size-k == roll by -k).
    nbr_r = pltpu.roll(x, shift=C_pad - 1, axis=1)   # x[., col + 1]
    nbr_g = pltpu.roll(x, shift=C_pad - D, axis=1)   # x[., col + D]
    nbr_b = pltpu.roll(x, shift=R_pad - 1, axis=0)   # x[row + 1, .]

    # Masked finite differences (mask applied BEFORE square / relu).
    dif_r = jnp.where(in_bounds & (r_idx < D - 1), x - nbr_r, 0.0)
    dif_g = jnp.where(in_bounds & (g_idx < D - 1), x - nbr_g, 0.0)
    dif_b = jnp.where(in_bounds & (b_idx < D - 1), x - nbr_b, 0.0)

    # Folded weights: all ones with the (index 0) and (index D-2) slices doubled.
    w_r = jnp.where((r_idx == 0) | (r_idx == D - 2), 2.0, 1.0)
    w_g = jnp.where((g_idx == 0) | (g_idx == D - 2), 2.0, 1.0)
    w_b = jnp.where((b_idx == 0) | (b_idx == D - 2), 2.0, 1.0)

    tv_acc = dif_r * dif_r * w_r + dif_g * dif_g * w_g + dif_b * dif_b * w_b
    mn_acc = (jnp.maximum(dif_r, 0.0) + jnp.maximum(dif_g, 0.0)
              + jnp.maximum(dif_b, 0.0))

    inv_count = 1.0 / float(3 * D * D * (D - 1))   # same count for all three axes
    out_ref[0] = jnp.sum(tv_acc) * inv_count
    out_ref[1] = jnp.sum(mn_acc) * inv_count


def tv3d_pallas(lut):
    """lut: (3, D, D, D) float32.  Returns (tv, mn) — same semantics as TV3D.forward."""
    c, d0, d1, d2 = lut.shape
    assert c == 3 and d0 == d1 == d2, lut.shape
    D = d0
    R, C = 3 * D, D * D
    R_pad = _round_up(R, 8)
    C_pad = _round_up(C, 128)

    # Layout plumbing only: lane-dense 2D view, zero-padded to an aligned shape.
    x2d = lut.reshape(R, C).astype(jnp.float32)
    x2d = jnp.pad(x2d, ((0, R_pad - R), (0, C_pad - C)))

    out = pl.pallas_call(
        functools.partial(_tv3d_kernel, dim=D),
        out_shape=jax.ShapeDtypeStruct((2,), jnp.float32),
        in_specs=[pl.BlockSpec(memory_space=pltpu.VMEM)],
        out_specs=pl.BlockSpec(memory_space=pltpu.SMEM),
        cost_estimate=pl.CostEstimate(
            flops=30 * 3 * D * D * D,
            transcendentals=0,
            bytes_accessed=R_pad * C_pad * 4 + 8,
        ),
    )(x2d)
    return out[0], out[1]


def make_tv3d_weights(dim: int):
    """Deterministic weight init, identical to the torch __init__ (for the reference only)."""
    wr = jnp.ones((3, dim, dim, dim - 1), jnp.float32)
    wr = wr.at[:, :, :, 0].multiply(2.0).at[:, :, :, dim - 2].multiply(2.0)
    wg = jnp.ones((3, dim, dim - 1, dim), jnp.float32)
    wg = wg.at[:, :, 0, :].multiply(2.0).at[:, :, dim - 2, :].multiply(2.0)
    wb = jnp.ones((3, dim - 1, dim, dim), jnp.float32)
    wb = wb.at[:, 0, :, :].multiply(2.0).at[:, dim - 2, :, :].multiply(2.0)
    return wr, wg, wb


def tv3d_ref(lut, wr, wg, wb):
    """Pure-JAX reference mirroring the torch forward exactly (explicit weights)."""
    dif_r = lut[:, :, :, :-1] - lut[:, :, :, 1:]
    dif_g = lut[:, :, :-1, :] - lut[:, :, 1:, :]
    dif_b = lut[:, :-1, :, :] - lut[:, 1:, :, :]
    tv = (jnp.mean(dif_r ** 2 * wr) + jnp.mean(dif_g ** 2 * wg)
          + jnp.mean(dif_b ** 2 * wb))
    mn = (jnp.mean(jax.nn.relu(dif_r)) + jnp.mean(jax.nn.relu(dif_g))
          + jnp.mean(jax.nn.relu(dif_b)))
    return tv, mn


if __name__ == "__main__":
    # TODO(synk): DistributedDataParallel/DataParallel unwrapping is host-side torch module
    # plumbing; here the "lut module" is just its lut tensor.
    key = jax.random.PRNGKey(0)
    fn = jax.jit(tv3d_pallas)
    for dim in (33, 16):   # module default (exercises padding/masks) + an aligned small size
        lut = jax.random.normal(jax.random.fold_in(key, dim),
                                (3, dim, dim, dim), dtype=jnp.float32)
        tv, mn = jax.block_until_ready(fn(lut))

        wr, wg, wb = make_tv3d_weights(dim)
        tv_r, mn_r = tv3d_ref(lut, wr, wg, wb)
        assert jnp.allclose(tv, tv_r, rtol=1e-5, atol=1e-5), (dim, tv, tv_r)
        assert jnp.allclose(mn, mn_r, rtol=1e-5, atol=1e-5), (dim, mn, mn_r)

    print("KERNEL_OK")
</pallas_src>

<mosaic_0001>
module attributes {stable_mosaic.version = 11 : i64} {
  func.func @_tv3d_kernel(%arg0: memref<104x1152xf32, #tpu.memory_space<vmem>>, %arg1: memref<2xf32, #tpu.memory_space<smem>>) attributes {dimension_semantics = [], scalar_prefetch = 0 : i64, scratch_operands = 0 : i64, tpu.core_type = #tpu.core_type<tc>} {
    %c0 = arith.constant 0 : index
    %c0_0 = arith.constant 0 : index
    %0 = vector.load %arg0[%c0, %c0_0] : memref<104x1152xf32, #tpu.memory_space<vmem>>, vector<104x1152xf32>
    %1 = tpu.iota {dimensions = array<i32: 0>} : vector<104x1152xi32>
    %2 = tpu.iota {dimensions = array<i32: 1>} : vector<104x1152xi32>
    %3 = arith.sitofp %2 : vector<104x1152xi32> to vector<104x1152xf32>
    %cst = arith.constant 5.000000e-01 : f32
    %4 = vector.broadcast %cst : f32 to vector<104x1152xf32>
    %5 = arith.addf %3, %4 : vector<104x1152xf32>
    %cst_1 = arith.constant 0.0303030312 : f32
    %6 = vector.broadcast %cst_1 : f32 to vector<104x1152xf32>
    %7 = arith.mulf %5, %6 : vector<104x1152xf32>
    %8 = arith.fptosi %7 : vector<104x1152xf32> to vector<104x1152xi32>
    %c33_i32 = arith.constant 33 : i32
    %9 = vector.broadcast %c33_i32 : i32 to vector<104x1152xi32>
    %10 = arith.muli %9, %8 : vector<104x1152xi32>
    %11 = arith.subi %2, %10 : vector<104x1152xi32>
    %12 = arith.sitofp %1 : vector<104x1152xi32> to vector<104x1152xf32>
    %cst_2 = arith.constant 5.000000e-01 : f32
    %13 = vector.broadcast %cst_2 : f32 to vector<104x1152xf32>
    %14 = arith.addf %12, %13 : vector<104x1152xf32>
    %cst_3 = arith.constant 0.0303030312 : f32
    %15 = vector.broadcast %cst_3 : f32 to vector<104x1152xf32>
    %16 = arith.mulf %14, %15 : vector<104x1152xf32>
    %17 = arith.fptosi %16 : vector<104x1152xf32> to vector<104x1152xi32>
    %c33_i32_4 = arith.constant 33 : i32
    %18 = vector.broadcast %c33_i32_4 : i32 to vector<104x1152xi32>
    %19 = arith.muli %18, %17 : vector<104x1152xi32>
    %20 = arith.subi %1, %19 : vector<104x1152xi32>
    %c99_i32 = arith.constant 99 : i32
    %21 = vector.broadcast %c99_i32 : i32 to vector<104x1152xi32>
    %22 = arith.cmpi slt, %1, %21 : vector<104x1152xi32>
    %c1089_i32 = arith.constant 1089 : i32
    %23 = vector.broadcast %c1089_i32 : i32 to vector<104x1152xi32>
    %24 = arith.cmpi slt, %2, %23 : vector<104x1152xi32>
    %25 = arith.andi %22, %24 : vector<104x1152xi1>
    %c1151_i32 = arith.constant 1151 : i32
    %26 = tpu.dynamic_rotate %0 by %c1151_i32 dim 1 : vector<104x1152xf32>, i32 -> vector<104x1152xf32>
    %c1119_i32 = arith.constant 1119 : i32
    %27 = tpu.dynamic_rotate %0 by %c1119_i32 dim 1 : vector<104x1152xf32>, i32 -> vector<104x1152xf32>
    %c103_i32 = arith.constant 103 : i32
    %28 = tpu.dynamic_rotate %0 by %c103_i32 dim 0 : vector<104x1152xf32>, i32 -> vector<104x1152xf32>
    %c32_i32 = arith.constant 32 : i32
    %29 = vector.broadcast %c32_i32 : i32 to vector<104x1152xi32>
    %30 = arith.cmpi slt, %11, %29 : vector<104x1152xi32>
    %31 = arith.andi %25, %30 : vector<104x1152xi1>
    %32 = arith.subf %0, %26 : vector<104x1152xf32>
    %cst_5 = arith.constant 0.000000e+00 : f32
    %33 = vector.broadcast %cst_5 : f32 to vector<104x1152xf32>
    %34 = arith.select %31, %32, %33 : vector<104x1152xi1>, vector<104x1152xf32>
    %c32_i32_6 = arith.constant 32 : i32
    %35 = vector.broadcast %c32_i32_6 : i32 to vector<104x1152xi32>
    %36 = arith.cmpi slt, %8, %35 : vector<104x1152xi32>
    %37 = arith.andi %25, %36 : vector<104x1152xi1>
    %38 = arith.subf %0, %27 : vector<104x1152xf32>
    %cst_7 = arith.constant 0.000000e+00 : f32
    %39 = vector.broadcast %cst_7 : f32 to vector<104x1152xf32>
    %40 = arith.select %37, %38, %39 : vector<104x1152xi1>, vector<104x1152xf32>
    %c32_i32_8 = arith.constant 32 : i32
    %41 = vector.broadcast %c32_i32_8 : i32 to vector<104x1152xi32>
    %42 = arith.cmpi slt, %20, %41 : vector<104x1152xi32>
    %43 = arith.andi %25, %42 : vector<104x1152xi1>
    %44 = arith.subf %0, %28 : vector<104x1152xf32>
    %cst_9 = arith.constant 0.000000e+00 : f32
    %45 = vector.broadcast %cst_9 : f32 to vector<104x1152xf32>
    %46 = arith.select %43, %44, %45 : vector<104x1152xi1>, vector<104x1152xf32>
    %c0_i32 = arith.constant 0 : i32
    %47 = vector.broadcast %c0_i32 : i32 to vector<104x1152xi32>
    %48 = arith.cmpi eq, %11, %47 : vector<104x1152xi32>
    %c31_i32 = arith.constant 31 : i32
    %49 = vector.broadcast %c31_i32 : i32 to vector<104x1152xi32>
    %50 = arith.cmpi eq, %11, %49 : vector<104x1152xi32>
    %51 = arith.ori %48, %50 : vector<104x1152xi1>
    %cst_10 = arith.constant 2.000000e+00 : f32
    %cst_11 = arith.constant 1.000000e+00 : f32
    %52 = vector.broadcast %cst_10 : f32 to vector<104x1152xf32>
    %53 = vector.broadcast %cst_11 : f32 to vector<104x1152xf32>
    %54 = arith.select %51, %52, %53 : vector<104x1152xi1>, vector<104x1152xf32>
    %c0_i32_12 = arith.constant 0 : i32
    %55 = vector.broadcast %c0_i32_12 : i32 to vector<104x1152xi32>
    %56 = arith.cmpi eq, %8, %55 : vector<104x1152xi32>
    %c31_i32_13 = arith.constant 31 : i32
    %57 = vector.broadcast %c31_i32_13 : i32 to vector<104x1152xi32>
    %58 = arith.cmpi eq, %8, %57 : vector<104x1152xi32>
    %59 = arith.ori %56, %58 : vector<104x1152xi1>
    %cst_14 = arith.constant 2.000000e+00 : f32
    %cst_15 = arith.constant 1.000000e+00 : f32
    %60 = vector.broadcast %cst_14 : f32 to vector<104x1152xf32>
    %61 = vector.broadcast %cst_15 : f32 to vector<104x1152xf32>
    %62 = arith.select %59, %60, %61 : vector<104x1152xi1>, vector<104x1152xf32>
    %c0_i32_16 = arith.constant 0 : i32
    %63 = vector.broadcast %c0_i32_16 : i32 to vector<104x1152xi32>
    %64 = arith.cmpi eq, %20, %63 : vector<104x1152xi32>
    %c31_i32_17 = arith.constant 31 : i32
    %65 = vector.broadcast %c31_i32_17 : i32 to vector<104x1152xi32>
    %66 = arith.cmpi eq, %20, %65 : vector<104x1152xi32>
    %67 = arith.ori %64, %66 : vector<104x1152xi1>
    %cst_18 = arith.constant 2.000000e+00 : f32
    %cst_19 = arith.constant 1.000000e+00 : f32
    %68 = vector.broadcast %cst_18 : f32 to vector<104x1152xf32>
    %69 = vector.broadcast %cst_19 : f32 to vector<104x1152xf32>
    %70 = arith.select %67, %68, %69 : vector<104x1152xi1>, vector<104x1152xf32>
    %71 = arith.mulf %34, %34 : vector<104x1152xf32>
    %72 = arith.mulf %71, %54 : vector<104x1152xf32>
    %73 = arith.mulf %40, %40 : vector<104x1152xf32>
    %74 = arith.mulf %73, %62 : vector<104x1152xf32>
    %75 = arith.addf %72, %74 : vector<104x1152xf32>
    %76 = arith.mulf %46, %46 : vector<104x1152xf32>
    %77 = arith.mulf %76, %70 : vector<104x1152xf32>
    %78 = arith.addf %75, %77 : vector<104x1152xf32>
    %cst_20 = arith.constant 0.000000e+00 : f32
    %79 = vector.broadcast %cst_20 : f32 to vector<104x1152xf32>
    %80 = arith.maximumf %34, %79 : vector<104x1152xf32>
    %cst_21 = arith.constant 0.000000e+00 : f32
    %81 = vector.broadcast %cst_21 : f32 to vector<104x1152xf32>
    %82 = arith.maximumf %40, %81 : vector<104x1152xf32>
    %83 = arith.addf %80, %82 : vector<104x1152xf32>
    %cst_22 = arith.constant 0.000000e+00 : f32
    %84 = vector.broadcast %cst_22 : f32 to vector<104x1152xf32>
    %85 = arith.maximumf %46, %84 : vector<104x1152xf32>
    %86 = arith.addf %83, %85 : vector<104x1152xf32>
    %87 = vector.shape_cast %78 : vector<104x1152xf32> to vector<1x104x1152xf32>
    %cst_23 = arith.constant dense<0.000000e+00> : vector<1xf32>
    %88 = vector.multi_reduction <add>, %87, %cst_23 [1, 2] : vector<1x104x1152xf32> to vector<1xf32>
    %89 = vector.shape_cast %88 : vector<1xf32> to vector<1x1x1xf32>
    %90 = vector.extract %89[0, 0, 0] : f32 from vector<1x1x1xf32>
    %cst_24 = arith.constant 9.565350e-06 : f32
    %91 = arith.mulf %90, %cst_24 : f32
    %c0_25 = arith.constant 0 : index
    %92 = memref.load %arg1[%c0_25] : memref<2xf32, #tpu.memory_space<smem>>
    memref.store %91, %arg1[%c0_25] : memref<2xf32, #tpu.memory_space<smem>>
    %93 = vector.shape_cast %86 : vector<104x1152xf32> to vector<1x104x1152xf32>
    %cst_26 = arith.constant dense<0.000000e+00> : vector<1xf32>
    %94 = vector.multi_reduction <add>, %93, %cst_26 [1, 2] : vector<1x104x1152xf32> to vector<1xf32>
    %95 = vector.shape_cast %94 : vector<1xf32> to vector<1x1x1xf32>
    %96 = vector.extract %95[0, 0, 0] : f32 from vector<1x1x1xf32>
    %cst_27 = arith.constant 9.565350e-06 : f32
    %97 = arith.mulf %96, %cst_27 : f32
    %c1 = arith.constant 1 : index
    %98 = memref.load %arg1[%c1] : memref<2xf32, #tpu.memory_space<smem>>
    memref.store %97, %arg1[%c1] : memref<2xf32, #tpu.memory_space<smem>>
    return
  }
}

</mosaic_0001>

<llo_original>
// kernel: tv3d_pallas.1
$region0: #{tv3d_pallas.1}
  #allocation0 [shape = 'u32[]', space=smem, size = 0x4, offset = 0x4, fixed_abs, tag = 'smem constant byte address 0x4 - core index']
  #allocation1 [shape = 'u32[144,128]{1,0:T(1,128)}', space=vmem, size = 0x12000, scoped, tag = 'internal scratch']
  %s0 = inlined_call_operand.vmem [shape: f32[104,1152], index: 0, kind: input, shape index: {}]
  %s1 = inlined_call_operand.vmem [shape: f32[2], index: 1, kind: output, shape index: {}]
  %s2 = sld [smem:[#allocation0]]
  $region14: #{tv3d_pallas.1} parent=0
    _
  %s4 = ssub.s32 1, %s2
  %s5 = scalar_select 0, %s4, %s2
  $region1: #{tv3d_pallas.1} parent=0
    #allocation2 [shape = 'u8[512]{0}', space=smem, size = 0x200, scoped, tag = 'output window, operand 0, single buffered']
    #allocation3 [shape = 's32[1]{0}', space=sflag, size = 0x4, scoped, tag = 'scoped memory for tv3d_pallas.1']
    %6 = vsyncpa [#allocation3], 0
    // Predicated region
    $region2: #{tv3d_pallas.1} parent=1 // pred_check
      _
    $region3: #{tv3d_pallas.1} parent=1 // pred_check_branch
      %8 = sbr.rel (0) target = $region5
    $region4: #{tv3d_pallas.1} parent=1 // pred_region
      _
    $region5: #{tv3d_pallas.1} parent=1 // pred_fallthru
      _
    %v9 = vld [vmem:[%s0] sm:$0xff]
    %v10 = vld [vmem:[%s0 + $0x8] sm:$0xff]
    %v11 = vld [vmem:[%s0 + $0x10] sm:$0xff]
    %v12 = vld [vmem:[%s0 + $0x18] sm:$0xff]
    %v13 = vld [vmem:[%s0 + $0x20] sm:$0xff]
    %v14 = vld [vmem:[%s0 + $0x28] sm:$0xff]
    %v15 = vld [vmem:[%s0 + $0x30] sm:$0xff]
    %v16 = vld [vmem:[%s0 + $0x38] sm:$0xff]
    %v17 = vld [vmem:[%s0 + $0x40] sm:$0xff]
    %v18 = vld [vmem:[%s0 + $0x48] sm:$0xff]
    %v19 = vld [vmem:[%s0 + $0x50] sm:$0xff]
    %v20 = vld [vmem:[%s0 + $0x58] sm:$0xff]
    %v21 = vld [vmem:[%s0 + $0x60] sm:$0xff]
    %v22 = vld [vmem:[%s0 + $0x68] sm:$0xff]
    %v23 = vld [vmem:[%s0 + $0x70] sm:$0xff]
    %v24 = vld [vmem:[%s0 + $0x78] sm:$0xff]
    %v25 = vld [vmem:[%s0 + $0x80] sm:$0xff]
    %v26 = vld [vmem:[%s0 + $0x88] sm:$0xff]
    %v27 = vld [vmem:[%s0 + $0x90] sm:$0xff]
    %v28 = vld [vmem:[%s0 + $0x98] sm:$0xff]
    %v29 = vld [vmem:[%s0 + $0xa0] sm:$0xff]
    %v30 = vld [vmem:[%s0 + $0xa8] sm:$0xff]
    %v31 = vld [vmem:[%s0 + $0xb0] sm:$0xff]
    %v32 = vld [vmem:[%s0 + $0xb8] sm:$0xff]
    %v33 = vld [vmem:[%s0 + $0xc0] sm:$0xff]
    %v34 = vld [vmem:[%s0 + $0xc8] sm:$0xff]
    %v35 = vld [vmem:[%s0 + $0xd0] sm:$0xff]
    %v36 = vld [vmem:[%s0 + $0xd8] sm:$0xff]
    %v37 = vld [vmem:[%s0 + $0xe0] sm:$0xff]
    %v38 = vld [vmem:[%s0 + $0xe8] sm:$0xff]
    %v39 = vld [vmem:[%s0 + $0xf0] sm:$0xff]
    %v40 = vld [vmem:[%s0 + $0xf8] sm:$0xff]
    %v41 = vld [vmem:[%s0 + $0x100] sm:$0xff]
    %v42 = vld [vmem:[%s0 + $0x108] sm:$0xff]
    %v43 = vld [vmem:[%s0 + $0x110] sm:$0xff]
    %v44 = vld [vmem:[%s0 + $0x118] sm:$0xff]
    %v45 = vld [vmem:[%s0 + $0x120] sm:$0xff]
    %v46 = vld [vmem:[%s0 + $0x128] sm:$0xff]
    %v47 = vld [vmem:[%s0 + $0x130] sm:$0xff]
    %v48 = vld [vmem:[%s0 + $0x138] sm:$0xff]
    %v49 = vld [vmem:[%s0 + $0x140] sm:$0xff]
    %v50 = vld [vmem:[%s0 + $0x148] sm:$0xff]
    %v51 = vld [vmem:[%s0 + $0x150] sm:$0xff]
    %v52 = vld [vmem:[%s0 + $0x158] sm:$0xff]
    %v53 = vld [vmem:[%s0 + $0x160] sm:$0xff]
    %v54 = vld [vmem:[%s0 + $0x168] sm:$0xff]
    %v55 = vld [vmem:[%s0 + $0x170] sm:$0xff]
    %v56 = vld [vmem:[%s0 + $0x178] sm:$0xff]
    %v57 = vld [vmem:[%s0 + $0x180] sm:$0xff]
    %v58 = vld [vmem:[%s0 + $0x188] sm:$0xff]
    %v59 = vld [vmem:[%s0 + $0x190] sm:$0xff]
    %v60 = vld [vmem:[%s0 + $0x198] sm:$0xff]
    %v61 = vld [vmem:[%s0 + $0x1a0] sm:$0xff]
    %v62 = vld [vmem:[%s0 + $0x1a8] sm:$0xff]
    %v63 = vld [vmem:[%s0 + $0x1b0] sm:$0xff]
    %v64 = vld [vmem:[%s0 + $0x1b8] sm:$0xff]
    %v65 = vld [vmem:[%s0 + $0x1c0] sm:$0xff]
    %v66 = vld [vmem:[%s0 + $0x1c8] sm:$0xff]
    %v67 = vld [vmem:[%s0 + $0x1d0] sm:$0xff]
    %v68 = vld [vmem:[%s0 + $0x1d8] sm:$0xff]
    %v69 = vld [vmem:[%s0 + $0x1e0] sm:$0xff]
    %v70 = vld [vmem:[%s0 + $0x1e8] sm:$0xff]
    %v71 = vld [vmem:[%s0 + $0x1f0] sm:$0xff]
    %v72 = vld [vmem:[%s0 + $0x1f8] sm:$0xff]
    %v73 = vld [vmem:[%s0 + $0x200] sm:$0xff]
    %v74 = vld [vmem:[%s0 + $0x208] sm:$0xff]
    %v75 = vld [vmem:[%s0 + $0x210] sm:$0xff]
    %v76 = vld [vmem:[%s0 + $0x218] sm:$0xff]
    %v77 = vld [vmem:[%s0 + $0x220] sm:$0xff]
    %v78 = vld [vmem:[%s0 + $0x228] sm:$0xff]
    %v79 = vld [vmem:[%s0 + $0x230] sm:$0xff]
    %v80 = vld [vmem:[%s0 + $0x238] sm:$0xff]
    %v81 = vld [vmem:[%s0 + $0x240] sm:$0xff]
    %v82 = vld [vmem:[%s0 + $0x248] sm:$0xff]
    %v83 = vld [vmem:[%s0 + $0x250] sm:$0xff]
    %v84 = vld [vmem:[%s0 + $0x258] sm:$0xff]
    %v85 = vld [vmem:[%s0 + $0x260] sm:$0xff]
    %v86 = vld [vmem:[%s0 + $0x268] sm:$0xff]
    %v87 = vld [vmem:[%s0 + $0x270] sm:$0xff]
    %v88 = vld [vmem:[%s0 + $0x278] sm:$0xff]
    %v89 = vld [vmem:[%s0 + $0x280] sm:$0xff]
    %v90 = vld [vmem:[%s0 + $0x288] sm:$0xff]
    %v91 = vld [vmem:[%s0 + $0x290] sm:$0xff]
    %v92 = vld [vmem:[%s0 + $0x298] sm:$0xff]
    %v93 = vld [vmem:[%s0 + $0x2a0] sm:$0xff]
    %v94 = vld [vmem:[%s0 + $0x2a8] sm:$0xff]
    %v95 = vld [vmem:[%s0 + $0x2b0] sm:$0xff]
    %v96 = vld [vmem:[%s0 + $0x2b8] sm:$0xff]
    %v97 = vld [vmem:[%s0 + $0x2c0] sm:$0xff]
    %v98 = vld [vmem:[%s0 + $0x2c8] sm:$0xff]
    %v99 = vld [vmem:[%s0 + $0x2d0] sm:$0xff]
    %v100 = vld [vmem:[%s0 + $0x2d8] sm:$0xff]
    %v101 = vld [vmem:[%s0 + $0x2e0] sm:$0xff]
    %v102 = vld [vmem:[%s0 + $0x2e8] sm:$0xff]
    %v103 = vld [vmem:[%s0 + $0x2f0] sm:$0xff]
    %v104 = vld [vmem:[%s0 + $0x2f8] sm:$0xff]
    %v105 = vld [vmem:[%s0 + $0x300] sm:$0xff]
    %v106 = vld [vmem:[%s0 + $0x308] sm:$0xff]
    %v107 = vld [vmem:[%s0 + $0x310] sm:$0xff]
    %v108 = vld [vmem:[%s0 + $0x318] sm:$0xff]
    %v109 = vld [vmem:[%s0 + $0x320] sm:$0xff]
    %v110 = vld [vmem:[%s0 + $0x328] sm:$0xff]
    %v111 = vld [vmem:[%s0 + $0x330] sm:$0xff]
    %v112 = vld [vmem:[%s0 + $0x338] sm:$0xff]
    %v113 = vld [vmem:[%s0 + $0x340] sm:$0xff]
    %v114 = vld [vmem:[%s0 + $0x348] sm:$0xff]
    %v115 = vld [vmem:[%s0 + $0x350] sm:$0xff]
    %v116 = vld [vmem:[%s0 + $0x358] sm:$0xff]
    %v117 = vld [vmem:[%s0 + $0x360] sm:$0xff]
    %v118 = vld [vmem:[%s0 + $0x368] sm:$0xff]
    %v119 = vld [vmem:[%s0 + $0x370] sm:$0xff]
    %v120 = vld [vmem:[%s0 + $0x378] sm:$0xff]
    %v121 = vld [vmem:[%s0 + $0x380] sm:$0xff]
    %v122 = vld [vmem:[%s0 + $0x388] sm:$0xff]
    %v123 = vld [vmem:[%s0 + $0x390] sm:$0xff]
    %v124 = vld [vmem:[%s0 + $0x398] sm:$0xff]
    %v125 = vld [vmem:[%s0 + $0x3a0] sm:$0xff]
    %v126 = vlaneseq
    %v127 = vshrl.u32 %v126, 7
    %v128 = vadd.s32 %v127, 8
    %v129 = vadd.s32 %v127, 16
    %v130 = vadd.s32 %v127, 24
    %v131 = vadd.s32 %v127, 32
    %v132 = vadd.s32 %v127, 40
    %v133 = vadd.s32 %v127, 48
    %v134 = vadd.s32 %v127, 56
    %v135 = vadd.s32 %v127, 64
    %v136 = vadd.s32 %v127, 72
    %v137 = vadd.s32 %v127, 80
    %v138 = vadd.s32 %v127, 88
    %v139 = vadd.s32 %v127, 96
    %v140 = vlaneseq
    %v141 = vand.u32 %v140, 127
    %v142 = vadd.s32 %v141, 128
    %v143 = vadd.s32 %v141, 256
    %v144 = vadd.s32 %v141, 384
    %v145 = vadd.s32 %v141, 512
    %v146 = vadd.s32 %v141, 640
    %v147 = vadd.s32 %v141, 768
    %v148 = vadd.s32 %v141, 896
    %v149 = vadd.s32 %v141, 1024
    %v150 = vcvt.s32.f32 %v141
    %v151 = vcvt.s32.f32 %v142
    %v152 = vcvt.s32.f32 %v143
    %v153 = vcvt.s32.f32 %v144
    %v154 = vcvt.s32.f32 %v145
    %v155 = vcvt.s32.f32 %v146
    %v156 = vcvt.s32.f32 %v147
    %v157 = vcvt.s32.f32 %v148
    %v158 = vcvt.s32.f32 %v149
    %v159 = vadd.f32 %v150, 0.5
    %v160 = vadd.f32 %v151, 0.5
    %v161 = vadd.f32 %v152, 0.5
    %v162 = vadd.f32 %v153, 0.5
    %v163 = vadd.f32 %v154, 0.5
    %v164 = vadd.f32 %v155, 0.5
    %v165 = vadd.f32 %v156, 0.5
    %v166 = vadd.f32 %v157, 0.5
    %v167 = vadd.f32 %v158, 0.5
    %v168 = vmul.f32 %v159, 0.030303031
    %v169 = vmul.f32 %v160, 0.030303031
    %v170 = vmul.f32 %v161, 0.030303031
    %v171 = vmul.f32 %v162, 0.030303031
    %v172 = vmul.f32 %v163, 0.030303031
    %v173 = vmul.f32 %v164, 0.030303031
    %v174 = vmul.f32 %v165, 0.030303031
    %v175 = vmul.f32 %v166, 0.030303031
    %v176 = vmul.f32 %v167, 0.030303031
    %v177 = vcvt.f32.s32.to.zero.pseudo %v168
    %v178 = vcvt.f32.s32.to.zero.pseudo %v169
    %v179 = vcvt.f32.s32.to.zero.pseudo %v170
    %v180 = vcvt.f32.s32.to.zero.pseudo %v171
    %v181 = vcvt.f32.s32.to.zero.pseudo %v172
    %v182 = vcvt.f32.s32.to.zero.pseudo %v173
    %v183 = vcvt.f32.s32.to.zero.pseudo %v174
    %v184 = vcvt.f32.s32.to.zero.pseudo %v175
    %v185 = vcvt.f32.s32.to.zero.pseudo %v176
    %v186 = vmul.u32 %v177, 33
    %v187 = vmul.u32 %v178, 33
    %v188 = vmul.u32 %v179, 33
    %v189 = vmul.u32 %v180, 33
    %v190 = vmul.u32 %v181, 33
    %v191 = vmul.u32 %v182, 33
    %v192 = vmul.u32 %v183, 33
    %v193 = vmul.u32 %v184, 33
    %v194 = vmul.u32 %v185, 33
    %v195 = vsub.s32 %v141, %v186
    %v196 = vsub.s32 %v142, %v187
    %v197 = vsub.s32 %v143, %v188
    %v198 = vsub.s32 %v144, %v189
    %v199 = vsub.s32 %v145, %v190
    %v200 = vsub.s32 %v146, %v191
    %v201 = vsub.s32 %v147, %v192
    %v202 = vsub.s32 %v148, %v193
    %v203 = vsub.s32 %v149, %v194
    %v204 = vcvt.s32.f32 %v127
    %v205 = vcvt.s32.f32 %v128
    %v206 = vcvt.s32.f32 %v129
    %v207 = vcvt.s32.f32 %v130
    %v208 = vcvt.s32.f32 %v131
    %v209 = vcvt.s32.f32 %v132
    %v210 = vcvt.s32.f32 %v133
    %v211 = vcvt.s32.f32 %v134
    %v212 = vcvt.s32.f32 %v135
    %v213 = vcvt.s32.f32 %v136
    %v214 = vcvt.s32.f32 %v137
    %v215 = vcvt.s32.f32 %v138
    %v216 = vcvt.s32.f32 %v139
    %v217 = vadd.f32 %v204, 0.5
    %v218 = vadd.f32 %v205, 0.5
    %v219 = vadd.f32 %v206, 0.5
    %v220 = vadd.f32 %v207, 0.5
    %v221 = vadd.f32 %v208, 0.5
    %v222 = vadd.f32 %v209, 0.5
    %v223 = vadd.f32 %v210, 0.5
    %v224 = vadd.f32 %v211, 0.5
    %v225 = vadd.f32 %v212, 0.5
    %v226 = vadd.f32 %v213, 0.5
    %v227 = vadd.f32 %v214, 0.5
    %v228 = vadd.f32 %v215, 0.5
    %v229 = vadd.f32 %v216, 0.5
    %v230 = vmul.f32 %v217, 0.030303031
    %v231 = vmul.f32 %v218, 0.030303031
    %v232 = vmul.f32 %v219, 0.030303031
    %v233 = vmul.f32 %v220, 0.030303031
    %v234 = vmul.f32 %v221, 0.030303031
    %v235 = vmul.f32 %v222, 0.030303031
    %v236 = vmul.f32 %v223, 0.030303031
    %v237 = vmul.f32 %v224, 0.030303031
    %v238 = vmul.f32 %v225, 0.030303031
    %v239 = vmul.f32 %v226, 0.030303031
    %v240 = vmul.f32 %v227, 0.030303031
    %v241 = vmul.f32 %v228, 0.030303031
    %v242 = vmul.f32 %v229, 0.030303031
    %v243 = vcvt.f32.s32.to.zero.pseudo %v230
    %v244 = vcvt.f32.s32.to.zero.pseudo %v231
    %v245 = vcvt.f32.s32.to.zero.pseudo %v232
    %v246 = vcvt.f32.s32.to.zero.pseudo %v233
    %v247 = vcvt.f32.s32.to.zero.pseudo %v234
    %v248 = vcvt.f32.s32.to.zero.pseudo %v235
    %v249 = vcvt.f32.s32.to.zero.pseudo %v236
    %v250 = vcvt.f32.s32.to.zero.pseudo %v237
    %v251 = vcvt.f32.s32.to.zero.pseudo %v238
    %v252 = vcvt.f32.s32.to.zero.pseudo %v239
    %v253 = vcvt.f32.s32.to.zero.pseudo %v240
    %v254 = vcvt.f32.s32.to.zero.pseudo %v241
    %v255 = vcvt.f32.s32.to.zero.pseudo %v242
    %v256 = vmul.u32 %v243, 33
    %v257 = vmul.u32 %v244, 33
    %v258 = vmul.u32 %v245, 33
    %v259 = vmul.u32 %v246, 33
    %v260 = vmul.u32 %v247, 33
    %v261 = vmul.u32 %v248, 33
    %v262 = vmul.u32 %v249, 33
    %v263 = vmul.u32 %v250, 33
    %v264 = vmul.u32 %v251, 33
    %v265 = vmul.u32 %v252, 33
    %v266 = vmul.u32 %v253, 33
    %v267 = vmul.u32 %v254, 33
    %v268 = vmul.u32 %v255, 33
    %v269 = vsub.s32 %v127, %v256
    %v270 = vsub.s32 %v128, %v257
    %v271 = vsub.s32 %v129, %v258
    %v272 = vsub.s32 %v130, %v259
    %v273 = vsub.s32 %v131, %v260
    %v274 = vsub.s32 %v132, %v261
    %v275 = vsub.s32 %v133, %v262
    %v276 = vsub.s32 %v134, %v263
    %v277 = vsub.s32 %v135, %v264
    %v278 = vsub.s32 %v136, %v265
    %v279 = vsub.s32 %v137, %v266
    %v280 = vsub.s32 %v138, %v267
    %v281 = vsub.s32 %v139, %v268
    %vm282 = vcmp.lt.s32.totalorder %v127, 99
    %vm283 = vcmp.lt.s32.totalorder %v128, 99
    %vm284 = vcmp.lt.s32.totalorder %v129, 99
    %vm285 = vcmp.lt.s32.totalorder %v130, 99
    %vm286 = vcmp.lt.s32.totalorder %v131, 99
    %vm287 = vcmp.lt.s32.totalorder %v132, 99
    %vm288 = vcmp.lt.s32.totalorder %v133, 99
    %vm289 = vcmp.lt.s32.totalorder %v134, 99
    %vm290 = vcmp.lt.s32.totalorder %v135, 99
    %vm291 = vcmp.lt.s32.totalorder %v136, 99
    %vm292 = vcmp.lt.s32.totalorder %v137, 99
    %vm293 = vcmp.lt.s32.totalorder %v138, 99
    %vm294 = vcmp.lt.s32.totalorder %v139, 99
    %vm295 = vcmp.lt.s32.totalorder %v141, 1089
    %vm296 = vcmp.lt.s32.totalorder %v142, 1089
    %vm297 = vcmp.lt.s32.totalorder %v143, 1089
    %vm298 = vcmp.lt.s32.totalorder %v144, 1089
    %vm299 = vcmp.lt.s32.totalorder %v145, 1089
    %vm300 = vcmp.lt.s32.totalorder %v146, 1089
    %vm301 = vcmp.lt.s32.totalorder %v147, 1089
    %vm302 = vcmp.lt.s32.totalorder %v148, 1089
    %vm303 = vcmp.lt.s32.totalorder %v149, 1089
    %vm304 = vmand %vm282, %vm295
    %vm305 = vmand %vm282, %vm296
    %vm306 = vmand %vm282, %vm297
    %vm307 = vmand %vm282, %vm298
    %vm308 = vmand %vm282, %vm299
    %vm309 = vmand %vm282, %vm300
    %vm310 = vmand %vm282, %vm301
    %vm311 = vmand %vm282, %vm302
    %vm312 = vmand %vm282, %vm303
    %vm313 = vmand %vm283, %vm295
    %vm314 = vmand %vm283, %vm296
    %vm315 = vmand %vm283, %vm297
    %vm316 = vmand %vm283, %vm298
    %vm317 = vmand %vm283, %vm299
    %vm318 = vmand %vm283, %vm300
    %vm319 = vmand %vm283, %vm301
    %vm320 = vmand %vm283, %vm302
    %vm321 = vmand %vm283, %vm303
    %vm322 = vmand %vm284, %vm295
    %vm323 = vmand %vm284, %vm296
    %vm324 = vmand %vm284, %vm297
    %vm325 = vmand %vm284, %vm298
    %vm326 = vmand %vm284, %vm299
    %vm327 = vmand %vm284, %vm300
    %vm328 = vmand %vm284, %vm301
    %vm329 = vmand %vm284, %vm302
    %vm330 = vmand %vm284, %vm303
    %vm331 = vmand %vm285, %vm295
    %vm332 = vmand %vm285, %vm296
    %vm333 = vmand %vm285, %vm297
    %vm334 = vmand %vm285, %vm298
    %vm335 = vmand %vm285, %vm299
    %vm336 = vmand %vm285, %vm300
    %vm337 = vmand %vm285, %vm301
    %vm338 = vmand %vm285, %vm302
    %vm339 = vmand %vm285, %vm303
    %vm340 = vmand %vm286, %vm295
    %vm341 = vmand %vm286, %vm296
    %vm342 = vmand %vm286, %vm297
    %vm343 = vmand %vm286, %vm298
    %vm344 = vmand %vm286, %vm299
    %vm345 = vmand %vm286, %vm300
    %vm346 = vmand %vm286, %vm301
    %vm347 = vmand %vm286, %vm302
    %vm348 = vmand %vm286, %vm303
    %vm349 = vmand %vm287, %vm295
    %vm350 = vmand %vm287, %vm296
    %vm351 = vmand %vm287, %vm297
    %vm352 = vmand %vm287, %vm298
    %vm353 = vmand %vm287, %vm299
    %vm354 = vmand %vm287, %vm300
    %vm355 = vmand %vm287, %vm301
    %vm356 = vmand %vm287, %vm302
    %vm357 = vmand %vm287, %vm303
    %vm358 = vmand %vm288, %vm295
    %vm359 = vmand %vm288, %vm296
    %vm360 = vmand %vm288, %vm297
    %vm361 = vmand %vm288, %vm298
    %vm362 = vmand %vm288, %vm299
    %vm363 = vmand %vm288, %vm300
    %vm364 = vmand %vm288, %vm301
    %vm365 = vmand %vm288, %vm302
    %vm366 = vmand %vm288, %vm303
    %vm367 = vmand %vm289, %vm295
    %vm368 = vmand %vm289, %vm296
    %vm369 = vmand %vm289, %vm297
    %vm370 = vmand %vm289, %vm298
    %vm371 = vmand %vm289, %vm299
    %vm372 = vmand %vm289, %vm300
    %vm373 = vmand %vm289, %vm301
    %vm374 = vmand %vm289, %vm302
    %vm375 = vmand %vm289, %vm303
    %vm376 = vmand %vm290, %vm295
    %vm377 = vmand %vm290, %vm296
    %vm378 = vmand %vm290, %vm297
    %vm379 = vmand %vm290, %vm298
    %vm380 = vmand %vm290, %vm299
    %vm381 = vmand %vm290, %vm300
    %vm382 = vmand %vm290, %vm301
    %vm383 = vmand %vm290, %vm302
    %vm384 = vmand %vm290, %vm303
    %vm385 = vmand %vm291, %vm295
    %vm386 = vmand %vm291, %vm296
    %vm387 = vmand %vm291, %vm297
    %vm388 = vmand %vm291, %vm298
    %vm389 = vmand %vm291, %vm299
    %vm390 = vmand %vm291, %vm300
    %vm391 = vmand %vm291, %vm301
    %vm392 = vmand %vm291, %vm302
    %vm393 = vmand %vm291, %vm303
    %vm394 = vmand %vm292, %vm295
    %vm395 = vmand %vm292, %vm296
    %vm396 = vmand %vm292, %vm297
    %vm397 = vmand %vm292, %vm298
    %vm398 = vmand %vm292, %vm299
    %vm399 = vmand %vm292, %vm300
    %vm400 = vmand %vm292, %vm301
    %vm401 = vmand %vm292, %vm302
    %vm402 = vmand %vm292, %vm303
    %vm403 = vmand %vm293, %vm295
    %vm404 = vmand %vm293, %vm296
    %vm405 = vmand %vm293, %vm297
    %vm406 = vmand %vm293, %vm298
    %vm407 = vmand %vm293, %vm299
    %vm408 = vmand %vm293, %vm300
    %vm409 = vmand %vm293, %vm301
    %vm410 = vmand %vm293, %vm302
    %vm411 = vmand %vm293, %vm303
    %vm412 = vmand %vm294, %vm295
    %vm413 = vmand %vm294, %vm296
    %vm414 = vmand %vm294, %vm297
    %vm415 = vmand %vm294, %vm298
    %vm416 = vmand %vm294, %vm299
    %vm417 = vmand %vm294, %vm300
    %vm418 = vmand %vm294, %vm301
    %vm419 = vmand %vm294, %vm302
    %vm420 = vmand %vm294, %vm303
    %421 = vrot.lane.b32.xlu0 %v9, 127
    %v422 = vpop.permute.xlu0 %421
    %423 = vrot.lane.b32.xlu0 %v18, 127
    %v424 = vpop.permute.xlu0 %423
    %425 = vrot.lane.b32.xlu0 %v27, 127
    %v426 = vpop.permute.xlu0 %425
    %427 = vrot.lane.b32.xlu0 %v36, 127
    %v428 = vpop.permute.xlu0 %427
    %429 = vrot.lane.b32.xlu0 %v45, 127
    %v430 = vpop.permute.xlu0 %429
    %431 = vrot.lane.b32.xlu0 %v54, 127
    %v432 = vpop.permute.xlu0 %431
    %433 = vrot.lane.b32.xlu0 %v63, 127
    %v434 = vpop.permute.xlu0 %433
    %435 = vrot.lane.b32.xlu0 %v72, 127
    %v436 = vpop.permute.xlu0 %435
    %437 = vrot.lane.b32.xlu0 %v81, 127
    %v438 = vpop.permute.xlu0 %437
    %439 = vrot.lane.b32.xlu0 %v90, 127
    %v440 = vpop.permute.xlu0 %439
    %441 = vrot.lane.b32.xlu0 %v99, 127
    %v442 = vpop.permute.xlu0 %441
    %443 = vrot.lane.b32.xlu0 %v108, 127
    %v444 = vpop.permute.xlu0 %443
    %445 = vrot.lane.b32.xlu0 %v117, 127
    %v446 = vpop.permute.xlu0 %445
    %447 = vrot.lane.b32.xlu0 %v10, 127
    %v448 = vpop.permute.xlu0 %447
    %449 = vrot.lane.b32.xlu0 %v19, 127
    %v450 = vpop.permute.xlu0 %449
    %451 = vrot.lane.b32.xlu0 %v28, 127
    %v452 = vpop.permute.xlu0 %451
    %453 = vrot.lane.b32.xlu0 %v37, 127
    %v454 = vpop.permute.xlu0 %453
    %455 = vrot.lane.b32.xlu0 %v46, 127
    %v456 = vpop.permute.xlu0 %455
    %457 = vrot.lane.b32.xlu0 %v55, 127
    %v458 = vpop.permute.xlu0 %457
    %459 = vrot.lane.b32.xlu0 %v64, 127
    %v460 = vpop.permute.xlu0 %459
    %461 = vrot.lane.b32.xlu0 %v73, 127
    %v462 = vpop.permute.xlu0 %461
    %463 = vrot.lane.b32.xlu0 %v82, 127
    %v464 = vpop.permute.xlu0 %463
    %465 = vrot.lane.b32.xlu0 %v91, 127
    %v466 = vpop.permute.xlu0 %465
    %467 = vrot.lane.b32.xlu0 %v100, 127
    %v468 = vpop.permute.xlu0 %467
    %469 = vrot.lane.b32.xlu0 %v109, 127
    %v470 = vpop.permute.xlu0 %469
    %471 = vrot.lane.b32.xlu0 %v118, 127
    %v472 = vpop.permute.xlu0 %471
    %473 = vrot.lane.b32.xlu0 %v11, 127
    %v474 = vpop.permute.xlu0 %473
    %475 = vrot.lane.b32.xlu0 %v20, 127
    %v476 = vpop.permute.xlu0 %475
    %477 = vrot.lane.b32.xlu0 %v29, 127
    %v478 = vpop.permute.xlu0 %477
    %479 = vrot.lane.b32.xlu0 %v38, 127
    %v480 = vpop.permute.xlu0 %479
    %481 = vrot.lane.b32.xlu0 %v47, 127
    %v482 = vpop.permute.xlu0 %481
    %483 = vrot.lane.b32.xlu0 %v56, 127
    %v484 = vpop.permute.xlu0 %483
    %485 = vrot.lane.b32.xlu0 %v65, 127
    %v486 = vpop.permute.xlu0 %485
    %487 = vrot.lane.b32.xlu0 %v74, 127
    %v488 = vpop.permute.xlu0 %487
    %489 = vrot.lane.b32.xlu0 %v83, 127
    %v490 = vpop.permute.xlu0 %489
    %491 = vrot.lane.b32.xlu0 %v92, 127
    %v492 = vpop.permute.xlu0 %491
    %493 = vrot.lane.b32.xlu0 %v101, 127
    %v494 = vpop.permute.xlu0 %493
    %495 = vrot.lane.b32.xlu0 %v110, 127
    %v496 = vpop.permute.xlu0 %495
    %497 = vrot.lane.b32.xlu0 %v119, 127
    %v498 = vpop.permute.xlu0 %497
    %499 = vrot.lane.b32.xlu0 %v12, 127
    %v500 = vpop.permute.xlu0 %499
    %501 = vrot.lane.b32.xlu0 %v21, 127
    %v502 = vpop.permute.xlu0 %501
    %503 = vrot.lane.b32.xlu0 %v30, 127
    %v504 = vpop.permute.xlu0 %503
    %505 = vrot.lane.b32.xlu0 %v39, 127
    %v506 = vpop.permute.xlu0 %505
    %507 = vrot.lane.b32.xlu0 %v48, 127
    %v508 = vpop.permute.xlu0 %507
    %509 = vrot.lane.b32.xlu0 %v57, 127
    %v510 = vpop.permute.xlu0 %509
    %511 = vrot.lane.b32.xlu0 %v66, 127
    %v512 = vpop.permute.xlu0 %511
    %513 = vrot.lane.b32.xlu0 %v75, 127
    %v514 = vpop.permute.xlu0 %513
    %515 = vrot.lane.b32.xlu0 %v84, 127
    %v516 = vpop.permute.xlu0 %515
    %517 = vrot.lane.b32.xlu0 %v93, 127
    %v518 = vpop.permute.xlu0 %517
    %519 = vrot.lane.b32.xlu0 %v102, 127
    %v520 = vpop.permute.xlu0 %519
    %521 = vrot.lane.b32.xlu0 %v111, 127
    %v522 = vpop.permute.xlu0 %521
    %523 = vrot.lane.b32.xlu0 %v120, 127
    %v524 = vpop.permute.xlu0 %523
    %525 = vrot.lane.b32.xlu0 %v13, 127
    %v526 = vpop.permute.xlu0 %525
    %527 = vrot.lane.b32.xlu0 %v22, 127
    %v528 = vpop.permute.xlu0 %527
    %529 = vrot.lane.b32.xlu0 %v31, 127
    %v530 = vpop.permute.xlu0 %529
    %531 = vrot.lane.b32.xlu0 %v40, 127
    %v532 = vpop.permute.xlu0 %531
    %533 = vrot.lane.b32.xlu0 %v49, 127
    %v534 = vpop.permute.xlu0 %533
    %535 = vrot.lane.b32.xlu0 %v58, 127
    %v536 = vpop.permute.xlu0 %535
    %537 = vrot.lane.b32.xlu0 %v67, 127
    %v538 = vpop.permute.xlu0 %537
    %539 = vrot.lane.b32.xlu0 %v76, 127
    %v540 = vpop.permute.xlu0 %539
    %541 = vrot.lane.b32.xlu0 %v85, 127
    %v542 = vpop.permute.xlu0 %541
    %543 = vrot.lane.b32.xlu0 %v94, 127
    %v544 = vpop.permute.xlu0 %543
    %545 = vrot.lane.b32.xlu0 %v103, 127
    %v546 = vpop.permute.xlu0 %545
    %547 = vrot.lane.b32.xlu0 %v112, 127
    %v548 = vpop.permute.xlu0 %547
    %549 = vrot.lane.b32.xlu0 %v121, 127
    %v550 = vpop.permute.xlu0 %549
    %551 = vrot.lane.b32.xlu0 %v14, 127
    %v552 = vpop.permute.xlu0 %551
    %553 = vrot.lane.b32.xlu0 %v23, 127
    %v554 = vpop.permute.xlu0 %553
    %555 = vrot.lane.b32.xlu0 %v32, 127
    %v556 = vpop.permute.xlu0 %555
    %557 = vrot.lane.b32.xlu0 %v41, 127
    %v558 = vpop.permute.xlu0 %557
    %559 = vrot.lane.b32.xlu0 %v50, 127
    %v560 = vpop.permute.xlu0 %559
    %561 = vrot.lane.b32.xlu0 %v59, 127
    %v562 = vpop.permute.xlu0 %561
    %563 = vrot.lane.b32.xlu0 %v68, 127
    %v564 = vpop.permute.xlu0 %563
    %565 = vrot.lane.b32.xlu0 %v77, 127
    %v566 = vpop.permute.xlu0 %565
    %567 = vrot.lane.b32.xlu0 %v86, 127
    %v568 = vpop.permute.xlu0 %567
    %569 = vrot.lane.b32.xlu0 %v95, 127
    %v570 = vpop.permute.xlu0 %569
    %571 = vrot.lane.b32.xlu0 %v104, 127
    %v572 = vpop.permute.xlu0 %571
    %573 = vrot.lane.b32.xlu0 %v113, 127
    %v574 = vpop.permute.xlu0 %573
    %575 = vrot.lane.b32.xlu0 %v122, 127
    %v576 = vpop.permute.xlu0 %575
    %577 = vrot.lane.b32.xlu0 %v15, 127
    %v578 = vpop.permute.xlu0 %577
    %579 = vrot.lane.b32.xlu0 %v24, 127
    %v580 = vpop.permute.xlu0 %579
    %581 = vrot.lane.b32.xlu0 %v33, 127
    %v582 = vpop.permute.xlu0 %581
    %583 = vrot.lane.b32.xlu0 %v42, 127
    %v584 = vpop.permute.xlu0 %583
    %585 = vrot.lane.b32.xlu0 %v51, 127
    %v586 = vpop.permute.xlu0 %585
    %587 = vrot.lane.b32.xlu0 %v60, 127
    %v588 = vpop.permute.xlu0 %587
    %589 = vrot.lane.b32.xlu0 %v69, 127
    %v590 = vpop.permute.xlu0 %589
    %591 = vrot.lane.b32.xlu0 %v78, 127
    %v592 = vpop.permute.xlu0 %591
    %593 = vrot.lane.b32.xlu0 %v87, 127
    %v594 = vpop.permute.xlu0 %593
    %595 = vrot.lane.b32.xlu0 %v96, 127
    %v596 = vpop.permute.xlu0 %595
    %597 = vrot.lane.b32.xlu0 %v105, 127
    %v598 = vpop.permute.xlu0 %597
    %599 = vrot.lane.b32.xlu0 %v114, 127
    %v600 = vpop.permute.xlu0 %599
    %601 = vrot.lane.b32.xlu0 %v123, 127
    %v602 = vpop.permute.xlu0 %601
    %603 = vrot.lane.b32.xlu0 %v16, 127
    %v604 = vpop.permute.xlu0 %603
    %605 = vrot.lane.b32.xlu0 %v25, 127
    %v606 = vpop.permute.xlu0 %605
    %607 = vrot.lane.b32.xlu0 %v34, 127
    %v608 = vpop.permute.xlu0 %607
    %609 = vrot.lane.b32.xlu0 %v43, 127
    %v610 = vpop.permute.xlu0 %609
    %611 = vrot.lane.b32.xlu0 %v52, 127
    %v612 = vpop.permute.xlu0 %611
    %613 = vrot.lane.b32.xlu0 %v61, 127
    %v614 = vpop.permute.xlu0 %613
    %615 = vrot.lane.b32.xlu0 %v70, 127
    %v616 = vpop.permute.xlu0 %615
    %617 = vrot.lane.b32.xlu0 %v79, 127
    %v618 = vpop.permute.xlu0 %617
    %619 = vrot.lane.b32.xlu0 %v88, 127
    %v620 = vpop.permute.xlu0 %619
    %621 = vrot.lane.b32.xlu0 %v97, 127
    %v622 = vpop.permute.xlu0 %621
    %623 = vrot.lane.b32.xlu0 %v106, 127
    %v624 = vpop.permute.xlu0 %623
    %625 = vrot.lane.b32.xlu0 %v115, 127
    %v626 = vpop.permute.xlu0 %625
    %627 = vrot.lane.b32.xlu0 %v124, 127
    %v628 = vpop.permute.xlu0 %627
    %629 = vrot.lane.b32.xlu0 %v17, 127
    %v630 = vpop.permute.xlu0 %629
    %631 = vrot.lane.b32.xlu0 %v26, 127
    %v632 = vpop.permute.xlu0 %631
    %633 = vrot.lane.b32.xlu0 %v35, 127
    %v634 = vpop.permute.xlu0 %633
    %635 = vrot.lane.b32.xlu0 %v44, 127
    %v636 = vpop.permute.xlu0 %635
    %637 = vrot.lane.b32.xlu0 %v53, 127
    %v638 = vpop.permute.xlu0 %637
    %639 = vrot.lane.b32.xlu0 %v62, 127
    %v640 = vpop.permute.xlu0 %639
    %641 = vrot.lane.b32.xlu0 %v71, 127
    %v642 = vpop.permute.xlu0 %641
    %643 = vrot.lane.b32.xlu0 %v80, 127
    %v644 = vpop.permute.xlu0 %643
    %645 = vrot.lane.b32.xlu0 %v89, 127
    %v646 = vpop.permute.xlu0 %645
    %647 = vrot.lane.b32.xlu0 %v98, 127
    %v648 = vpop.permute.xlu0 %647
    %649 = vrot.lane.b32.xlu0 %v107, 127
    %v650 = vpop.permute.xlu0 %649
    %651 = vrot.lane.b32.xlu0 %v116, 127
    %v652 = vpop.permute.xlu0 %651
    %653 = vrot.lane.b32.xlu0 %v125, 127
    %v654 = vpop.permute.xlu0 %653
    %vm655 = vcmp.lt.s32.totalorder %v141, 127
    %v656 = vsel %vm655, %v604, %v630
    %v657 = vsel %vm655, %v606, %v632
    %v658 = vsel %vm655, %v608, %v634
    %v659 = vsel %vm655, %v610, %v636
    %v660 = vsel %vm655, %v612, %v638
    %v661 = vsel %vm655, %v614, %v640
    %v662 = vsel %vm655, %v616, %v642
    %v663 = vsel %vm655, %v618, %v644
    %v664 = vsel %vm655, %v620, %v646
    %v665 = vsel %vm655, %v622, %v648
    %v666 = vsel %vm655, %v624, %v650
    %v667 = vsel %vm655, %v626, %v652
    %v668 = vsel %vm655, %v628, %v654
    %v669 = vsel %vm655, %v578, %v604
    %v670 = vsel %vm655, %v580, %v606
    %v671 = vsel %vm655, %v582, %v608
    %v672 = vsel %vm655, %v584, %v610
    %v673 = vsel %vm655, %v586, %v612
    %v674 = vsel %vm655, %v588, %v614
    %v675 = vsel %vm655, %v590, %v616
    %v676 = vsel %vm655, %v592, %v618
    %v677 = vsel %vm655, %v594, %v620
    %v678 = vsel %vm655, %v596, %v622
    %v679 = vsel %vm655, %v598, %v624
    %v680 = vsel %vm655, %v600, %v626
    %v681 = vsel %vm655, %v602, %v628
    %v682 = vsel %vm655, %v552, %v578
    %v683 = vsel %vm655, %v554, %v580
    %v684 = vsel %vm655, %v556, %v582
    %v685 = vsel %vm655, %v558, %v584
    %v686 = vsel %vm655, %v560, %v586
    %v687 = vsel %vm655, %v562, %v588
    %v688 = vsel %vm655, %v564, %v590
    %v689 = vsel %vm655, %v566, %v592
    %v690 = vsel %vm655, %v568, %v594
    %v691 = vsel %vm655, %v570, %v596
    %v692 = vsel %vm655, %v572, %v598
    %v693 = vsel %vm655, %v574, %v600
    %v694 = vsel %vm655, %v576, %v602
    %v695 = vsel %vm655, %v526, %v552
    %v696 = vsel %vm655, %v528, %v554
    %v697 = vsel %vm655, %v530, %v556
    %v698 = vsel %vm655, %v532, %v558
    %v699 = vsel %vm655, %v534, %v560
    %v700 = vsel %vm655, %v536, %v562
    %v701 = vsel %vm655, %v538, %v564
    %v702 = vsel %vm655, %v540, %v566
    %v703 = vsel %vm655, %v542, %v568
    %v704 = vsel %vm655, %v544, %v570
    %v705 = vsel %vm655, %v546, %v572
    %v706 = vsel %vm655, %v548, %v574
    %v707 = vsel %vm655, %v550, %v576
    %v708 = vsel %vm655, %v500, %v526
    %v709 = vsel %vm655, %v502, %v528
    %v710 = vsel %vm655, %v504, %v530
    %v711 = vsel %vm655, %v506, %v532
    %v712 = vsel %vm655, %v508, %v534
    %v713 = vsel %vm655, %v510, %v536
    %v714 = vsel %vm655, %v512, %v538
    %v715 = vsel %vm655, %v514, %v540
    %v716 = vsel %vm655, %v516, %v542
    %v717 = vsel %vm655, %v518, %v544
    %v718 = vsel %vm655, %v520, %v546
    %v719 = vsel %vm655, %v522, %v548
    %v720 = vsel %vm655, %v524, %v550
    %v721 = vsel %vm655, %v474, %v500
    %v722 = vsel %vm655, %v476, %v502
    %v723 = vsel %vm655, %v478, %v504
    %v724 = vsel %vm655, %v480, %v506
    %v725 = vsel %vm655, %v482, %v508
    %v726 = vsel %vm655, %v484, %v510
    %v727 = vsel %vm655, %v486, %v512
    %v728 = vsel %vm655, %v488, %v514
    %v729 = vsel %vm655, %v490, %v516
    %v730 = vsel %vm655, %v492, %v518
    %v731 = vsel %vm655, %v494, %v520
    %v732 = vsel %vm655, %v496, %v522
    %v733 = vsel %vm655, %v498, %v524
    %v734 = vsel %vm655, %v448, %v474
    %v735 = vsel %vm655, %v450, %v476
    %v736 = vsel %vm655, %v452, %v478
    %v737 = vsel %vm655, %v454, %v480
    %v738 = vsel %vm655, %v456, %v482
    %v739 = vsel %vm655, %v458, %v484
    %v740 = vsel %vm655, %v460, %v486
    %v741 = vsel %vm655, %v462, %v488
    %v742 = vsel %vm655, %v464, %v490
    %v743 = vsel %vm655, %v466, %v492
    %v744 = vsel %vm655, %v468, %v494
    %v745 = vsel %vm655, %v470, %v496
    %v746 = vsel %vm655, %v472, %v498
    %v747 = vsel %vm655, %v422, %v448
    %v748 = vsel %vm655, %v424, %v450
    %v749 = vsel %vm655, %v426, %v452
    %v750 = vsel %vm655, %v428, %v454
    %v751 = vsel %vm655, %v430, %v456
    %v752 = vsel %vm655, %v432, %v458
    %v753 = vsel %vm655, %v434, %v460
    %v754 = vsel %vm655, %v436, %v462
    %v755 = vsel %vm655, %v438, %v464
    %v756 = vsel %vm655, %v440, %v466
    %v757 = vsel %vm655, %v442, %v468
    %v758 = vsel %vm655, %v444, %v470
    %v759 = vsel %vm655, %v446, %v472
    %v760 = vsel %vm655, %v630, %v422
    %v761 = vsel %vm655, %v632, %v424
    %v762 = vsel %vm655, %v634, %v426
    %v763 = vsel %vm655, %v636, %v428
    %v764 = vsel %vm655, %v638, %v430
    %v765 = vsel %vm655, %v640, %v432
    %v766 = vsel %vm655, %v642, %v434
    %v767 = vsel %vm655, %v644, %v436
    %v768 = vsel %vm655, %v646, %v438
    %v769 = vsel %vm655, %v648, %v440
    %v770 = vsel %vm655, %v650, %v442
    %v771 = vsel %vm655, %v652, %v444
    %v772 = vsel %vm655, %v654, %v446
    %773 = vrot.lane.b32.xlu0 %v9, 95
    %v774 = vpop.permute.xlu0 %773
    %775 = vrot.lane.b32.xlu0 %v18, 95
    %v776 = vpop.permute.xlu0 %775
    %777 = vrot.lane.b32.xlu0 %v27, 95
    %v778 = vpop.permute.xlu0 %777
    %779 = vrot.lane.b32.xlu0 %v36, 95
    %v780 = vpop.permute.xlu0 %779
    %781 = vrot.lane.b32.xlu0 %v45, 95
    %v782 = vpop.permute.xlu0 %781
    %783 = vrot.lane.b32.xlu0 %v54, 95
    %v784 = vpop.permute.xlu0 %783
    %785 = vrot.lane.b32.xlu0 %v63, 95
    %v786 = vpop.permute.xlu0 %785
    %787 = vrot.lane.b32.xlu0 %v72, 95
    %v788 = vpop.permute.xlu0 %787
    %789 = vrot.lane.b32.xlu0 %v81, 95
    %v790 = vpop.permute.xlu0 %789
    %791 = vrot.lane.b32.xlu0 %v90, 95
    %v792 = vpop.permute.xlu0 %791
    %793 = vrot.lane.b32.xlu0 %v99, 95
    %v794 = vpop.permute.xlu0 %793
    %795 = vrot.lane.b32.xlu0 %v108, 95
    %v796 = vpop.permute.xlu0 %795
    %797 = vrot.lane.b32.xlu0 %v117, 95
    %v798 = vpop.permute.xlu0 %797
    %799 = vrot.lane.b32.xlu0 %v10, 95
    %v800 = vpop.permute.xlu0 %799
    %801 = vrot.lane.b32.xlu0 %v19, 95
    %v802 = vpop.permute.xlu0 %801
    %803 = vrot.lane.b32.xlu0 %v28, 95
    %v804 = vpop.permute.xlu0 %803
    %805 = vrot.lane.b32.xlu0 %v37, 95
    %v806 = vpop.permute.xlu0 %805
    %807 = vrot.lane.b32.xlu0 %v46, 95
    %v808 = vpop.permute.xlu0 %807
    %809 = vrot.lane.b32.xlu0 %v55, 95
    %v810 = vpop.permute.xlu0 %809
    %811 = vrot.lane.b32.xlu0 %v64, 95
    %v812 = vpop.permute.xlu0 %811
    %813 = vrot.lane.b32.xlu0 %v73, 95
    %v814 = vpop.permute.xlu0 %813
    %815 = vrot.lane.b32.xlu0 %v82, 95
    %v816 = vpop.permute.xlu0 %815
    %817 = vrot.lane.b32.xlu0 %v91, 95
    %v818 = vpop.permute.xlu0 %817
    %819 = vrot.lane.b32.xlu0 %v100, 95
    %v820 = vpop.permute.xlu0 %819
    %821 = vrot.lane.b32.xlu0 %v109, 95
    %v822 = vpop.permute.xlu0 %821
    %823 = vrot.lane.b32.xlu0 %v118, 95
    %v824 = vpop.permute.xlu0 %823
    %825 = vrot.lane.b32.xlu0 %v11, 95
    %v826 = vpop.permute.xlu0 %825
    %827 = vrot.lane.b32.xlu0 %v20, 95
    %v828 = vpop.permute.xlu0 %827
    %829 = vrot.lane.b32.xlu0 %v29, 95
    %v830 = vpop.permute.xlu0 %829
    %831 = vrot.lane.b32.xlu0 %v38, 95
    %v832 = vpop.permute.xlu0 %831
    %833 = vrot.lane.b32.xlu0 %v47, 95
    %v834 = vpop.permute.xlu0 %833
    %835 = vrot.lane.b32.xlu0 %v56, 95
    %v836 = vpop.permute.xlu0 %835
    %837 = vrot.lane.b32.xlu0 %v65, 95
    %v838 = vpop.permute.xlu0 %837
    %839 = vrot.lane.b32.xlu0 %v74, 95
    %v840 = vpop.permute.xlu0 %839
    %841 = vrot.lane.b32.xlu0 %v83, 95
    %v842 = vpop.permute.xlu0 %841
    %843 = vrot.lane.b32.xlu0 %v92, 95
    %v844 = vpop.permute.xlu0 %843
    %845 = vrot.lane.b32.xlu0 %v101, 95
    %v846 = vpop.permute.xlu0 %845
    %847 = vrot.lane.b32.xlu0 %v110, 95
    %v848 = vpop.permute.xlu0 %847
    %849 = vrot.lane.b32.xlu0 %v119, 95
    %v850 = vpop.permute.xlu0 %849
    %851 = vrot.lane.b32.xlu0 %v12, 95
    %v852 = vpop.permute.xlu0 %851
    %853 = vrot.lane.b32.xlu0 %v21, 95
    %v854 = vpop.permute.xlu0 %853
    %855 = vrot.lane.b32.xlu0 %v30, 95
    %v856 = vpop.permute.xlu0 %855
    %857 = vrot.lane.b32.xlu0 %v39, 95
    %v858 = vpop.permute.xlu0 %857
    %859 = vrot.lane.b32.xlu0 %v48, 95
    %v860 = vpop.permute.xlu0 %859
    %861 = vrot.lane.b32.xlu0 %v57, 95
    %v862 = vpop.permute.xlu0 %861
    %863 = vrot.lane.b32.xlu0 %v66, 95
    %v864 = vpop.permute.xlu0 %863
    %865 = vrot.lane.b32.xlu0 %v75, 95
    %v866 = vpop.permute.xlu0 %865
    %867 = vrot.lane.b32.xlu0 %v84, 95
    %v868 = vpop.permute.xlu0 %867
    %869 = vrot.lane.b32.xlu0 %v93, 95
    %v870 = vpop.permute.xlu0 %869
    %871 = vrot.lane.b32.xlu0 %v102, 95
    %v872 = vpop.permute.xlu0 %871
    %873 = vrot.lane.b32.xlu0 %v111, 95
    %v874 = vpop.permute.xlu0 %873
    %875 = vrot.lane.b32.xlu0 %v120, 95
    %v876 = vpop.permute.xlu0 %875
    %877 = vrot.lane.b32.xlu0 %v13, 95
    %v878 = vpop.permute.xlu0 %877
    %879 = vrot.lane.b32.xlu0 %v22, 95
    %v880 = vpop.permute.xlu0 %879
    %881 = vrot.lane.b32.xlu0 %v31, 95
    %v882 = vpop.permute.xlu0 %881
    %883 = vrot.lane.b32.xlu0 %v40, 95
    %v884 = vpop.permute.xlu0 %883
    %885 = vrot.lane.b32.xlu0 %v49, 95
    %v886 = vpop.permute.xlu0 %885
    %887 = vrot.lane.b32.xlu0 %v58, 95
    %v888 = vpop.permute.xlu0 %887
    %889 = vrot.lane.b32.xlu0 %v67, 95
    %v890 = vpop.permute.xlu0 %889
    %891 = vrot.lane.b32.xlu0 %v76, 95
    %v892 = vpop.permute.xlu0 %891
    %893 = vrot.lane.b32.xlu0 %v85, 95
    %v894 = vpop.permute.xlu0 %893
    %895 = vrot.lane.b32.xlu0 %v94, 95
    %v896 = vpop.permute.xlu0 %895
    %897 = vrot.lane.b32.xlu0 %v103, 95
    %v898 = vpop.permute.xlu0 %897
    %899 = vrot.lane.b32.xlu0 %v112, 95
    %v900 = vpop.permute.xlu0 %899
    %901 = vrot.lane.b32.xlu0 %v121, 95
    %v902 = vpop.permute.xlu0 %901
    %903 = vrot.lane.b32.xlu0 %v14, 95
    %v904 = vpop.permute.xlu0 %903
    %905 = vrot.lane.b32.xlu0 %v23, 95
    %v906 = vpop.permute.xlu0 %905
    %907 = vrot.lane.b32.xlu0 %v32, 95
    %v908 = vpop.permute.xlu0 %907
    %909 = vrot.lane.b32.xlu0 %v41, 95
    %v910 = vpop.permute.xlu0 %909
    %911 = vrot.lane.b32.xlu0 %v50, 95
    %v912 = vpop.permute.xlu0 %911
    %913 = vrot.lane.b32.xlu0 %v59, 95
    %v914 = vpop.permute.xlu0 %913
    %915 = vrot.lane.b32.xlu0 %v68, 95
    %v916 = vpop.permute.xlu0 %915
    %917 = vrot.lane.b32.xlu0 %v77, 95
    %v918 = vpop.permute.xlu0 %917
    %919 = vrot.lane.b32.xlu0 %v86, 95
    %v920 = vpop.permute.xlu0 %919
    %921 = vrot.lane.b32.xlu0 %v95, 95
    %v922 = vpop.permute.xlu0 %921
    %923 = vrot.lane.b32.xlu0 %v104, 95
    %v924 = vpop.permute.xlu0 %923
    %925 = vrot.lane.b32.xlu0 %v113, 95
    %v926 = vpop.permute.xlu0 %925
    %927 = vrot.lane.b32.xlu0 %v122, 95
    %v928 = vpop.permute.xlu0 %927
    %929 = vrot.lane.b32.xlu0 %v15, 95
    %v930 = vpop.permute.xlu0 %929
    %931 = vrot.lane.b32.xlu0 %v24, 95
    %v932 = vpop.permute.xlu0 %931
    %933 = vrot.lane.b32.xlu0 %v33, 95
    %v934 = vpop.permute.xlu0 %933
    %935 = vrot.lane.b32.xlu0 %v42, 95
    %v936 = vpop.permute.xlu0 %935
    %937 = vrot.lane.b32.xlu0 %v51, 95
    %v938 = vpop.permute.xlu0 %937
    %939 = vrot.lane.b32.xlu0 %v60, 95
    %v940 = vpop.permute.xlu0 %939
    %941 = vrot.lane.b32.xlu0 %v69, 95
    %v942 = vpop.permute.xlu0 %941
    %943 = vrot.lane.b32.xlu0 %v78, 95
    %v944 = vpop.permute.xlu0 %943
    %945 = vrot.lane.b32.xlu0 %v87, 95
    %v946 = vpop.permute.xlu0 %945
    %947 = vrot.lane.b32.xlu0 %v96, 95
    %v948 = vpop.permute.xlu0 %947
    %949 = vrot.lane.b32.xlu0 %v105, 95
    %v950 = vpop.permute.xlu0 %949
    %951 = vrot.lane.b32.xlu0 %v114, 95
    %v952 = vpop.permute.xlu0 %951
    %953 = vrot.lane.b32.xlu0 %v123, 95
    %v954 = vpop.permute.xlu0 %953
    %955 = vrot.lane.b32.xlu0 %v16, 95
    %v956 = vpop.permute.xlu0 %955
    %957 = vrot.lane.b32.xlu0 %v25, 95
    %v958 = vpop.permute.xlu0 %957
    %959 = vrot.lane.b32.xlu0 %v34, 95
    %v960 = vpop.permute.xlu0 %959
    %961 = vrot.lane.b32.xlu0 %v43, 95
    %v962 = vpop.permute.xlu0 %961
    %963 = vrot.lane.b32.xlu0 %v52, 95
    %v964 = vpop.permute.xlu0 %963
    %965 = vrot.lane.b32.xlu0 %v61, 95
    %v966 = vpop.permute.xlu0 %965
    %967 = vrot.lane.b32.xlu0 %v70, 95
    %v968 = vpop.permute.xlu0 %967
    %969 = vrot.lane.b32.xlu0 %v79, 95
    %v970 = vpop.permute.xlu0 %969
    %971 = vrot.lane.b32.xlu0 %v88, 95
    %v972 = vpop.permute.xlu0 %971
    %973 = vrot.lane.b32.xlu0 %v97, 95
    %v974 = vpop.permute.xlu0 %973
    %975 = vrot.lane.b32.xlu0 %v106, 95
    %v976 = vpop.permute.xlu0 %975
    %977 = vrot.lane.b32.xlu0 %v115, 95
    %v978 = vpop.permute.xlu0 %977
    %979 = vrot.lane.b32.xlu0 %v124, 95
    %v980 = vpop.permute.xlu0 %979
    %981 = vrot.lane.b32.xlu0 %v17, 95
    %v982 = vpop.permute.xlu0 %981
    %983 = vrot.lane.b32.xlu0 %v26, 95
    %v984 = vpop.permute.xlu0 %983
    %985 = vrot.lane.b32.xlu0 %v35, 95
    %v986 = vpop.permute.xlu0 %985
    %987 = vrot.lane.b32.xlu0 %v44, 95
    %v988 = vpop.permute.xlu0 %987
    %989 = vrot.lane.b32.xlu0 %v53, 95
    %v990 = vpop.permute.xlu0 %989
    %991 = vrot.lane.b32.xlu0 %v62, 95
    %v992 = vpop.permute.xlu0 %991
    %993 = vrot.lane.b32.xlu0 %v71, 95
    %v994 = vpop.permute.xlu0 %993
    %995 = vrot.lane.b32.xlu0 %v80, 95
    %v996 = vpop.permute.xlu0 %995
    %997 = vrot.lane.b32.xlu0 %v89, 95
    %v998 = vpop.permute.xlu0 %997
    %999 = vrot.lane.b32.xlu0 %v98, 95
    %v1000 = vpop.permute.xlu0 %999
    %1001 = vrot.lane.b32.xlu0 %v107, 95
    %v1002 = vpop.permute.xlu0 %1001
    %1003 = vrot.lane.b32.xlu0 %v116, 95
    %v1004 = vpop.permute.xlu0 %1003
    %1005 = vrot.lane.b32.xlu0 %v125, 95
    %v1006 = vpop.permute.xlu0 %1005
    %vm1007 = vcmp.lt.s32.totalorder %v141, 95
    %v1008 = vsel %vm1007, %v956, %v982
    %v1009 = vsel %vm1007, %v958, %v984
    %v1010 = vsel %vm1007, %v960, %v986
    %v1011 = vsel %vm1007, %v962, %v988
    %v1012 = vsel %vm1007, %v964, %v990
    %v1013 = vsel %vm1007, %v966, %v992
    %v1014 = vsel %vm1007, %v968, %v994
    %v1015 = vsel %vm1007, %v970, %v996
    %v1016 = vsel %vm1007, %v972, %v998
    %v1017 = vsel %vm1007, %v974, %v1000
    %v1018 = vsel %vm1007, %v976, %v1002
    %v1019 = vsel %vm1007, %v978, %v1004
    %v1020 = vsel %vm1007, %v980, %v1006
    %v1021 = vsel %vm1007, %v930, %v956
    %v1022 = vsel %vm1007, %v932, %v958
    %v1023 = vsel %vm1007, %v934, %v960
    %v1024 = vsel %vm1007, %v936, %v962
    %v1025 = vsel %vm1007, %v938, %v964
    %v1026 = vsel %vm1007, %v940, %v966
    %v1027 = vsel %vm1007, %v942, %v968
    %v1028 = vsel %vm1007, %v944, %v970
    %v1029 = vsel %vm1007, %v946, %v972
    %v1030 = vsel %vm1007, %v948, %v974
    %v1031 = vsel %vm1007, %v950, %v976
    %v1032 = vsel %vm1007, %v952, %v978
    %v1033 = vsel %vm1007, %v954, %v980
    %v1034 = vsel %vm1007, %v904, %v930
    %v1035 = vsel %vm1007, %v906, %v932
    %v1036 = vsel %vm1007, %v908, %v934
    %v1037 = vsel %vm1007, %v910, %v936
    %v1038 = vsel %vm1007, %v912, %v938
    %v1039 = vsel %vm1007, %v914, %v940
    %v1040 = vsel %vm1007, %v916, %v942
    %v1041 = vsel %vm1007, %v918, %v944
    %v1042 = vsel %vm1007, %v920, %v946
    %v1043 = vsel %vm1007, %v922, %v948
    %v1044 = vsel %vm1007, %v924, %v950
    %v1045 = vsel %vm1007, %v926, %v952
    %v1046 = vsel %vm1007, %v928, %v954
    %v1047 = vsel %vm1007, %v878, %v904
    %v1048 = vsel %vm1007, %v880, %v906
    %v1049 = vsel %vm1007, %v882, %v908
    %v1050 = vsel %vm1007, %v884, %v910
    %v1051 = vsel %vm1007, %v886, %v912
    %v1052 = vsel %vm1007, %v888, %v914
    %v1053 = vsel %vm1007, %v890, %v916
    %v1054 = vsel %vm1007, %v892, %v918
    %v1055 = vsel %vm1007, %v894, %v920
    %v1056 = vsel %vm1007, %v896, %v922
    %v1057 = vsel %vm1007, %v898, %v924
    %v1058 = vsel %vm1007, %v900, %v926
    %v1059 = vsel %vm1007, %v902, %v928
    %v1060 = vsel %vm1007, %v852, %v878
    %v1061 = vsel %vm1007, %v854, %v880
    %v1062 = vsel %vm1007, %v856, %v882
    %v1063 = vsel %vm1007, %v858, %v884
    %v1064 = vsel %vm1007, %v860, %v886
    %v1065 = vsel %vm1007, %v862, %v888
    %v1066 = vsel %vm1007, %v864, %v890
    %v1067 = vsel %vm1007, %v866, %v892
    %v1068 = vsel %vm1007, %v868, %v894
    %v1069 = vsel %vm1007, %v870, %v896
    %v1070 = vsel %vm1007, %v872, %v898
    %v1071 = vsel %vm1007, %v874, %v900
    %v1072 = vsel %vm1007, %v876, %v902
    %v1073 = vsel %vm1007, %v826, %v852
    %v1074 = vsel %vm1007, %v828, %v854
    %v1075 = vsel %vm1007, %v830, %v856
    %v1076 = vsel %vm1007, %v832, %v858
    %v1077 = vsel %vm1007, %v834, %v860
    %v1078 = vsel %vm1007, %v836, %v862
    %v1079 = vsel %vm1007, %v838, %v864
    %v1080 = vsel %vm1007, %v840, %v866
    %v1081 = vsel %vm1007, %v842, %v868
    %v1082 = vsel %vm1007, %v844, %v870
    %v1083 = vsel %vm1007, %v846, %v872
    %v1084 = vsel %vm1007, %v848, %v874
    %v1085 = vsel %vm1007, %v850, %v876
    %v1086 = vsel %vm1007, %v800, %v826
    %v1087 = vsel %vm1007, %v802, %v828
    %v1088 = vsel %vm1007, %v804, %v830
    %v1089 = vsel %vm1007, %v806, %v832
    %v1090 = vsel %vm1007, %v808, %v834
    %v1091 = vsel %vm1007, %v810, %v836
    %v1092 = vsel %vm1007, %v812, %v838
    %v1093 = vsel %vm1007, %v814, %v840
    %v1094 = vsel %vm1007, %v816, %v842
    %v1095 = vsel %vm1007, %v818, %v844
    %v1096 = vsel %vm1007, %v820, %v846
    %v1097 = vsel %vm1007, %v822, %v848
    %v1098 = vsel %vm1007, %v824, %v850
    %v1099 = vsel %vm1007, %v774, %v800
    %v1100 = vsel %vm1007, %v776, %v802
    %v1101 = vsel %vm1007, %v778, %v804
    %v1102 = vsel %vm1007, %v780, %v806
    %v1103 = vsel %vm1007, %v782, %v808
    %v1104 = vsel %vm1007, %v784, %v810
    %v1105 = vsel %vm1007, %v786, %v812
    %v1106 = vsel %vm1007, %v788, %v814
    %v1107 = vsel %vm1007, %v790, %v816
    %v1108 = vsel %vm1007, %v792, %v818
    %v1109 = vsel %vm1007, %v794, %v820
    %v1110 = vsel %vm1007, %v796, %v822
    %v1111 = vsel %vm1007, %v798, %v824
    %v1112 = vsel %vm1007, %v982, %v774
    %v1113 = vsel %vm1007, %v984, %v776
    %v1114 = vsel %vm1007, %v986, %v778
    %v1115 = vsel %vm1007, %v988, %v780
    %v1116 = vsel %vm1007, %v990, %v782
    %v1117 = vsel %vm1007, %v992, %v784
    %v1118 = vsel %vm1007, %v994, %v786
    %v1119 = vsel %vm1007, %v996, %v788
    %v1120 = vsel %vm1007, %v998, %v790
    %v1121 = vsel %vm1007, %v1000, %v792
    %v1122 = vsel %vm1007, %v1002, %v794
    %v1123 = vsel %vm1007, %v1004, %v796
    %v1124 = vsel %vm1007, %v1006, %v798
    %v1125 = vrot.slane %v9, 1
    %v1126 = vrot.slane %v10, 1
    %v1127 = vrot.slane %v11, 1
    %v1128 = vrot.slane %v12, 1
    %v1129 = vrot.slane %v13, 1
    %v1130 = vrot.slane %v14, 1
    %v1131 = vrot.slane %v15, 1
    %v1132 = vrot.slane %v16, 1
    %v1133 = vrot.slane %v17, 1
    %v1134 = vrot.slane %v18, 1
    %v1135 = vrot.slane %v19, 1
    %v1136 = vrot.slane %v20, 1
    %v1137 = vrot.slane %v21, 1
    %v1138 = vrot.slane %v22, 1
    %v1139 = vrot.slane %v23, 1
    %v1140 = vrot.slane %v24, 1
    %v1141 = vrot.slane %v25, 1
    %v1142 = vrot.slane %v26, 1
    %v1143 = vrot.slane %v27, 1
    %v1144 = vrot.slane %v28, 1
    %v1145 = vrot.slane %v29, 1
    %v1146 = vrot.slane %v30, 1
    %v1147 = vrot.slane %v31, 1
    %v1148 = vrot.slane %v32, 1
    %v1149 = vrot.slane %v33, 1
    %v1150 = vrot.slane %v34, 1
    %v1151 = vrot.slane %v35, 1
    %v1152 = vrot.slane %v36, 1
    %v1153 = vrot.slane %v37, 1
    %v1154 = vrot.slane %v38, 1
    %v1155 = vrot.slane %v39, 1
    %v1156 = vrot.slane %v40, 1
    %v1157 = vrot.slane %v41, 1
    %v1158 = vrot.slane %v42, 1
    %v1159 = vrot.slane %v43, 1
    %v1160 = vrot.slane %v44, 1
    %v1161 = vrot.slane %v45, 1
    %v1162 = vrot.slane %v46, 1
    %v1163 = vrot.slane %v47, 1
    %v1164 = vrot.slane %v48, 1
    %v1165 = vrot.slane %v49, 1
    %v1166 = vrot.slane %v50, 1
    %v1167 = vrot.slane %v51, 1
    %v1168 = vrot.slane %v52, 1
    %v1169 = vrot.slane %v53, 1
    %v1170 = vrot.slane %v54, 1
    %v1171 = vrot.slane %v55, 1
    %v1172 = vrot.slane %v56, 1
    %v1173 = vrot.slane %v57, 1
    %v1174 = vrot.slane %v58, 1
    %v1175 = vrot.slane %v59, 1
    %v1176 = vrot.slane %v60, 1
    %v1177 = vrot.slane %v61, 1
    %v1178 = vrot.slane %v62, 1
    %v1179 = vrot.slane %v63, 1
    %v1180 = vrot.slane %v64, 1
    %v1181 = vrot.slane %v65, 1
    %v1182 = vrot.slane %v66, 1
    %v1183 = vrot.slane %v67, 1
    %v1184 = vrot.slane %v68, 1
    %v1185 = vrot.slane %v69, 1
    %v1186 = vrot.slane %v70, 1
    %v1187 = vrot.slane %v71, 1
    %v1188 = vrot.slane %v72, 1
    %v1189 = vrot.slane %v73, 1
    %v1190 = vrot.slane %v74, 1
    %v1191 = vrot.slane %v75, 1
    %v1192 = vrot.slane %v76, 1
    %v1193 = vrot.slane %v77, 1
    %v1194 = vrot.slane %v78, 1
    %v1195 = vrot.slane %v79, 1
    %v1196 = vrot.slane %v80, 1
    %v1197 = vrot.slane %v81, 1
    %v1198 = vrot.slane %v82, 1
    %v1199 = vrot.slane %v83, 1
    %v1200 = vrot.slane %v84, 1
    %v1201 = vrot.slane %v85, 1
    %v1202 = vrot.slane %v86, 1
    %v1203 = vrot.slane %v87, 1
    %v1204 = vrot.slane %v88, 1
    %v1205 = vrot.slane %v89, 1
    %v1206 = vrot.slane %v90, 1
    %v1207 = vrot.slane %v91, 1
    %v1208 = vrot.slane %v92, 1
    %v1209 = vrot.slane %v93, 1
    %v1210 = vrot.slane %v94, 1
    %v1211 = vrot.slane %v95, 1
    %v1212 = vrot.slane %v96, 1
    %v1213 = vrot.slane %v97, 1
    %v1214 = vrot.slane %v98, 1
    %v1215 = vrot.slane %v99, 1
    %v1216 = vrot.slane %v100, 1
    %v1217 = vrot.slane %v101, 1
    %v1218 = vrot.slane %v102, 1
    %v1219 = vrot.slane %v103, 1
    %v1220 = vrot.slane %v104, 1
    %v1221 = vrot.slane %v105, 1
    %v1222 = vrot.slane %v106, 1
    %v1223 = vrot.slane %v107, 1
    %v1224 = vrot.slane %v108, 1
    %v1225 = vrot.slane %v109, 1
    %v1226 = vrot.slane %v110, 1
    %v1227 = vrot.slane %v111, 1
    %v1228 = vrot.slane %v112, 1
    %v1229 = vrot.slane %v113, 1
    %v1230 = vrot.slane %v114, 1
    %v1231 = vrot.slane %v115, 1
    %v1232 = vrot.slane %v116, 1
    %v1233 = vrot.slane %v117, 1
    %v1234 = vrot.slane %v118, 1
    %v1235 = vrot.slane %v119, 1
    %v1236 = vrot.slane %v120, 1
    %v1237 = vrot.slane %v121, 1
    %v1238 = vrot.slane %v122, 1
    %v1239 = vrot.slane %v123, 1
    %v1240 = vrot.slane %v124, 1
    %v1241 = vrot.slane %v125, 1
    %vm1242 = vcmp.lt.s32.totalorder %v127, 7
    %v1243 = vsel %vm1242, %v1224, %v1233
    %v1244 = vsel %vm1242, %v1225, %v1234
    %v1245 = vsel %vm1242, %v1226, %v1235
    %v1246 = vsel %vm1242, %v1227, %v1236
    %v1247 = vsel %vm1242, %v1228, %v1237
    %v1248 = vsel %vm1242, %v1229, %v1238
    %v1249 = vsel %vm1242, %v1230, %v1239
    %v1250 = vsel %vm1242, %v1231, %v1240
    %v1251 = vsel %vm1242, %v1232, %v1241
    %v1252 = vsel %vm1242, %v1215, %v1224
    %v1253 = vsel %vm1242, %v1216, %v1225
    %v1254 = vsel %vm1242, %v1217, %v1226
    %v1255 = vsel %vm1242, %v1218, %v1227
    %v1256 = vsel %vm1242, %v1219, %v1228
    %v1257 = vsel %vm1242, %v1220, %v1229
    %v1258 = vsel %vm1242, %v1221, %v1230
    %v1259 = vsel %vm1242, %v1222, %v1231
    %v1260 = vsel %vm1242, %v1223, %v1232
    %v1261 = vsel %vm1242, %v1206, %v1215
    %v1262 = vsel %vm1242, %v1207, %v1216
    %v1263 = vsel %vm1242, %v1208, %v1217
    %v1264 = vsel %vm1242, %v1209, %v1218
    %v1265 = vsel %vm1242, %v1210, %v1219
    %v1266 = vsel %vm1242, %v1211, %v1220
    %v1267 = vsel %vm1242, %v1212, %v1221
    %v1268 = vsel %vm1242, %v1213, %v1222
    %v1269 = vsel %vm1242, %v1214, %v1223
    %v1270 = vsel %vm1242, %v1197, %v1206
    %v1271 = vsel %vm1242, %v1198, %v1207
    %v1272 = vsel %vm1242, %v1199, %v1208
    %v1273 = vsel %vm1242, %v1200, %v1209
    %v1274 = vsel %vm1242, %v1201, %v1210
    %v1275 = vsel %vm1242, %v1202, %v1211
    %v1276 = vsel %vm1242, %v1203, %v1212
    %v1277 = vsel %vm1242, %v1204, %v1213
    %v1278 = vsel %vm1242, %v1205, %v1214
    %v1279 = vsel %vm1242, %v1188, %v1197
    %v1280 = vsel %vm1242, %v1189, %v1198
    %v1281 = vsel %vm1242, %v1190, %v1199
    %v1282 = vsel %vm1242, %v1191, %v1200
    %v1283 = vsel %vm1242, %v1192, %v1201
    %v1284 = vsel %vm1242, %v1193, %v1202
    %v1285 = vsel %vm1242, %v1194, %v1203
    %v1286 = vsel %vm1242, %v1195, %v1204
    %v1287 = vsel %vm1242, %v1196, %v1205
    %v1288 = vsel %vm1242, %v1179, %v1188
    %v1289 = vsel %vm1242, %v1180, %v1189
    %v1290 = vsel %vm1242, %v1181, %v1190
    %v1291 = vsel %vm1242, %v1182, %v1191
    %v1292 = vsel %vm1242, %v1183, %v1192
    %v1293 = vsel %vm1242, %v1184, %v1193
    %v1294 = vsel %vm1242, %v1185, %v1194
    %v1295 = vsel %vm1242, %v1186, %v1195
    %v1296 = vsel %vm1242, %v1187, %v1196
    %v1297 = vsel %vm1242, %v1170, %v1179
    %v1298 = vsel %vm1242, %v1171, %v1180
    %v1299 = vsel %vm1242, %v1172, %v1181
    %v1300 = vsel %vm1242, %v1173, %v1182
    %v1301 = vsel %vm1242, %v1174, %v1183
    %v1302 = vsel %vm1242, %v1175, %v1184
    %v1303 = vsel %vm1242, %v1176, %v1185
    %v1304 = vsel %vm1242, %v1177, %v1186
    %v1305 = vsel %vm1242, %v1178, %v1187
    %v1306 = vsel %vm1242, %v1161, %v1170
    %v1307 = vsel %vm1242, %v1162, %v1171
    %v1308 = vsel %vm1242, %v1163, %v1172
    %v1309 = vsel %vm1242, %v1164, %v1173
    %v1310 = vsel %vm1242, %v1165, %v1174
    %v1311 = vsel %vm1242, %v1166, %v1175
    %v1312 = vsel %vm1242, %v1167, %v1176
    %v1313 = vsel %vm1242, %v1168, %v1177
    %v1314 = vsel %vm1242, %v1169, %v1178
    %v1315 = vsel %vm1242, %v1152, %v1161
    %v1316 = vsel %vm1242, %v1153, %v1162
    %v1317 = vsel %vm1242, %v1154, %v1163
    %v1318 = vsel %vm1242, %v1155, %v1164
    %v1319 = vsel %vm1242, %v1156, %v1165
    %v1320 = vsel %vm1242, %v1157, %v1166
    %v1321 = vsel %vm1242, %v1158, %v1167
    %v1322 = vsel %vm1242, %v1159, %v1168
    %v1323 = vsel %vm1242, %v1160, %v1169
    %v1324 = vsel %vm1242, %v1143, %v1152
    %v1325 = vsel %vm1242, %v1144, %v1153
    %v1326 = vsel %vm1242, %v1145, %v1154
    %v1327 = vsel %vm1242, %v1146, %v1155
    %v1328 = vsel %vm1242, %v1147, %v1156
    %v1329 = vsel %vm1242, %v1148, %v1157
    %v1330 = vsel %vm1242, %v1149, %v1158
    %v1331 = vsel %vm1242, %v1150, %v1159
    %v1332 = vsel %vm1242, %v1151, %v1160
    %v1333 = vsel %vm1242, %v1134, %v1143
    %v1334 = vsel %vm1242, %v1135, %v1144
    %v1335 = vsel %vm1242, %v1136, %v1145
    %v1336 = vsel %vm1242, %v1137, %v1146
    %v1337 = vsel %vm1242, %v1138, %v1147
    %v1338 = vsel %vm1242, %v1139, %v1148
    %v1339 = vsel %vm1242, %v1140, %v1149
    %v1340 = vsel %vm1242, %v1141, %v1150
    %v1341 = vsel %vm1242, %v1142, %v1151
    %v1342 = vsel %vm1242, %v1125, %v1134
    %v1343 = vsel %vm1242, %v1126, %v1135
    %v1344 = vsel %vm1242, %v1127, %v1136
    %v1345 = vsel %vm1242, %v1128, %v1137
    %v1346 = vsel %vm1242, %v1129, %v1138
    %v1347 = vsel %vm1242, %v1130, %v1139
    %v1348 = vsel %vm1242, %v1131, %v1140
    %v1349 = vsel %vm1242, %v1132, %v1141
    %v1350 = vsel %vm1242, %v1133, %v1142
    %v1351 = vsel %vm1242, %v1233, %v1125
    %v1352 = vsel %vm1242, %v1234, %v1126
    %v1353 = vsel %vm1242, %v1235, %v1127
    %v1354 = vsel %vm1242, %v1236, %v1128
    %v1355 = vsel %vm1242, %v1237, %v1129
    %v1356 = vsel %vm1242, %v1238, %v1130
    %v1357 = vsel %vm1242, %v1239, %v1131
    %v1358 = vsel %vm1242, %v1240, %v1132
    %v1359 = vsel %vm1242, %v1241, %v1133
    %vm1360 = vcmp.lt.s32.totalorder %v195, 32
    %vm1361 = vcmp.lt.s32.totalorder %v196, 32
    %vm1362 = vcmp.lt.s32.totalorder %v197, 32
    %vm1363 = vcmp.lt.s32.totalorder %v198, 32
    %vm1364 = vcmp.lt.s32.totalorder %v199, 32
    %vm1365 = vcmp.lt.s32.totalorder %v200, 32
    %vm1366 = vcmp.lt.s32.totalorder %v201, 32
    %vm1367 = vcmp.lt.s32.totalorder %v202, 32
    %vm1368 = vcmp.lt.s32.totalorder %v203, 32
    %vm1369 = vmand %vm304, %vm1360
    %vm1370 = vmand %vm305, %vm1361
    %vm1371 = vmand %vm306, %vm1362
    %vm1372 = vmand %vm307, %vm1363
    %vm1373 = vmand %vm308, %vm1364
    %vm1374 = vmand %vm309, %vm1365
    %vm1375 = vmand %vm310, %vm1366
    %vm1376 = vmand %vm311, %vm1367
    %vm1377 = vmand %vm312, %vm1368
    %vm1378 = vmand %vm313, %vm1360
    %vm1379 = vmand %vm314, %vm1361
    %vm1380 = vmand %vm315, %vm1362
    %vm1381 = vmand %vm316, %vm1363
    %vm1382 = vmand %vm317, %vm1364
    %vm1383 = vmand %vm318, %vm1365
    %vm1384 = vmand %vm319, %vm1366
    %vm1385 = vmand %vm320, %vm1367
    %vm1386 = vmand %vm321, %vm1368
    %vm1387 = vmand %vm322, %vm1360
    %vm1388 = vmand %vm323, %vm1361
    %vm1389 = vmand %vm324, %vm1362
    %vm1390 = vmand %vm325, %vm1363
    %vm1391 = vmand %vm326, %vm1364
    %vm1392 = vmand %vm327, %vm1365
    %vm1393 = vmand %vm328, %vm1366
    %vm1394 = vmand %vm329, %vm1367
    %vm1395 = vmand %vm330, %vm1368
    %vm1396 = vmand %vm331, %vm1360
    %vm1397 = vmand %vm332, %vm1361
    %vm1398 = vmand %vm333, %vm1362
    %vm1399 = vmand %vm334, %vm1363
    %vm1400 = vmand %vm335, %vm1364
    %vm1401 = vmand %vm336, %vm1365
    %vm1402 = vmand %vm337, %vm1366
    %vm1403 = vmand %vm338, %vm1367
    %vm1404 = vmand %vm339, %vm1368
    %vm1405 = vmand %vm340, %vm1360
    %vm1406 = vmand %vm341, %vm1361
    %vm1407 = vmand %vm342, %vm1362
    %vm1408 = vmand %vm343, %vm1363
    %vm1409 = vmand %vm344, %vm1364
    %vm1410 = vmand %vm345, %vm1365
    %vm1411 = vmand %vm346, %vm1366
    %vm1412 = vmand %vm347, %vm1367
    %vm1413 = vmand %vm348, %vm1368
    %vm1414 = vmand %vm349, %vm1360
    %vm1415 = vmand %vm350, %vm1361
    %vm1416 = vmand %vm351, %vm1362
    %vm1417 = vmand %vm352, %vm1363
    %vm1418 = vmand %vm353, %vm1364
    %vm1419 = vmand %vm354, %vm1365
    %vm1420 = vmand %vm355, %vm1366
    %vm1421 = vmand %vm356, %vm1367
    %vm1422 = vmand %vm357, %vm1368
    %vm1423 = vmand %vm358, %vm1360
    %vm1424 = vmand %vm359, %vm1361
    %vm1425 = vmand %vm360, %vm1362
    %vm1426 = vmand %vm361, %vm1363
    %vm1427 = vmand %vm362, %vm1364
    %vm1428 = vmand %vm363, %vm1365
    %vm1429 = vmand %vm364, %vm1366
    %vm1430 = vmand %vm365, %vm1367
    %vm1431 = vmand %vm366, %vm1368
    %vm1432 = vmand %vm367, %vm1360
    %vm1433 = vmand %vm368, %vm1361
    %vm1434 = vmand %vm369, %vm1362
    %vm1435 = vmand %vm370, %vm1363
    %vm1436 = vmand %vm371, %vm1364
    %vm1437 = vmand %vm372, %vm1365
    %vm1438 = vmand %vm373, %vm1366
    %vm1439 = vmand %vm374, %vm1367
    %vm1440 = vmand %vm375, %vm1368
    %vm1441 = vmand %vm376, %vm1360
    %vm1442 = vmand %vm377, %vm1361
    %vm1443 = vmand %vm378, %vm1362
    %vm1444 = vmand %vm379, %vm1363
    %vm1445 = vmand %vm380, %vm1364
    %vm1446 = vmand %vm381, %vm1365
    %vm1447 = vmand %vm382, %vm1366
    %vm1448 = vmand %vm383, %vm1367
    %vm1449 = vmand %vm384, %vm1368
    %vm1450 = vmand %vm385, %vm1360
    %vm1451 = vmand %vm386, %vm1361
    %vm1452 = vmand %vm387, %vm1362
    %vm1453 = vmand %vm388, %vm1363
    %vm1454 = vmand %vm389, %vm1364
    %vm1455 = vmand %vm390, %vm1365
    %vm1456 = vmand %vm391, %vm1366
    %vm1457 = vmand %vm392, %vm1367
    %vm1458 = vmand %vm393, %vm1368
    %vm1459 = vmand %vm394, %vm1360
    %vm1460 = vmand %vm395, %vm1361
    %vm1461 = vmand %vm396, %vm1362
    %vm1462 = vmand %vm397, %vm1363
    %vm1463 = vmand %vm398, %vm1364
    %vm1464 = vmand %vm399, %vm1365
    %vm1465 = vmand %vm400, %vm1366
    %vm1466 = vmand %vm401, %vm1367
    %vm1467 = vmand %vm402, %vm1368
    %vm1468 = vmand %vm403, %vm1360
    %vm1469 = vmand %vm404, %vm1361
    %vm1470 = vmand %vm405, %vm1362
    %vm1471 = vmand %vm406, %vm1363
    %vm1472 = vmand %vm407, %vm1364
    %vm1473 = vmand %vm408, %vm1365
    %vm1474 = vmand %vm409, %vm1366
    %vm1475 = vmand %vm410, %vm1367
    %vm1476 = vmand %vm411, %vm1368
    %vm1477 = vmand %vm412, %vm1360
    %vm1478 = vmand %vm413, %vm1361
    %vm1479 = vmand %vm414, %vm1362
    %vm1480 = vmand %vm415, %vm1363
    %vm1481 = vmand %vm416, %vm1364
    %vm1482 = vmand %vm417, %vm1365
    %vm1483 = vmand %vm418, %vm1366
    %vm1484 = vmand %vm419, %vm1367
    %vm1485 = vmand %vm420, %vm1368
    %v1486 = vsub.f32 %v9, %v747
    %v1487 = vsub.f32 %v10, %v734
    %v1488 = vsub.f32 %v11, %v721
    %v1489 = vsub.f32 %v12, %v708
    %v1490 = vsub.f32 %v13, %v695
    %v1491 = vsub.f32 %v14, %v682
    %v1492 = vsub.f32 %v15, %v669
    %v1493 = vsub.f32 %v16, %v656
    %v1494 = vsub.f32 %v17, %v760
    %v1495 = vsub.f32 %v18, %v748
    %v1496 = vsub.f32 %v19, %v735
    %v1497 = vsub.f32 %v20, %v722
    %v1498 = vsub.f32 %v21, %v709
    %v1499 = vsub.f32 %v22, %v696
    %v1500 = vsub.f32 %v23, %v683
    %v1501 = vsub.f32 %v24, %v670
    %v1502 = vsub.f32 %v25, %v657
    %v1503 = vsub.f32 %v26, %v761
    %v1504 = vsub.f32 %v27, %v749
    %v1505 = vsub.f32 %v28, %v736
    %v1506 = vsub.f32 %v29, %v723
    %v1507 = vsub.f32 %v30, %v710
    %v1508 = vsub.f32 %v31, %v697
    %v1509 = vsub.f32 %v32, %v684
    %v1510 = vsub.f32 %v33, %v671
    %v1511 = vsub.f32 %v34, %v658
    %v1512 = vsub.f32 %v35, %v762
    %v1513 = vsub.f32 %v36, %v750
    %v1514 = vsub.f32 %v37, %v737
    %v1515 = vsub.f32 %v38, %v724
    %v1516 = vsub.f32 %v39, %v711
    %v1517 = vsub.f32 %v40, %v698
    %v1518 = vsub.f32 %v41, %v685
    %v1519 = vsub.f32 %v42, %v672
    %v1520 = vsub.f32 %v43, %v659
    %v1521 = vsub.f32 %v44, %v763
    %v1522 = vsub.f32 %v45, %v751
    %v1523 = vsub.f32 %v46, %v738
    %v1524 = vsub.f32 %v47, %v725
    %v1525 = vsub.f32 %v48, %v712
    %v1526 = vsub.f32 %v49, %v699
    %v1527 = vsub.f32 %v50, %v686
    %v1528 = vsub.f32 %v51, %v673
    %v1529 = vsub.f32 %v52, %v660
    %v1530 = vsub.f32 %v53, %v764
    %v1531 = vsub.f32 %v54, %v752
    %v1532 = vsub.f32 %v55, %v739
    %v1533 = vsub.f32 %v56, %v726
    %v1534 = vsub.f32 %v57, %v713
    %v1535 = vsub.f32 %v58, %v700
    %v1536 = vsub.f32 %v59, %v687
    %v1537 = vsub.f32 %v60, %v674
    %v1538 = vsub.f32 %v61, %v661
    %v1539 = vsub.f32 %v62, %v765
    %v1540 = vsub.f32 %v63, %v753
    %v1541 = vsub.f32 %v64, %v740
    %v1542 = vsub.f32 %v65, %v727
    %v1543 = vsub.f32 %v66, %v714
    %v1544 = vsub.f32 %v67, %v701
    %v1545 = vsub.f32 %v68, %v688
    %v1546 = vsub.f32 %v69, %v675
    %v1547 = vsub.f32 %v70, %v662
    %v1548 = vsub.f32 %v71, %v766
    %v1549 = vsub.f32 %v72, %v754
    %v1550 = vsub.f32 %v73, %v741
    %v1551 = vsub.f32 %v74, %v728
    %v1552 = vsub.f32 %v75, %v715
    %v1553 = vsub.f32 %v76, %v702
    %v1554 = vsub.f32 %v77, %v689
    %v1555 = vsub.f32 %v78, %v676
    %v1556 = vsub.f32 %v79, %v663
    %v1557 = vsub.f32 %v80, %v767
    %v1558 = vsub.f32 %v81, %v755
    %v1559 = vsub.f32 %v82, %v742
    %v1560 = vsub.f32 %v83, %v729
    %v1561 = vsub.f32 %v84, %v716
    %v1562 = vsub.f32 %v85, %v703
    %v1563 = vsub.f32 %v86, %v690
    %v1564 = vsub.f32 %v87, %v677
    %v1565 = vsub.f32 %v88, %v664
    %v1566 = vsub.f32 %v89, %v768
    %v1567 = vsub.f32 %v90, %v756
    %v1568 = vsub.f32 %v91, %v743
    %v1569 = vsub.f32 %v92, %v730
    %v1570 = vsub.f32 %v93, %v717
    %v1571 = vsub.f32 %v94, %v704
    %v1572 = vsub.f32 %v95, %v691
    %v1573 = vsub.f32 %v96, %v678
    %v1574 = vsub.f32 %v97, %v665
    %v1575 = vsub.f32 %v98, %v769
    %v1576 = vsub.f32 %v99, %v757
    %v1577 = vsub.f32 %v100, %v744
    %v1578 = vsub.f32 %v101, %v731
    %v1579 = vsub.f32 %v102, %v718
    %v1580 = vsub.f32 %v103, %v705
    %v1581 = vsub.f32 %v104, %v692
    %v1582 = vsub.f32 %v105, %v679
    %v1583 = vsub.f32 %v106, %v666
    %v1584 = vsub.f32 %v107, %v770
    %v1585 = vsub.f32 %v108, %v758
    %v1586 = vsub.f32 %v109, %v745
    %v1587 = vsub.f32 %v110, %v732
    %v1588 = vsub.f32 %v111, %v719
    %v1589 = vsub.f32 %v112, %v706
    %v1590 = vsub.f32 %v113, %v693
    %v1591 = vsub.f32 %v114, %v680
    %v1592 = vsub.f32 %v115, %v667
    %v1593 = vsub.f32 %v116, %v771
    %v1594 = vsub.f32 %v117, %v759
    %v1595 = vsub.f32 %v118, %v746
    %v1596 = vsub.f32 %v119, %v733
    %v1597 = vsub.f32 %v120, %v720
    %v1598 = vsub.f32 %v121, %v707
    %v1599 = vsub.f32 %v122, %v694
    %v1600 = vsub.f32 %v123, %v681
    %v1601 = vsub.f32 %v124, %v668
    %v1602 = vsub.f32 %v125, %v772
    %v1603 = vsel %vm1369, %v1486, 0.0
    %v1604 = vsel %vm1370, %v1487, 0.0
    %v1605 = vsel %vm1371, %v1488, 0.0
    %v1606 = vsel %vm1372, %v1489, 0.0
    %v1607 = vsel %vm1373, %v1490, 0.0
    %v1608 = vsel %vm1374, %v1491, 0.0
    %v1609 = vsel %vm1375, %v1492, 0.0
    %v1610 = vsel %vm1376, %v1493, 0.0
    %v1611 = vsel %vm1377, %v1494, 0.0
    %v1612 = vsel %vm1378, %v1495, 0.0
    %v1613 = vsel %vm1379, %v1496, 0.0
    %v1614 = vsel %vm1380, %v1497, 0.0
    %v1615 = vsel %vm1381, %v1498, 0.0
    %v1616 = vsel %vm1382, %v1499, 0.0
    %v1617 = vsel %vm1383, %v1500, 0.0
    %v1618 = vsel %vm1384, %v1501, 0.0
    %v1619 = vsel %vm1385, %v1502, 0.0
    %v1620 = vsel %vm1386, %v1503, 0.0
    %v1621 = vsel %vm1387, %v1504, 0.0
    %v1622 = vsel %vm1388, %v1505, 0.0
    %v1623 = vsel %vm1389, %v1506, 0.0
    %v1624 = vsel %vm1390, %v1507, 0.0
    %v1625 = vsel %vm1391, %v1508, 0.0
    %v1626 = vsel %vm1392, %v1509, 0.0
    %v1627 = vsel %vm1393, %v1510, 0.0
    %v1628 = vsel %vm1394, %v1511, 0.0
    %v1629 = vsel %vm1395, %v1512, 0.0
    %v1630 = vsel %vm1396, %v1513, 0.0
    %v1631 = vsel %vm1397, %v1514, 0.0
    %v1632 = vsel %vm1398, %v1515, 0.0
    %v1633 = vsel %vm1399, %v1516, 0.0
    %v1634 = vsel %vm1400, %v1517, 0.0
    %v1635 = vsel %vm1401, %v1518, 0.0
    %v1636 = vsel %vm1402, %v1519, 0.0
    %v1637 = vsel %vm1403, %v1520, 0.0
    %v1638 = vsel %vm1404, %v1521, 0.0
    %v1639 = vsel %vm1405, %v1522, 0.0
    %v1640 = vsel %vm1406, %v1523, 0.0
    %v1641 = vsel %vm1407, %v1524, 0.0
    %v1642 = vsel %vm1408, %v1525, 0.0
    %v1643 = vsel %vm1409, %v1526, 0.0
    %v1644 = vsel %vm1410, %v1527, 0.0
    %v1645 = vsel %vm1411, %v1528, 0.0
    %v1646 = vsel %vm1412, %v1529, 0.0
    %v1647 = vsel %vm1413, %v1530, 0.0
    %v1648 = vsel %vm1414, %v1531, 0.0
    %v1649 = vsel %vm1415, %v1532, 0.0
    %v1650 = vsel %vm1416, %v1533, 0.0
    %v1651 = vsel %vm1417, %v1534, 0.0
    %v1652 = vsel %vm1418, %v1535, 0.0
    %v1653 = vsel %vm1419, %v1536, 0.0
    %v1654 = vsel %vm1420, %v1537, 0.0
    %v1655 = vsel %vm1421, %v1538, 0.0
    %v1656 = vsel %vm1422, %v1539, 0.0
    %v1657 = vsel %vm1423, %v1540, 0.0
    %v1658 = vsel %vm1424, %v1541, 0.0
    %v1659 = vsel %vm1425, %v1542, 0.0
    %v1660 = vsel %vm1426, %v1543, 0.0
    %v1661 = vsel %vm1427, %v1544, 0.0
    %v1662 = vsel %vm1428, %v1545, 0.0
    %v1663 = vsel %vm1429, %v1546, 0.0
    %v1664 = vsel %vm1430, %v1547, 0.0
    %v1665 = vsel %vm1431, %v1548, 0.0
    %v1666 = vsel %vm1432, %v1549, 0.0
    %v1667 = vsel %vm1433, %v1550, 0.0
    %v1668 = vsel %vm1434, %v1551, 0.0
    %v1669 = vsel %vm1435, %v1552, 0.0
    %v1670 = vsel %vm1436, %v1553, 0.0
    %v1671 = vsel %vm1437, %v1554, 0.0
    %v1672 = vsel %vm1438, %v1555, 0.0
    %v1673 = vsel %vm1439, %v1556, 0.0
    %v1674 = vsel %vm1440, %v1557, 0.0
    %v1675 = vsel %vm1441, %v1558, 0.0
    %v1676 = vsel %vm1442, %v1559, 0.0
    %v1677 = vsel %vm1443, %v1560, 0.0
    %v1678 = vsel %vm1444, %v1561, 0.0
    %v1679 = vsel %vm1445, %v1562, 0.0
    %v1680 = vsel %vm1446, %v1563, 0.0
    %v1681 = vsel %vm1447, %v1564, 0.0
    %v1682 = vsel %vm1448, %v1565, 0.0
    %v1683 = vsel %vm1449, %v1566, 0.0
    %v1684 = vsel %vm1450, %v1567, 0.0
    %v1685 = vsel %vm1451, %v1568, 0.0
    %v1686 = vsel %vm1452, %v1569, 0.0
    %v1687 = vsel %vm1453, %v1570, 0.0
    %v1688 = vsel %vm1454, %v1571, 0.0
    %v1689 = vsel %vm1455, %v1572, 0.0
    %v1690 = vsel %vm1456, %v1573, 0.0
    %v1691 = vsel %vm1457, %v1574, 0.0
    %v1692 = vsel %vm1458, %v1575, 0.0
    %v1693 = vsel %vm1459, %v1576, 0.0
    %v1694 = vsel %vm1460, %v1577, 0.0
    %v1695 = vsel %vm1461, %v1578, 0.0
    %v1696 = vsel %vm1462, %v1579, 0.0
    %v1697 = vsel %vm1463, %v1580, 0.0
    %v1698 = vsel %vm1464, %v1581, 0.0
    %v1699 = vsel %vm1465, %v1582, 0.0
    %v1700 = vsel %vm1466, %v1583, 0.0
    %v1701 = vsel %vm1467, %v1584, 0.0
    %v1702 = vsel %vm1468, %v1585, 0.0
    %v1703 = vsel %vm1469, %v1586, 0.0
    %v1704 = vsel %vm1470, %v1587, 0.0
    %v1705 = vsel %vm1471, %v1588, 0.0
    %v1706 = vsel %vm1472, %v1589, 0.0
    %v1707 = vsel %vm1473, %v1590, 0.0
    %v1708 = vsel %vm1474, %v1591, 0.0
    %v1709 = vsel %vm1475, %v1592, 0.0
    %v1710 = vsel %vm1476, %v1593, 0.0
    %v1711 = vsel %vm1477, %v1594, 0.0
    %v1712 = vsel %vm1478, %v1595, 0.0
    %v1713 = vsel %vm1479, %v1596, 0.0
    %v1714 = vsel %vm1480, %v1597, 0.0
    %v1715 = vsel %vm1481, %v1598, 0.0
    %v1716 = vsel %vm1482, %v1599, 0.0
    %v1717 = vsel %vm1483, %v1600, 0.0
    %v1718 = vsel %vm1484, %v1601, 0.0
    %v1719 = vsel %vm1485, %v1602, 0.0
    %vm1720 = vcmp.lt.s32.totalorder %v177, 32
    %vm1721 = vcmp.lt.s32.totalorder %v178, 32
    %vm1722 = vcmp.lt.s32.totalorder %v179, 32
    %vm1723 = vcmp.lt.s32.totalorder %v180, 32
    %vm1724 = vcmp.lt.s32.totalorder %v181, 32
    %vm1725 = vcmp.lt.s32.totalorder %v182, 32
    %vm1726 = vcmp.lt.s32.totalorder %v183, 32
    %vm1727 = vcmp.lt.s32.totalorder %v184, 32
    %vm1728 = vcmp.lt.s32.totalorder %v185, 32
    %vm1729 = vmand %vm304, %vm1720
    %vm1730 = vmand %vm305, %vm1721
    %vm1731 = vmand %vm306, %vm1722
    %vm1732 = vmand %vm307, %vm1723
    %vm1733 = vmand %vm308, %vm1724
    %vm1734 = vmand %vm309, %vm1725
    %vm1735 = vmand %vm310, %vm1726
    %vm1736 = vmand %vm311, %vm1727
    %vm1737 = vmand %vm312, %vm1728
    %vm1738 = vmand %vm313, %vm1720
    %vm1739 = vmand %vm314, %vm1721
    %vm1740 = vmand %vm315, %vm1722
    %vm1741 = vmand %vm316, %vm1723
    %vm1742 = vmand %vm317, %vm1724
    %vm1743 = vmand %vm318, %vm1725
    %vm1744 = vmand %vm319, %vm1726
    %vm1745 = vmand %vm320, %vm1727
    %vm1746 = vmand %vm321, %vm1728
    %vm1747 = vmand %vm322, %vm1720
    %vm1748 = vmand %vm323, %vm1721
    %vm1749 = vmand %vm324, %vm1722
    %vm1750 = vmand %vm325, %vm1723
    %vm1751 = vmand %vm326, %vm1724
    %vm1752 = vmand %vm327, %vm1725
    %vm1753 = vmand %vm328, %vm1726
    %vm1754 = vmand %vm329, %vm1727
    %vm1755 = vmand %vm330, %vm1728
    %vm1756 = vmand %vm331, %vm1720
    %vm1757 = vmand %vm332, %vm1721
    %vm1758 = vmand %vm333, %vm1722
    %vm1759 = vmand %vm334, %vm1723
    %vm1760 = vmand %vm335, %vm1724
    %vm1761 = vmand %vm336, %vm1725
    %vm1762 = vmand %vm337, %vm1726
    %vm1763 = vmand %vm338, %vm1727
    %vm1764 = vmand %vm339, %vm1728
    %vm1765 = vmand %vm340, %vm1720
    %vm1766 = vmand %vm341, %vm1721
    %vm1767 = vmand %vm342, %vm1722
    %vm1768 = vmand %vm343, %vm1723
    %vm1769 = vmand %vm344, %vm1724
    %vm1770 = vmand %vm345, %vm1725
    %vm1771 = vmand %vm346, %vm1726
    %vm1772 = vmand %vm347, %vm1727
    %vm1773 = vmand %vm348, %vm1728
    %vm1774 = vmand %vm349, %vm1720
    %vm1775 = vmand %vm350, %vm1721
    %vm1776 = vmand %vm351, %vm1722
    %vm1777 = vmand %vm352, %vm1723
    %vm1778 = vmand %vm353, %vm1724
    %vm1779 = vmand %vm354, %vm1725
    %vm1780 = vmand %vm355, %vm1726
    %vm1781 = vmand %vm356, %vm1727
    %vm1782 = vmand %vm357, %vm1728
    %vm1783 = vmand %vm358, %vm1720
    %vm1784 = vmand %vm359, %vm1721
    %vm1785 = vmand %vm360, %vm1722
    %vm1786 = vmand %vm361, %vm1723
    %vm1787 = vmand %vm362, %vm1724
    %vm1788 = vmand %vm363, %vm1725
    %vm1789 = vmand %vm364, %vm1726
    %vm1790 = vmand %vm365, %vm1727
    %vm1791 = vmand %vm366, %vm1728
    %vm1792 = vmand %vm367, %vm1720
    %vm1793 = vmand %vm368, %vm1721
    %vm1794 = vmand %vm369, %vm1722
    %vm1795 = vmand %vm370, %vm1723
    %vm1796 = vmand %vm371, %vm1724
    %vm1797 = vmand %vm372, %vm1725
    %vm1798 = vmand %vm373, %vm1726
    %vm1799 = vmand %vm374, %vm1727
    %vm1800 = vmand %vm375, %vm1728
    %vm1801 = vmand %vm376, %vm1720
    %vm1802 = vmand %vm377, %vm1721
    %vm1803 = vmand %vm378, %vm1722
    %vm1804 = vmand %vm379, %vm1723
    %vm1805 = vmand %vm380, %vm1724
    %vm1806 = vmand %vm381, %vm1725
    %vm1807 = vmand %vm382, %vm1726
    %vm1808 = vmand %vm383, %vm1727
    %vm1809 = vmand %vm384, %vm1728
    %vm1810 = vmand %vm385, %vm1720
    %vm1811 = vmand %vm386, %vm1721
    %vm1812 = vmand %vm387, %vm1722
    %vm1813 = vmand %vm388, %vm1723
    %vm1814 = vmand %vm389, %vm1724
    %vm1815 = vmand %vm390, %vm1725
    %vm1816 = vmand %vm391, %vm1726
    %vm1817 = vmand %vm392, %vm1727
    %vm1818 = vmand %vm393, %vm1728
    %vm1819 = vmand %vm394, %vm1720
    %vm1820 = vmand %vm395, %vm1721
    %vm1821 = vmand %vm396, %vm1722
    %vm1822 = vmand %vm397, %vm1723
    %vm1823 = vmand %vm398, %vm1724
    %vm1824 = vmand %vm399, %vm1725
    %vm1825 = vmand %vm400, %vm1726
    %vm1826 = vmand %vm401, %vm1727
    %vm1827 = vmand %vm402, %vm1728
    %vm1828 = vmand %vm403, %vm1720
    %vm1829 = vmand %vm404, %vm1721
    %vm1830 = vmand %vm405, %vm1722
    %vm1831 = vmand %vm406, %vm1723
    %vm1832 = vmand %vm407, %vm1724
    %vm1833 = vmand %vm408, %vm1725
    %vm1834 = vmand %vm409, %vm1726
    %vm1835 = vmand %vm410, %vm1727
    %vm1836 = vmand %vm411, %vm1728
    %vm1837 = vmand %vm412, %vm1720
    %vm1838 = vmand %vm413, %vm1721
    %vm1839 = vmand %vm414, %vm1722
    %vm1840 = vmand %vm415, %vm1723
    %vm1841 = vmand %vm416, %vm1724
    %vm1842 = vmand %vm417, %vm1725
    %vm1843 = vmand %vm418, %vm1726
    %vm1844 = vmand %vm419, %vm1727
    %vm1845 = vmand %vm420, %vm1728
    %v1846 = vsub.f32 %v9, %v1099
    %v1847 = vsub.f32 %v10, %v1086
    %v1848 = vsub.f32 %v11, %v1073
    %v1849 = vsub.f32 %v12, %v1060
    %v1850 = vsub.f32 %v13, %v1047
    %v1851 = vsub.f32 %v14, %v1034
    %v1852 = vsub.f32 %v15, %v1021
    %v1853 = vsub.f32 %v16, %v1008
    %v1854 = vsub.f32 %v17, %v1112
    %v1855 = vsub.f32 %v18, %v1100
    %v1856 = vsub.f32 %v19, %v1087
    %v1857 = vsub.f32 %v20, %v1074
    %v1858 = vsub.f32 %v21, %v1061
    %v1859 = vsub.f32 %v22, %v1048
    %v1860 = vsub.f32 %v23, %v1035
    %v1861 = vsub.f32 %v24, %v1022
    %v1862 = vsub.f32 %v25, %v1009
    %v1863 = vsub.f32 %v26, %v1113
    %v1864 = vsub.f32 %v27, %v1101
    %v1865 = vsub.f32 %v28, %v1088
    %v1866 = vsub.f32 %v29, %v1075
    %v1867 = vsub.f32 %v30, %v1062
    %v1868 = vsub.f32 %v31, %v1049
    %v1869 = vsub.f32 %v32, %v1036
    %v1870 = vsub.f32 %v33, %v1023
    %v1871 = vsub.f32 %v34, %v1010
    %v1872 = vsub.f32 %v35, %v1114
    %v1873 = vsub.f32 %v36, %v1102
    %v1874 = vsub.f32 %v37, %v1089
    %v1875 = vsub.f32 %v38, %v1076
    %v1876 = vsub.f32 %v39, %v1063
    %v1877 = vsub.f32 %v40, %v1050
    %v1878 = vsub.f32 %v41, %v1037
    %v1879 = vsub.f32 %v42, %v1024
    %v1880 = vsub.f32 %v43, %v1011
    %v1881 = vsub.f32 %v44, %v1115
    %v1882 = vsub.f32 %v45, %v1103
    %v1883 = vsub.f32 %v46, %v1090
    %v1884 = vsub.f32 %v47, %v1077
    %v1885 = vsub.f32 %v48, %v1064
    %v1886 = vsub.f32 %v49, %v1051
    %v1887 = vsub.f32 %v50, %v1038
    %v1888 = vsub.f32 %v51, %v1025
    %v1889 = vsub.f32 %v52, %v1012
    %v1890 = vsub.f32 %v53, %v1116
    %v1891 = vsub.f32 %v54, %v1104
    %v1892 = vsub.f32 %v55, %v1091
    %v1893 = vsub.f32 %v56, %v1078
    %v1894 = vsub.f32 %v57, %v1065
    %v1895 = vsub.f32 %v58, %v1052
    %v1896 = vsub.f32 %v59, %v1039
    %v1897 = vsub.f32 %v60, %v1026
    %v1898 = vsub.f32 %v61, %v1013
    %v1899 = vsub.f32 %v62, %v1117
    %v1900 = vsub.f32 %v63, %v1105
    %v1901 = vsub.f32 %v64, %v1092
    %v1902 = vsub.f32 %v65, %v1079
    %v1903 = vsub.f32 %v66, %v1066
    %v1904 = vsub.f32 %v67, %v1053
    %v1905 = vsub.f32 %v68, %v1040
    %v1906 = vsub.f32 %v69, %v1027
    %v1907 = vsub.f32 %v70, %v1014
    %v1908 = vsub.f32 %v71, %v1118
    %v1909 = vsub.f32 %v72, %v1106
    %v1910 = vsub.f32 %v73, %v1093
    %v1911 = vsub.f32 %v74, %v1080
    %v1912 = vsub.f32 %v75, %v1067
    %v1913 = vsub.f32 %v76, %v1054
    %v1914 = vsub.f32 %v77, %v1041
    %v1915 = vsub.f32 %v78, %v1028
    %v1916 = vsub.f32 %v79, %v1015
    %v1917 = vsub.f32 %v80, %v1119
    %v1918 = vsub.f32 %v81, %v1107
    %v1919 = vsub.f32 %v82, %v1094
    %v1920 = vsub.f32 %v83, %v1081
    %v1921 = vsub.f32 %v84, %v1068
    %v1922 = vsub.f32 %v85, %v1055
    %v1923 = vsub.f32 %v86, %v1042
    %v1924 = vsub.f32 %v87, %v1029
    %v1925 = vsub.f32 %v88, %v1016
    %v1926 = vsub.f32 %v89, %v1120
    %v1927 = vsub.f32 %v90, %v1108
    %v1928 = vsub.f32 %v91, %v1095
    %v1929 = vsub.f32 %v92, %v1082
    %v1930 = vsub.f32 %v93, %v1069
    %v1931 = vsub.f32 %v94, %v1056
    %v1932 = vsub.f32 %v95, %v1043
    %v1933 = vsub.f32 %v96, %v1030
    %v1934 = vsub.f32 %v97, %v1017
    %v1935 = vsub.f32 %v98, %v1121
    %v1936 = vsub.f32 %v99, %v1109
    %v1937 = vsub.f32 %v100, %v1096
    %v1938 = vsub.f32 %v101, %v1083
    %v1939 = vsub.f32 %v102, %v1070
    %v1940 = vsub.f32 %v103, %v1057
    %v1941 = vsub.f32 %v104, %v1044
    %v1942 = vsub.f32 %v105, %v1031
    %v1943 = vsub.f32 %v106, %v1018
    %v1944 = vsub.f32 %v107, %v1122
    %v1945 = vsub.f32 %v108, %v1110
    %v1946 = vsub.f32 %v109, %v1097
    %v1947 = vsub.f32 %v110, %v1084
    %v1948 = vsub.f32 %v111, %v1071
    %v1949 = vsub.f32 %v112, %v1058
    %v1950 = vsub.f32 %v113, %v1045
    %v1951 = vsub.f32 %v114, %v1032
    %v1952 = vsub.f32 %v115, %v1019
    %v1953 = vsub.f32 %v116, %v1123
    %v1954 = vsub.f32 %v117, %v1111
    %v1955 = vsub.f32 %v118, %v1098
    %v1956 = vsub.f32 %v119, %v1085
    %v1957 = vsub.f32 %v120, %v1072
    %v1958 = vsub.f32 %v121, %v1059
    %v1959 = vsub.f32 %v122, %v1046
    %v1960 = vsub.f32 %v123, %v1033
    %v1961 = vsub.f32 %v124, %v1020
    %v1962 = vsub.f32 %v125, %v1124
    %v1963 = vsel %vm1729, %v1846, 0.0
    %v1964 = vsel %vm1730, %v1847, 0.0
    %v1965 = vsel %vm1731, %v1848, 0.0
    %v1966 = vsel %vm1732, %v1849, 0.0
    %v1967 = vsel %vm1733, %v1850, 0.0
    %v1968 = vsel %vm1734, %v1851, 0.0
    %v1969 = vsel %vm1735, %v1852, 0.0
    %v1970 = vsel %vm1736, %v1853, 0.0
    %v1971 = vsel %vm1737, %v1854, 0.0
    %v1972 = vsel %vm1738, %v1855, 0.0
    %v1973 = vsel %vm1739, %v1856, 0.0
    %v1974 = vsel %vm1740, %v1857, 0.0
    %v1975 = vsel %vm1741, %v1858, 0.0
    %v1976 = vsel %vm1742, %v1859, 0.0
    %v1977 = vsel %vm1743, %v1860, 0.0
    %v1978 = vsel %vm1744, %v1861, 0.0
    %v1979 = vsel %vm1745, %v1862, 0.0
    %v1980 = vsel %vm1746, %v1863, 0.0
    %v1981 = vsel %vm1747, %v1864, 0.0
    %v1982 = vsel %vm1748, %v1865, 0.0
    %v1983 = vsel %vm1749, %v1866, 0.0
    %v1984 = vsel %vm1750, %v1867, 0.0
    %v1985 = vsel %vm1751, %v1868, 0.0
    %v1986 = vsel %vm1752, %v1869, 0.0
    %v1987 = vsel %vm1753, %v1870, 0.0
    %v1988 = vsel %vm1754, %v1871, 0.0
    %v1989 = vsel %vm1755, %v1872, 0.0
    %v1990 = vsel %vm1756, %v1873, 0.0
    %v1991 = vsel %vm1757, %v1874, 0.0
    %v1992 = vsel %vm1758, %v1875, 0.0
    %v1993 = vsel %vm1759, %v1876, 0.0
    %v1994 = vsel %vm1760, %v1877, 0.0
    %v1995 = vsel %vm1761, %v1878, 0.0
    %v1996 = vsel %vm1762, %v1879, 0.0
    %v1997 = vsel %vm1763, %v1880, 0.0
    %v1998 = vsel %vm1764, %v1881, 0.0
    %v1999 = vsel %vm1765, %v1882, 0.0
    %v2000 = vsel %vm1766, %v1883, 0.0
    %v2001 = vsel %vm1767, %v1884, 0.0
    %v2002 = vsel %vm1768, %v1885, 0.0
    %v2003 = vsel %vm1769, %v1886, 0.0
    %v2004 = vsel %vm1770, %v1887, 0.0
    %v2005 = vsel %vm1771, %v1888, 0.0
    %v2006 = vsel %vm1772, %v1889, 0.0
    %v2007 = vsel %vm1773, %v1890, 0.0
    %v2008 = vsel %vm1774, %v1891, 0.0
    %v2009 = vsel %vm1775, %v1892, 0.0
    %v2010 = vsel %vm1776, %v1893, 0.0
    %v2011 = vsel %vm1777, %v1894, 0.0
    %v2012 = vsel %vm1778, %v1895, 0.0
    %v2013 = vsel %vm1779, %v1896, 0.0
    %v2014 = vsel %vm1780, %v1897, 0.0
    %v2015 = vsel %vm1781, %v1898, 0.0
    %v2016 = vsel %vm1782, %v1899, 0.0
    %v2017 = vsel %vm1783, %v1900, 0.0
    %v2018 = vsel %vm1784, %v1901, 0.0
    %v2019 = vsel %vm1785, %v1902, 0.0
    %v2020 = vsel %vm1786, %v1903, 0.0
    %v2021 = vsel %vm1787, %v1904, 0.0
    %v2022 = vsel %vm1788, %v1905, 0.0
    %v2023 = vsel %vm1789, %v1906, 0.0
    %v2024 = vsel %vm1790, %v1907, 0.0
    %v2025 = vsel %vm1791, %v1908, 0.0
    %v2026 = vsel %vm1792, %v1909, 0.0
    %v2027 = vsel %vm1793, %v1910, 0.0
    %v2028 = vsel %vm1794, %v1911, 0.0
    %v2029 = vsel %vm1795, %v1912, 0.0
    %v2030 = vsel %vm1796, %v1913, 0.0
    %v2031 = vsel %vm1797, %v1914, 0.0
    %v2032 = vsel %vm1798, %v1915, 0.0
    %v2033 = vsel %vm1799, %v1916, 0.0
    %v2034 = vsel %vm1800, %v1917, 0.0
    %v2035 = vsel %vm1801, %v1918, 0.0
    %v2036 = vsel %vm1802, %v1919, 0.0
    %v2037 = vsel %vm1803, %v1920, 0.0
    %v2038 = vsel %vm1804, %v1921, 0.0
    %v2039 = vsel %vm1805, %v1922, 0.0
    %v2040 = vsel %vm1806, %v1923, 0.0
    %v2041 = vsel %vm1807, %v1924, 0.0
    %v2042 = vsel %vm1808, %v1925, 0.0
    %v2043 = vsel %vm1809, %v1926, 0.0
    %v2044 = vsel %vm1810, %v1927, 0.0
    %v2045 = vsel %vm1811, %v1928, 0.0
    %v2046 = vsel %vm1812, %v1929, 0.0
    %v2047 = vsel %vm1813, %v1930, 0.0
    %v2048 = vsel %vm1814, %v1931, 0.0
    %v2049 = vsel %vm1815, %v1932, 0.0
    %v2050 = vsel %vm1816, %v1933, 0.0
    %v2051 = vsel %vm1817, %v1934, 0.0
    %v2052 = vsel %vm1818, %v1935, 0.0
    %v2053 = vsel %vm1819, %v1936, 0.0
    %v2054 = vsel %vm1820, %v1937, 0.0
    %v2055 = vsel %vm1821, %v1938, 0.0
    %v2056 = vsel %vm1822, %v1939, 0.0
    %v2057 = vsel %vm1823, %v1940, 0.0
    %v2058 = vsel %vm1824, %v1941, 0.0
    %v2059 = vsel %vm1825, %v1942, 0.0
    %v2060 = vsel %vm1826, %v1943, 0.0
    %v2061 = vsel %vm1827, %v1944, 0.0
    %v2062 = vsel %vm1828, %v1945, 0.0
    %v2063 = vsel %vm1829, %v1946, 0.0
    %v2064 = vsel %vm1830, %v1947, 0.0
    %v2065 = vsel %vm1831, %v1948, 0.0
    %v2066 = vsel %vm1832, %v1949, 0.0
    %v2067 = vsel %vm1833, %v1950, 0.0
    %v2068 = vsel %vm1834, %v1951, 0.0
    %v2069 = vsel %vm1835, %v1952, 0.0
    %v2070 = vsel %vm1836, %v1953, 0.0
    %v2071 = vsel %vm1837, %v1954, 0.0
    %v2072 = vsel %vm1838, %v1955, 0.0
    %v2073 = vsel %vm1839, %v1956, 0.0
    %v2074 = vsel %vm1840, %v1957, 0.0
    %v2075 = vsel %vm1841, %v1958, 0.0
    %v2076 = vsel %vm1842, %v1959, 0.0
    %v2077 = vsel %vm1843, %v1960, 0.0
    %v2078 = vsel %vm1844, %v1961, 0.0
    %v2079 = vsel %vm1845, %v1962, 0.0
    %vm2080 = vcmp.lt.s32.totalorder %v269, 32
    %vm2081 = vcmp.lt.s32.totalorder %v270, 32
    %vm2082 = vcmp.lt.s32.totalorder %v271, 32
    %vm2083 = vcmp.lt.s32.totalorder %v272, 32
    %vm2084 = vcmp.lt.s32.totalorder %v273, 32
    %vm2085 = vcmp.lt.s32.totalorder %v274, 32
    %vm2086 = vcmp.lt.s32.totalorder %v275, 32
    %vm2087 = vcmp.lt.s32.totalorder %v276, 32
    %vm2088 = vcmp.lt.s32.totalorder %v277, 32
    %vm2089 = vcmp.lt.s32.totalorder %v278, 32
    %vm2090 = vcmp.lt.s32.totalorder %v279, 32
    %vm2091 = vcmp.lt.s32.totalorder %v280, 32
    %vm2092 = vcmp.lt.s32.totalorder %v281, 32
    %vm2093 = vmand %vm304, %vm2080
    %vm2094 = vmand %vm305, %vm2080
    %vm2095 = vmand %vm306, %vm2080
    %vm2096 = vmand %vm307, %vm2080
    %vm2097 = vmand %vm308, %vm2080
    %vm2098 = vmand %vm309, %vm2080
    %vm2099 = vmand %vm310, %vm2080
    %vm2100 = vmand %vm311, %vm2080
    %vm2101 = vmand %vm312, %vm2080
    %vm2102 = vmand %vm313, %vm2081
    %vm2103 = vmand %vm314, %vm2081
    %vm2104 = vmand %vm315, %vm2081
    %vm2105 = vmand %vm316, %vm2081
    %vm2106 = vmand %vm317, %vm2081
    %vm2107 = vmand %vm318, %vm2081
    %vm2108 = vmand %vm319, %vm2081
    %vm2109 = vmand %vm320, %vm2081
    %vm2110 = vmand %vm321, %vm2081
    %vm2111 = vmand %vm322, %vm2082
    %vm2112 = vmand %vm323, %vm2082
    %vm2113 = vmand %vm324, %vm2082
    %vm2114 = vmand %vm325, %vm2082
    %vm2115 = vmand %vm326, %vm2082
    %vm2116 = vmand %vm327, %vm2082
    %vm2117 = vmand %vm328, %vm2082
    %vm2118 = vmand %vm329, %vm2082
    %vm2119 = vmand %vm330, %vm2082
    %vm2120 = vmand %vm331, %vm2083
    %vm2121 = vmand %vm332, %vm2083
    %vm2122 = vmand %vm333, %vm2083
    %vm2123 = vmand %vm334, %vm2083
    %vm2124 = vmand %vm335, %vm2083
    %vm2125 = vmand %vm336, %vm2083
    %vm2126 = vmand %vm337, %vm2083
    %vm2127 = vmand %vm338, %vm2083
    %vm2128 = vmand %vm339, %vm2083
    %vm2129 = vmand %vm340, %vm2084
    %vm2130 = vmand %vm341, %vm2084
    %vm2131 = vmand %vm342, %vm2084
    %vm2132 = vmand %vm343, %vm2084
    %vm2133 = vmand %vm344, %vm2084
    %vm2134 = vmand %vm345, %vm2084
    %vm2135 = vmand %vm346, %vm2084
    %vm2136 = vmand %vm347, %vm2084
    %vm2137 = vmand %vm348, %vm2084
    %vm2138 = vmand %vm349, %vm2085
    %vm2139 = vmand %vm350, %vm2085
    %vm2140 = vmand %vm351, %vm2085
    %vm2141 = vmand %vm352, %vm2085
    %vm2142 = vmand %vm353, %vm2085
    %vm2143 = vmand %vm354, %vm2085
    %vm2144 = vmand %vm355, %vm2085
    %vm2145 = vmand %vm356, %vm2085
    %vm2146 = vmand %vm357, %vm2085
    %vm2147 = vmand %vm358, %vm2086
    %vm2148 = vmand %vm359, %vm2086
    %vm2149 = vmand %vm360, %vm2086
    %vm2150 = vmand %vm361, %vm2086
    %vm2151 = vmand %vm362, %vm2086
    %vm2152 = vmand %vm363, %vm2086
    %vm2153 = vmand %vm364, %vm2086
    %vm2154 = vmand %vm365, %vm2086
    %vm2155 = vmand %vm366, %vm2086
    %vm2156 = vmand %vm367, %vm2087
    %vm2157 = vmand %vm368, %vm2087
    %vm2158 = vmand %vm369, %vm2087
    %vm2159 = vmand %vm370, %vm2087
    %vm2160 = vmand %vm371, %vm2087
    %vm2161 = vmand %vm372, %vm2087
    %vm2162 = vmand %vm373, %vm2087
    %vm2163 = vmand %vm374, %vm2087
    %vm2164 = vmand %vm375, %vm2087
    %vm2165 = vmand %vm376, %vm2088
    %vm2166 = vmand %vm377, %vm2088
    %vm2167 = vmand %vm378, %vm2088
    %vm2168 = vmand %vm379, %vm2088
    %vm2169 = vmand %vm380, %vm2088
    %vm2170 = vmand %vm381, %vm2088
    %vm2171 = vmand %vm382, %vm2088
    %vm2172 = vmand %vm383, %vm2088
    %vm2173 = vmand %vm384, %vm2088
    %vm2174 = vmand %vm385, %vm2089
    %vm2175 = vmand %vm386, %vm2089
    %vm2176 = vmand %vm387, %vm2089
    %vm2177 = vmand %vm388, %vm2089
    %vm2178 = vmand %vm389, %vm2089
    %vm2179 = vmand %vm390, %vm2089
    %vm2180 = vmand %vm391, %vm2089
    %vm2181 = vmand %vm392, %vm2089
    %vm2182 = vmand %vm393, %vm2089
    %vm2183 = vmand %vm394, %vm2090
    %vm2184 = vmand %vm395, %vm2090
    %vm2185 = vmand %vm396, %vm2090
    %vm2186 = vmand %vm397, %vm2090
    %vm2187 = vmand %vm398, %vm2090
    %vm2188 = vmand %vm399, %vm2090
    %vm2189 = vmand %vm400, %vm2090
    %vm2190 = vmand %vm401, %vm2090
    %vm2191 = vmand %vm402, %vm2090
    %vm2192 = vmand %vm403, %vm2091
    %vm2193 = vmand %vm404, %vm2091
    %vm2194 = vmand %vm405, %vm2091
    %vm2195 = vmand %vm406, %vm2091
    %vm2196 = vmand %vm407, %vm2091
    %vm2197 = vmand %vm408, %vm2091
    %vm2198 = vmand %vm409, %vm2091
    %vm2199 = vmand %vm410, %vm2091
    %vm2200 = vmand %vm411, %vm2091
    %vm2201 = vmand %vm412, %vm2092
    %vm2202 = vmand %vm413, %vm2092
    %vm2203 = vmand %vm414, %vm2092
    %vm2204 = vmand %vm415, %vm2092
    %vm2205 = vmand %vm416, %vm2092
    %vm2206 = vmand %vm417, %vm2092
    %vm2207 = vmand %vm418, %vm2092
    %vm2208 = vmand %vm419, %vm2092
    %vm2209 = vmand %vm420, %vm2092
    %v2210 = vsub.f32 %v9, %v1342
    %v2211 = vsub.f32 %v10, %v1343
    %v2212 = vsub.f32 %v11, %v1344
    %v2213 = vsub.f32 %v12, %v1345
    %v2214 = vsub.f32 %v13, %v1346
    %v2215 = vsub.f32 %v14, %v1347
    %v2216 = vsub.f32 %v15, %v1348
    %v2217 = vsub.f32 %v16, %v1349
    %v2218 = vsub.f32 %v17, %v1350
    %v2219 = vsub.f32 %v18, %v1333
    %v2220 = vsub.f32 %v19, %v1334
    %v2221 = vsub.f32 %v20, %v1335
    %v2222 = vsub.f32 %v21, %v1336
    %v2223 = vsub.f32 %v22, %v1337
    %v2224 = vsub.f32 %v23, %v1338
    %v2225 = vsub.f32 %v24, %v1339
    %v2226 = vsub.f32 %v25, %v1340
    %v2227 = vsub.f32 %v26, %v1341
    %v2228 = vsub.f32 %v27, %v1324
    %v2229 = vsub.f32 %v28, %v1325
    %v2230 = vsub.f32 %v29, %v1326
    %v2231 = vsub.f32 %v30, %v1327
    %v2232 = vsub.f32 %v31, %v1328
    %v2233 = vsub.f32 %v32, %v1329
    %v2234 = vsub.f32 %v33, %v1330
    %v2235 = vsub.f32 %v34, %v1331
    %v2236 = vsub.f32 %v35, %v1332
    %v2237 = vsub.f32 %v36, %v1315
    %v2238 = vsub.f32 %v37, %v1316
    %v2239 = vsub.f32 %v38, %v1317
    %v2240 = vsub.f32 %v39, %v1318
    %v2241 = vsub.f32 %v40, %v1319
    %v2242 = vsub.f32 %v41, %v1320
    %v2243 = vsub.f32 %v42, %v1321
    %v2244 = vsub.f32 %v43, %v1322
    %v2245 = vsub.f32 %v44, %v1323
    %v2246 = vsub.f32 %v45, %v1306
    %v2247 = vsub.f32 %v46, %v1307
    %v2248 = vsub.f32 %v47, %v1308
    %v2249 = vsub.f32 %v48, %v1309
    %v2250 = vsub.f32 %v49, %v1310
    %v2251 = vsub.f32 %v50, %v1311
    %v2252 = vsub.f32 %v51, %v1312
    %v2253 = vsub.f32 %v52, %v1313
    %v2254 = vsub.f32 %v53, %v1314
    %v2255 = vsub.f32 %v54, %v1297
    %v2256 = vsub.f32 %v55, %v1298
    %v2257 = vsub.f32 %v56, %v1299
    %v2258 = vsub.f32 %v57, %v1300
    %v2259 = vsub.f32 %v58, %v1301
    %v2260 = vsub.f32 %v59, %v1302
    %v2261 = vsub.f32 %v60, %v1303
    %v2262 = vsub.f32 %v61, %v1304
    %v2263 = vsub.f32 %v62, %v1305
    %v2264 = vsub.f32 %v63, %v1288
    %v2265 = vsub.f32 %v64, %v1289
    %v2266 = vsub.f32 %v65, %v1290
    %v2267 = vsub.f32 %v66, %v1291
    %v2268 = vsub.f32 %v67, %v1292
    %v2269 = vsub.f32 %v68, %v1293
    %v2270 = vsub.f32 %v69, %v1294
    %v2271 = vsub.f32 %v70, %v1295
    %v2272 = vsub.f32 %v71, %v1296
    %v2273 = vsub.f32 %v72, %v1279
    %v2274 = vsub.f32 %v73, %v1280
    %v2275 = vsub.f32 %v74, %v1281
    %v2276 = vsub.f32 %v75, %v1282
    %v2277 = vsub.f32 %v76, %v1283
    %v2278 = vsub.f32 %v77, %v1284
    %v2279 = vsub.f32 %v78, %v1285
    %v2280 = vsub.f32 %v79, %v1286
    %v2281 = vsub.f32 %v80, %v1287
    %v2282 = vsub.f32 %v81, %v1270
    %v2283 = vsub.f32 %v82, %v1271
    %v2284 = vsub.f32 %v83, %v1272
    %v2285 = vsub.f32 %v84, %v1273
    %v2286 = vsub.f32 %v85, %v1274
    %v2287 = vsub.f32 %v86, %v1275
    %v2288 = vsub.f32 %v87, %v1276
    %v2289 = vsub.f32 %v88, %v1277
    %v2290 = vsub.f32 %v89, %v1278
    %v2291 = vsub.f32 %v90, %v1261
    %v2292 = vsub.f32 %v91, %v1262
    %v2293 = vsub.f32 %v92, %v1263
    %v2294 = vsub.f32 %v93, %v1264
    %v2295 = vsub.f32 %v94, %v1265
    %v2296 = vsub.f32 %v95, %v1266
    %v2297 = vsub.f32 %v96, %v1267
    %v2298 = vsub.f32 %v97, %v1268
    %v2299 = vsub.f32 %v98, %v1269
    %v2300 = vsub.f32 %v99, %v1252
    %v2301 = vsub.f32 %v100, %v1253
    %v2302 = vsub.f32 %v101, %v1254
    %v2303 = vsub.f32 %v102, %v1255
    %v2304 = vsub.f32 %v103, %v1256
    %v2305 = vsub.f32 %v104, %v1257
    %v2306 = vsub.f32 %v105, %v1258
    %v2307 = vsub.f32 %v106, %v1259
    %v2308 = vsub.f32 %v107, %v1260
    %v2309 = vsub.f32 %v108, %v1243
    %v2310 = vsub.f32 %v109, %v1244
    %v2311 = vsub.f32 %v110, %v1245
    %v2312 = vsub.f32 %v111, %v1246
    %v2313 = vsub.f32 %v112, %v1247
    %v2314 = vsub.f32 %v113, %v1248
    %v2315 = vsub.f32 %v114, %v1249
    %v2316 = vsub.f32 %v115, %v1250
    %v2317 = vsub.f32 %v116, %v1251
    %v2318 = vsub.f32 %v117, %v1351
    %v2319 = vsub.f32 %v118, %v1352
    %v2320 = vsub.f32 %v119, %v1353
    %v2321 = vsub.f32 %v120, %v1354
    %v2322 = vsub.f32 %v121, %v1355
    %v2323 = vsub.f32 %v122, %v1356
    %v2324 = vsub.f32 %v123, %v1357
    %v2325 = vsub.f32 %v124, %v1358
    %v2326 = vsub.f32 %v125, %v1359
    %v2327 = vsel %vm2093, %v2210, 0.0
    %v2328 = vsel %vm2094, %v2211, 0.0
    %v2329 = vsel %vm2095, %v2212, 0.0
    %v2330 = vsel %vm2096, %v2213, 0.0
    %v2331 = vsel %vm2097, %v2214, 0.0
    %v2332 = vsel %vm2098, %v2215, 0.0
    %v2333 = vsel %vm2099, %v2216, 0.0
    %v2334 = vsel %vm2100, %v2217, 0.0
    %v2335 = vsel %vm2101, %v2218, 0.0
    %v2336 = vsel %vm2102, %v2219, 0.0
    %v2337 = vsel %vm2103, %v2220, 0.0
    %v2338 = vsel %vm2104, %v2221, 0.0
    %v2339 = vsel %vm2105, %v2222, 0.0
    %v2340 = vsel %vm2106, %v2223, 0.0
    %v2341 = vsel %vm2107, %v2224, 0.0
    %v2342 = vsel %vm2108, %v2225, 0.0
    %v2343 = vsel %vm2109, %v2226, 0.0
    %v2344 = vsel %vm2110, %v2227, 0.0
    %v2345 = vsel %vm2111, %v2228, 0.0
    %v2346 = vsel %vm2112, %v2229, 0.0
    %v2347 = vsel %vm2113, %v2230, 0.0
    %v2348 = vsel %vm2114, %v2231, 0.0
    %v2349 = vsel %vm2115, %v2232, 0.0
    %v2350 = vsel %vm2116, %v2233, 0.0
    %v2351 = vsel %vm2117, %v2234, 0.0
    %v2352 = vsel %vm2118, %v2235, 0.0
    %v2353 = vsel %vm2119, %v2236, 0.0
    %v2354 = vsel %vm2120, %v2237, 0.0
    %v2355 = vsel %vm2121, %v2238, 0.0
    %v2356 = vsel %vm2122, %v2239, 0.0
    %v2357 = vsel %vm2123, %v2240, 0.0
    %v2358 = vsel %vm2124, %v2241, 0.0
    %v2359 = vsel %vm2125, %v2242, 0.0
    %v2360 = vsel %vm2126, %v2243, 0.0
    %v2361 = vsel %vm2127, %v2244, 0.0
    %v2362 = vsel %vm2128, %v2245, 0.0
    %v2363 = vsel %vm2129, %v2246, 0.0
    %v2364 = vsel %vm2130, %v2247, 0.0
    %v2365 = vsel %vm2131, %v2248, 0.0
    %v2366 = vsel %vm2132, %v2249, 0.0
    %v2367 = vsel %vm2133, %v2250, 0.0
    %v2368 = vsel %vm2134, %v2251, 0.0
    %v2369 = vsel %vm2135, %v2252, 0.0
    %v2370 = vsel %vm2136, %v2253, 0.0
    %v2371 = vsel %vm2137, %v2254, 0.0
    %v2372 = vsel %vm2138, %v2255, 0.0
    %v2373 = vsel %vm2139, %v2256, 0.0
    %v2374 = vsel %vm2140, %v2257, 0.0
    %v2375 = vsel %vm2141, %v2258, 0.0
    %v2376 = vsel %vm2142, %v2259, 0.0
    %v2377 = vsel %vm2143, %v2260, 0.0
    %v2378 = vsel %vm2144, %v2261, 0.0
    %v2379 = vsel %vm2145, %v2262, 0.0
    %v2380 = vsel %vm2146, %v2263, 0.0
    %v2381 = vsel %vm2147, %v2264, 0.0
    %v2382 = vsel %vm2148, %v2265, 0.0
    %v2383 = vsel %vm2149, %v2266, 0.0
    %v2384 = vsel %vm2150, %v2267, 0.0
    %v2385 = vsel %vm2151, %v2268, 0.0
    %v2386 = vsel %vm2152, %v2269, 0.0
    %v2387 = vsel %vm2153, %v2270, 0.0
    %v2388 = vsel %vm2154, %v2271, 0.0
    %v2389 = vsel %vm2155, %v2272, 0.0
    %v2390 = vsel %vm2156, %v2273, 0.0
    %v2391 = vsel %vm2157, %v2274, 0.0
    %v2392 = vsel %vm2158, %v2275, 0.0
    %v2393 = vsel %vm2159, %v2276, 0.0
    %v2394 = vsel %vm2160, %v2277, 0.0
    %v2395 = vsel %vm2161, %v2278, 0.0
    %v2396 = vsel %vm2162, %v2279, 0.0
    %v2397 = vsel %vm2163, %v2280, 0.0
    %v2398 = vsel %vm2164, %v2281, 0.0
    %v2399 = vsel %vm2165, %v2282, 0.0
    %v2400 = vsel %vm2166, %v2283, 0.0
    %v2401 = vsel %vm2167, %v2284, 0.0
    %v2402 = vsel %vm2168, %v2285, 0.0
    %v2403 = vsel %vm2169, %v2286, 0.0
    %v2404 = vsel %vm2170, %v2287, 0.0
    %v2405 = vsel %vm2171, %v2288, 0.0
    %v2406 = vsel %vm2172, %v2289, 0.0
    %v2407 = vsel %vm2173, %v2290, 0.0
    %v2408 = vsel %vm2174, %v2291, 0.0
    %v2409 = vsel %vm2175, %v2292, 0.0
    %v2410 = vsel %vm2176, %v2293, 0.0
    %v2411 = vsel %vm2177, %v2294, 0.0
    %v2412 = vsel %vm2178, %v2295, 0.0
    %v2413 = vsel %vm2179, %v2296, 0.0
    %v2414 = vsel %vm2180, %v2297, 0.0
    %v2415 = vsel %vm2181, %v2298, 0.0
    %v2416 = vsel %vm2182, %v2299, 0.0
    %v2417 = vsel %vm2183, %v2300, 0.0
    %v2418 = vsel %vm2184, %v2301, 0.0
    %v2419 = vsel %vm2185, %v2302, 0.0
    %v2420 = vsel %vm2186, %v2303, 0.0
    %v2421 = vsel %vm2187, %v2304, 0.0
    %v2422 = vsel %vm2188, %v2305, 0.0
    %v2423 = vsel %vm2189, %v2306, 0.0
    %v2424 = vsel %vm2190, %v2307, 0.0
    %v2425 = vsel %vm2191, %v2308, 0.0
    %v2426 = vsel %vm2192, %v2309, 0.0
    %v2427 = vsel %vm2193, %v2310, 0.0
    %v2428 = vsel %vm2194, %v2311, 0.0
    %v2429 = vsel %vm2195, %v2312, 0.0
    %v2430 = vsel %vm2196, %v2313, 0.0
    %v2431 = vsel %vm2197, %v2314, 0.0
    %v2432 = vsel %vm2198, %v2315, 0.0
    %v2433 = vsel %vm2199, %v2316, 0.0
    %v2434 = vsel %vm2200, %v2317, 0.0
    %v2435 = vsel %vm2201, %v2318, 0.0
    %v2436 = vsel %vm2202, %v2319, 0.0
    %v2437 = vsel %vm2203, %v2320, 0.0
    %v2438 = vsel %vm2204, %v2321, 0.0
    %v2439 = vsel %vm2205, %v2322, 0.0
    %v2440 = vsel %vm2206, %v2323, 0.0
    %v2441 = vsel %vm2207, %v2324, 0.0
    %v2442 = vsel %vm2208, %v2325, 0.0
    %v2443 = vsel %vm2209, %v2326, 0.0
    %vm2444 = vcmp.eq.s32.totalorder %v195, 0
    %vm2445 = vcmp.eq.s32.totalorder %v196, 0
    %vm2446 = vcmp.eq.s32.totalorder %v197, 0
    %vm2447 = vcmp.eq.s32.totalorder %v198, 0
    %vm2448 = vcmp.eq.s32.totalorder %v199, 0
    %vm2449 = vcmp.eq.s32.totalorder %v200, 0
    %vm2450 = vcmp.eq.s32.totalorder %v201, 0
    %vm2451 = vcmp.eq.s32.totalorder %v202, 0
    %vm2452 = vcmp.eq.s32.totalorder %v203, 0
    %vm2453 = vcmp.eq.s32.totalorder %v195, 31
    %vm2454 = vcmp.eq.s32.totalorder %v196, 31
    %vm2455 = vcmp.eq.s32.totalorder %v197, 31
    %vm2456 = vcmp.eq.s32.totalorder %v198, 31
    %vm2457 = vcmp.eq.s32.totalorder %v199, 31
    %vm2458 = vcmp.eq.s32.totalorder %v200, 31
    %vm2459 = vcmp.eq.s32.totalorder %v201, 31
    %vm2460 = vcmp.eq.s32.totalorder %v202, 31
    %vm2461 = vcmp.eq.s32.totalorder %v203, 31
    %vm2462 = vmor %vm2444, %vm2453
    %vm2463 = vmor %vm2445, %vm2454
    %vm2464 = vmor %vm2446, %vm2455
    %vm2465 = vmor %vm2447, %vm2456
    %vm2466 = vmor %vm2448, %vm2457
    %vm2467 = vmor %vm2449, %vm2458
    %vm2468 = vmor %vm2450, %vm2459
    %vm2469 = vmor %vm2451, %vm2460
    %vm2470 = vmor %vm2452, %vm2461
    %v2471 = vsel %vm2462, 2.0, 1.0
    %v2472 = vsel %vm2463, 2.0, 1.0
    %v2473 = vsel %vm2464, 2.0, 1.0
    %v2474 = vsel %vm2465, 2.0, 1.0
    %v2475 = vsel %vm2466, 2.0, 1.0
    %v2476 = vsel %vm2467, 2.0, 1.0
    %v2477 = vsel %vm2468, 2.0, 1.0
    %v2478 = vsel %vm2469, 2.0, 1.0
    %v2479 = vsel %vm2470, 2.0, 1.0
    %vm2480 = vcmp.eq.s32.totalorder %v177, 0
    %vm2481 = vcmp.eq.s32.totalorder %v178, 0
    %vm2482 = vcmp.eq.s32.totalorder %v179, 0
    %vm2483 = vcmp.eq.s32.totalorder %v180, 0
    %vm2484 = vcmp.eq.s32.totalorder %v181, 0
    %vm2485 = vcmp.eq.s32.totalorder %v182, 0
    %vm2486 = vcmp.eq.s32.totalorder %v183, 0
    %vm2487 = vcmp.eq.s32.totalorder %v184, 0
    %vm2488 = vcmp.eq.s32.totalorder %v185, 0
    %vm2489 = vcmp.eq.s32.totalorder %v177, 31
    %vm2490 = vcmp.eq.s32.totalorder %v178, 31
    %vm2491 = vcmp.eq.s32.totalorder %v179, 31
    %vm2492 = vcmp.eq.s32.totalorder %v180, 31
    %vm2493 = vcmp.eq.s32.totalorder %v181, 31
    %vm2494 = vcmp.eq.s32.totalorder %v182, 31
    %vm2495 = vcmp.eq.s32.totalorder %v183, 31
    %vm2496 = vcmp.eq.s32.totalorder %v184, 31
    %vm2497 = vcmp.eq.s32.totalorder %v185, 31
    %vm2498 = vmor %vm2480, %vm2489
    %vm2499 = vmor %vm2481, %vm2490
    %vm2500 = vmor %vm2482, %vm2491
    %vm2501 = vmor %vm2483, %vm2492
    %vm2502 = vmor %vm2484, %vm2493
    %vm2503 = vmor %vm2485, %vm2494
    %vm2504 = vmor %vm2486, %vm2495
    %vm2505 = vmor %vm2487, %vm2496
    %vm2506 = vmor %vm2488, %vm2497
    %v2507 = vsel %vm2498, 2.0, 1.0
    %v2508 = vsel %vm2499, 2.0, 1.0
    %v2509 = vsel %vm2500, 2.0, 1.0
    %v2510 = vsel %vm2501, 2.0, 1.0
    %v2511 = vsel %vm2502, 2.0, 1.0
    %v2512 = vsel %vm2503, 2.0, 1.0
    %v2513 = vsel %vm2504, 2.0, 1.0
    %v2514 = vsel %vm2505, 2.0, 1.0
    %v2515 = vsel %vm2506, 2.0, 1.0
    %vm2516 = vcmp.eq.s32.totalorder %v269, 0
    %vm2517 = vcmp.eq.s32.totalorder %v270, 0
    %vm2518 = vcmp.eq.s32.totalorder %v271, 0
    %vm2519 = vcmp.eq.s32.totalorder %v272, 0
    %vm2520 = vcmp.eq.s32.totalorder %v273, 0
    %vm2521 = vcmp.eq.s32.totalorder %v274, 0
    %vm2522 = vcmp.eq.s32.totalorder %v275, 0
    %vm2523 = vcmp.eq.s32.totalorder %v276, 0
    %vm2524 = vcmp.eq.s32.totalorder %v277, 0
    %vm2525 = vcmp.eq.s32.totalorder %v278, 0
    %vm2526 = vcmp.eq.s32.totalorder %v279, 0
    %vm2527 = vcmp.eq.s32.totalorder %v280, 0
    %vm2528 = vcmp.eq.s32.totalorder %v281, 0
    %vm2529 = vcmp.eq.s32.totalorder %v269, 31
    %vm2530 = vcmp.eq.s32.totalorder %v270, 31
    %vm2531 = vcmp.eq.s32.totalorder %v271, 31
    %vm2532 = vcmp.eq.s32.totalorder %v272, 31
    %vm2533 = vcmp.eq.s32.totalorder %v273, 31
    %vm2534 = vcmp.eq.s32.totalorder %v274, 31
    %vm2535 = vcmp.eq.s32.totalorder %v275, 31
    %vm2536 = vcmp.eq.s32.totalorder %v276, 31
    %vm2537 = vcmp.eq.s32.totalorder %v277, 31
    %vm2538 = vcmp.eq.s32.totalorder %v278, 31
    %vm2539 = vcmp.eq.s32.totalorder %v279, 31
    %vm2540 = vcmp.eq.s32.totalorder %v280, 31
    %vm2541 = vcmp.eq.s32.totalorder %v281, 31
    %vm2542 = vmor %vm2516, %vm2529
    %vm2543 = vmor %vm2517, %vm2530
    %vm2544 = vmor %vm2518, %vm2531
    %vm2545 = vmor %vm2519, %vm2532
    %vm2546 = vmor %vm2520, %vm2533
    %vm2547 = vmor %vm2521, %vm2534
    %vm2548 = vmor %vm2522, %vm2535
    %vm2549 = vmor %vm2523, %vm2536
    %vm2550 = vmor %vm2524, %vm2537
    %vm2551 = vmor %vm2525, %vm2538
    %vm2552 = vmor %vm2526, %vm2539
    %vm2553 = vmor %vm2527, %vm2540
    %vm2554 = vmor %vm2528, %vm2541
    %v2555 = vsel %vm2542, 2.0, 1.0
    %v2556 = vsel %vm2543, 2.0, 1.0
    %v2557 = vsel %vm2544, 2.0, 1.0
    %v2558 = vsel %vm2545, 2.0, 1.0
    %v2559 = vsel %vm2546, 2.0, 1.0
    %v2560 = vsel %vm2547, 2.0, 1.0
    %v2561 = vsel %vm2548, 2.0, 1.0
    %v2562 = vsel %vm2549, 2.0, 1.0
    %v2563 = vsel %vm2550, 2.0, 1.0
    %v2564 = vsel %vm2551, 2.0, 1.0
    %v2565 = vsel %vm2552, 2.0, 1.0
    %v2566 = vsel %vm2553, 2.0, 1.0
    %v2567 = vsel %vm2554, 2.0, 1.0
    %v2568 = vmul.f32 %v1603, %v1603
    %v2569 = vmul.f32 %v1604, %v1604
    %v2570 = vmul.f32 %v1605, %v1605
    %v2571 = vmul.f32 %v1606, %v1606
    %v2572 = vmul.f32 %v1607, %v1607
    %v2573 = vmul.f32 %v1608, %v1608
    %v2574 = vmul.f32 %v1609, %v1609
    %v2575 = vmul.f32 %v1610, %v1610
    %v2576 = vmul.f32 %v1611, %v1611
    %v2577 = vmul.f32 %v1612, %v1612
    %v2578 = vmul.f32 %v1613, %v1613
    %v2579 = vmul.f32 %v1614, %v1614
    %v2580 = vmul.f32 %v1615, %v1615
    %v2581 = vmul.f32 %v1616, %v1616
    %v2582 = vmul.f32 %v1617, %v1617
    %v2583 = vmul.f32 %v1618, %v1618
    %v2584 = vmul.f32 %v1619, %v1619
    %v2585 = vmul.f32 %v1620, %v1620
    %v2586 = vmul.f32 %v1621, %v1621
    %v2587 = vmul.f32 %v1622, %v1622
    %v2588 = vmul.f32 %v1623, %v1623
    %v2589 = vmul.f32 %v1624, %v1624
    %v2590 = vmul.f32 %v1625, %v1625
    %v2591 = vmul.f32 %v1626, %v1626
    %v2592 = vmul.f32 %v1627, %v1627
    %v2593 = vmul.f32 %v1628, %v1628
    %v2594 = vmul.f32 %v1629, %v1629
    %v2595 = vmul.f32 %v1630, %v1630
    %v2596 = vmul.f32 %v1631, %v1631
    %v2597 = vmul.f32 %v1632, %v1632
    %v2598 = vmul.f32 %v1633, %v1633
    %v2599 = vmul.f32 %v1634, %v1634
    %v2600 = vmul.f32 %v1635, %v1635
    %v2601 = vmul.f32 %v1636, %v1636
    %v2602 = vmul.f32 %v1637, %v1637
    %v2603 = vmul.f32 %v1638, %v1638
    %v2604 = vmul.f32 %v1639, %v1639
    %v2605 = vmul.f32 %v1640, %v1640
    %v2606 = vmul.f32 %v1641, %v1641
    %v2607 = vmul.f32 %v1642, %v1642
    %v2608 = vmul.f32 %v1643, %v1643
    %v2609 = vmul.f32 %v1644, %v1644
    %v2610 = vmul.f32 %v1645, %v1645
    %v2611 = vmul.f32 %v1646, %v1646
    %v2612 = vmul.f32 %v1647, %v1647
    %v2613 = vmul.f32 %v1648, %v1648
    %v2614 = vmul.f32 %v1649, %v1649
    %v2615 = vmul.f32 %v1650, %v1650
    %v2616 = vmul.f32 %v1651, %v1651
    %v2617 = vmul.f32 %v1652, %v1652
    %v2618 = vmul.f32 %v1653, %v1653
    %v2619 = vmul.f32 %v1654, %v1654
    %v2620 = vmul.f32 %v1655, %v1655
    %v2621 = vmul.f32 %v1656, %v1656
    %v2622 = vmul.f32 %v1657, %v1657
    %v2623 = vmul.f32 %v1658, %v1658
    %v2624 = vmul.f32 %v1659, %v1659
    %v2625 = vmul.f32 %v1660, %v1660
    %v2626 = vmul.f32 %v1661, %v1661
    %v2627 = vmul.f32 %v1662, %v1662
    %v2628 = vmul.f32 %v1663, %v1663
    %v2629 = vmul.f32 %v1664, %v1664
    %v2630 = vmul.f32 %v1665, %v1665
    %v2631 = vmul.f32 %v1666, %v1666
    %v2632 = vmul.f32 %v1667, %v1667
    %v2633 = vmul.f32 %v1668, %v1668
    %v2634 = vmul.f32 %v1669, %v1669
    %v2635 = vmul.f32 %v1670, %v1670
    %v2636 = vmul.f32 %v1671, %v1671
    %v2637 = vmul.f32 %v1672, %v1672
    %v2638 = vmul.f32 %v1673, %v1673
    %v2639 = vmul.f32 %v1674, %v1674
    %v2640 = vmul.f32 %v1675, %v1675
    %v2641 = vmul.f32 %v1676, %v1676
    %v2642 = vmul.f32 %v1677, %v1677
    %v2643 = vmul.f32 %v1678, %v1678
    %v2644 = vmul.f32 %v1679, %v1679
    %v2645 = vmul.f32 %v1680, %v1680
    %v2646 = vmul.f32 %v1681, %v1681
    %v2647 = vmul.f32 %v1682, %v1682
    %v2648 = vmul.f32 %v1683, %v1683
    %v2649 = vmul.f32 %v1684, %v1684
    %v2650 = vmul.f32 %v1685, %v1685
    %v2651 = vmul.f32 %v1686, %v1686
    %v2652 = vmul.f32 %v1687, %v1687
    %v2653 = vmul.f32 %v1688, %v1688
    %v2654 = vmul.f32 %v1689, %v1689
    %v2655 = vmul.f32 %v1690, %v1690
    %v2656 = vmul.f32 %v1691, %v1691
    %v2657 = vmul.f32 %v1692, %v1692
    %v2658 = vmul.f32 %v1693, %v1693
    %v2659 = vmul.f32 %v1694, %v1694
    %v2660 = vmul.f32 %v1695, %v1695
    %v2661 = vmul.f32 %v1696, %v1696
    %v2662 = vmul.f32 %v1697, %v1697
    %v2663 = vmul.f32 %v1698, %v1698
    %v2664 = vmul.f32 %v1699, %v1699
    %v2665 = vmul.f32 %v1700, %v1700
    %v2666 = vmul.f32 %v1701, %v1701
    %v2667 = vmul.f32 %v1702, %v1702
    %v2668 = vmul.f32 %v1703, %v1703
    %v2669 = vmul.f32 %v1704, %v1704
    %v2670 = vmul.f32 %v1705, %v1705
    %v2671 = vmul.f32 %v1706, %v1706
    %v2672 = vmul.f32 %v1707, %v1707
    %v2673 = vmul.f32 %v1708, %v1708
    %v2674 = vmul.f32 %v1709, %v1709
    %v2675 = vmul.f32 %v1710, %v1710
    %v2676 = vmul.f32 %v1711, %v1711
    %v2677 = vmul.f32 %v1712, %v1712
    %v2678 = vmul.f32 %v1713, %v1713
    %v2679 = vmul.f32 %v1714, %v1714
    %v2680 = vmul.f32 %v1715, %v1715
    %v2681 = vmul.f32 %v1716, %v1716
    %v2682 = vmul.f32 %v1717, %v1717
    %v2683 = vmul.f32 %v1718, %v1718
    %v2684 = vmul.f32 %v1719, %v1719
    %v2685 = vmul.f32 %v2568, %v2471
    %v2686 = vmul.f32 %v2569, %v2472
    %v2687 = vmul.f32 %v2570, %v2473
    %v2688 = vmul.f32 %v2571, %v2474
    %v2689 = vmul.f32 %v2572, %v2475
    %v2690 = vmul.f32 %v2573, %v2476
    %v2691 = vmul.f32 %v2574, %v2477
    %v2692 = vmul.f32 %v2575, %v2478
    %v2693 = vmul.f32 %v2576, %v2479
    %v2694 = vmul.f32 %v2577, %v2471
    %v2695 = vmul.f32 %v2578, %v2472
    %v2696 = vmul.f32 %v2579, %v2473
    %v2697 = vmul.f32 %v2580, %v2474
    %v2698 = vmul.f32 %v2581, %v2475
    %v2699 = vmul.f32 %v2582, %v2476
    %v2700 = vmul.f32 %v2583, %v2477
    %v2701 = vmul.f32 %v2584, %v2478
    %v2702 = vmul.f32 %v2585, %v2479
    %v2703 = vmul.f32 %v2586, %v2471
    %v2704 = vmul.f32 %v2587, %v2472
    %v2705 = vmul.f32 %v2588, %v2473
    %v2706 = vmul.f32 %v2589, %v2474
    %v2707 = vmul.f32 %v2590, %v2475
    %v2708 = vmul.f32 %v2591, %v2476
    %v2709 = vmul.f32 %v2592, %v2477
    %v2710 = vmul.f32 %v2593, %v2478
    %v2711 = vmul.f32 %v2594, %v2479
    %v2712 = vmul.f32 %v2595, %v2471
    %v2713 = vmul.f32 %v2596, %v2472
    %v2714 = vmul.f32 %v2597, %v2473
    %v2715 = vmul.f32 %v2598, %v2474
    %v2716 = vmul.f32 %v2599, %v2475
    %v2717 = vmul.f32 %v2600, %v2476
    %v2718 = vmul.f32 %v2601, %v2477
    %v2719 = vmul.f32 %v2602, %v2478
    %v2720 = vmul.f32 %v2603, %v2479
    %v2721 = vmul.f32 %v2604, %v2471
    %v2722 = vmul.f32 %v2605, %v2472
    %v2723 = vmul.f32 %v2606, %v2473
    %v2724 = vmul.f32 %v2607, %v2474
    %v2725 = vmul.f32 %v2608, %v2475
    %v2726 = vmul.f32 %v2609, %v2476
    %v2727 = vmul.f32 %v2610, %v2477
    %v2728 = vmul.f32 %v2611, %v2478
    %v2729 = vmul.f32 %v2612, %v2479
    %v2730 = vmul.f32 %v2613, %v2471
    %v2731 = vmul.f32 %v2614, %v2472
    %v2732 = vmul.f32 %v2615, %v2473
    %v2733 = vmul.f32 %v2616, %v2474
    %v2734 = vmul.f32 %v2617, %v2475
    %v2735 = vmul.f32 %v2618, %v2476
    %v2736 = vmul.f32 %v2619, %v2477
    %v2737 = vmul.f32 %v2620, %v2478
    %v2738 = vmul.f32 %v2621, %v2479
    %v2739 = vmul.f32 %v2622, %v2471
    %v2740 = vmul.f32 %v2623, %v2472
    %v2741 = vmul.f32 %v2624, %v2473
    %v2742 = vmul.f32 %v2625, %v2474
    %v2743 = vmul.f32 %v2626, %v2475
    %v2744 = vmul.f32 %v2627, %v2476
    %v2745 = vmul.f32 %v2628, %v2477
    %v2746 = vmul.f32 %v2629, %v2478
    %v2747 = vmul.f32 %v2630, %v2479
    %v2748 = vmul.f32 %v2631, %v2471
    %v2749 = vmul.f32 %v2632, %v2472
    %v2750 = vmul.f32 %v2633, %v2473
    %v2751 = vmul.f32 %v2634, %v2474
    %v2752 = vmul.f32 %v2635, %v2475
    %v2753 = vmul.f32 %v2636, %v2476
    %v2754 = vmul.f32 %v2637, %v2477
    %v2755 = vmul.f32 %v2638, %v2478
    %v2756 = vmul.f32 %v2639, %v2479
    %v2757 = vmul.f32 %v2640, %v2471
    %v2758 = vmul.f32 %v2641, %v2472
    %v2759 = vmul.f32 %v2642, %v2473
    %v2760 = vmul.f32 %v2643, %v2474
    %v2761 = vmul.f32 %v2644, %v2475
    %v2762 = vmul.f32 %v2645, %v2476
    %v2763 = vmul.f32 %v2646, %v2477
    %v2764 = vmul.f32 %v2647, %v2478
    %v2765 = vmul.f32 %v2648, %v2479
    %v2766 = vmul.f32 %v2649, %v2471
    %v2767 = vmul.f32 %v2650, %v2472
    %v2768 = vmul.f32 %v2651, %v2473
    %v2769 = vmul.f32 %v2652, %v2474
    %v2770 = vmul.f32 %v2653, %v2475
    %v2771 = vmul.f32 %v2654, %v2476
    %v2772 = vmul.f32 %v2655, %v2477
    %v2773 = vmul.f32 %v2656, %v2478
    %v2774 = vmul.f32 %v2657, %v2479
    %v2775 = vmul.f32 %v2658, %v2471
    %v2776 = vmul.f32 %v2659, %v2472
    %v2777 = vmul.f32 %v2660, %v2473
    %v2778 = vmul.f32 %v2661, %v2474
    %v2779 = vmul.f32 %v2662, %v2475
    %v2780 = vmul.f32 %v2663, %v2476
    %v2781 = vmul.f32 %v2664, %v2477
    %v2782 = vmul.f32 %v2665, %v2478
    %v2783 = vmul.f32 %v2666, %v2479
    %v2784 = vmul.f32 %v2667, %v2471
    %v2785 = vmul.f32 %v2668, %v2472
    %v2786 = vmul.f32 %v2669, %v2473
    %v2787 = vmul.f32 %v2670, %v2474
    %v2788 = vmul.f32 %v2671, %v2475
    %v2789 = vmul.f32 %v2672, %v2476
    %v2790 = vmul.f32 %v2673, %v2477
    %v2791 = vmul.f32 %v2674, %v2478
    %v2792 = vmul.f32 %v2675, %v2479
    %v2793 = vmul.f32 %v2676, %v2471
    %v2794 = vmul.f32 %v2677, %v2472
    %v2795 = vmul.f32 %v2678, %v2473
    %v2796 = vmul.f32 %v2679, %v2474
    %v2797 = vmul.f32 %v2680, %v2475
    %v2798 = vmul.f32 %v2681, %v2476
    %v2799 = vmul.f32 %v2682, %v2477
    %v2800 = vmul.f32 %v2683, %v2478
    %v2801 = vmul.f32 %v2684, %v2479
    %v2802 = vmul.f32 %v1963, %v1963
    %v2803 = vmul.f32 %v1964, %v1964
    %v2804 = vmul.f32 %v1965, %v1965
    %v2805 = vmul.f32 %v1966, %v1966
    %v2806 = vmul.f32 %v1967, %v1967
    %v2807 = vmul.f32 %v1968, %v1968
    %v2808 = vmul.f32 %v1969, %v1969
    %v2809 = vmul.f32 %v1970, %v1970
    %v2810 = vmul.f32 %v1971, %v1971
    %v2811 = vmul.f32 %v1972, %v1972
    %v2812 = vmul.f32 %v1973, %v1973
    %v2813 = vmul.f32 %v1974, %v1974
    %v2814 = vmul.f32 %v1975, %v1975
    %v2815 = vmul.f32 %v1976, %v1976
    %v2816 = vmul.f32 %v1977, %v1977
    %v2817 = vmul.f32 %v1978, %v1978
    %v2818 = vmul.f32 %v1979, %v1979
    %v2819 = vmul.f32 %v1980, %v1980
    %v2820 = vmul.f32 %v1981, %v1981
    %v2821 = vmul.f32 %v1982, %v1982
    %v2822 = vmul.f32 %v1983, %v1983
    %v2823 = vmul.f32 %v1984, %v1984
    %v2824 = vmul.f32 %v1985, %v1985
    %v2825 = vmul.f32 %v1986, %v1986
    %v2826 = vmul.f32 %v1987, %v1987
    %v2827 = vmul.f32 %v1988, %v1988
    %v2828 = vmul.f32 %v1989, %v1989
    %v2829 = vmul.f32 %v1990, %v1990
    %v2830 = vmul.f32 %v1991, %v1991
    %v2831 = vmul.f32 %v1992, %v1992
    %v2832 = vmul.f32 %v1993, %v1993
    %v2833 = vmul.f32 %v1994, %v1994
    %v2834 = vmul.f32 %v1995, %v1995
    %v2835 = vmul.f32 %v1996, %v1996
    %v2836 = vmul.f32 %v1997, %v1997
    %v2837 = vmul.f32 %v1998, %v1998
    %v2838 = vmul.f32 %v1999, %v1999
    %v2839 = vmul.f32 %v2000, %v2000
    %v2840 = vmul.f32 %v2001, %v2001
    %v2841 = vmul.f32 %v2002, %v2002
    %v2842 = vmul.f32 %v2003, %v2003
    %v2843 = vmul.f32 %v2004, %v2004
    %v2844 = vmul.f32 %v2005, %v2005
    %v2845 = vmul.f32 %v2006, %v2006
    %v2846 = vmul.f32 %v2007, %v2007
    %v2847 = vmul.f32 %v2008, %v2008
    %v2848 = vmul.f32 %v2009, %v2009
    %v2849 = vmul.f32 %v2010, %v2010
    %v2850 = vmul.f32 %v2011, %v2011
    %v2851 = vmul.f32 %v2012, %v2012
    %v2852 = vmul.f32 %v2013, %v2013
    %v2853 = vmul.f32 %v2014, %v2014
    %v2854 = vmul.f32 %v2015, %v2015
    %v2855 = vmul.f32 %v2016, %v2016
    %v2856 = vmul.f32 %v2017, %v2017
    %v2857 = vmul.f32 %v2018, %v2018
    %v2858 = vmul.f32 %v2019, %v2019
    %v2859 = vmul.f32 %v2020, %v2020
    %v2860 = vmul.f32 %v2021, %v2021
    %v2861 = vmul.f32 %v2022, %v2022
    %v2862 = vmul.f32 %v2023, %v2023
    %v2863 = vmul.f32 %v2024, %v2024
    %v2864 = vmul.f32 %v2025, %v2025
    %v2865 = vmul.f32 %v2026, %v2026
    %v2866 = vmul.f32 %v2027, %v2027
    %v2867 = vmul.f32 %v2028, %v2028
    %v2868 = vmul.f32 %v2029, %v2029
    %v2869 = vmul.f32 %v2030, %v2030
    %v2870 = vmul.f32 %v2031, %v2031
    %v2871 = vmul.f32 %v2032, %v2032
    %v2872 = vmul.f32 %v2033, %v2033
    %v2873 = vmul.f32 %v2034, %v2034
    %v2874 = vmul.f32 %v2035, %v2035
    %v2875 = vmul.f32 %v2036, %v2036
    %v2876 = vmul.f32 %v2037, %v2037
    %v2877 = vmul.f32 %v2038, %v2038
    %v2878 = vmul.f32 %v2039, %v2039
    %v2879 = vmul.f32 %v2040, %v2040
    %v2880 = vmul.f32 %v2041, %v2041
    %v2881 = vmul.f32 %v2042, %v2042
    %v2882 = vmul.f32 %v2043, %v2043
    %v2883 = vmul.f32 %v2044, %v2044
    %v2884 = vmul.f32 %v2045, %v2045
    %v2885 = vmul.f32 %v2046, %v2046
    %v2886 = vmul.f32 %v2047, %v2047
    %v2887 = vmul.f32 %v2048, %v2048
    %v2888 = vmul.f32 %v2049, %v2049
    %v2889 = vmul.f32 %v2050, %v2050
    %v2890 = vmul.f32 %v2051, %v2051
    %v2891 = vmul.f32 %v2052, %v2052
    %v2892 = vmul.f32 %v2053, %v2053
    %v2893 = vmul.f32 %v2054, %v2054
    %v2894 = vmul.f32 %v2055, %v2055
    %v2895 = vmul.f32 %v2056, %v2056
    %v2896 = vmul.f32 %v2057, %v2057
    %v2897 = vmul.f32 %v2058, %v2058
    %v2898 = vmul.f32 %v2059, %v2059
    %v2899 = vmul.f32 %v2060, %v2060
    %v2900 = vmul.f32 %v2061, %v2061
    %v2901 = vmul.f32 %v2062, %v2062
    %v2902 = vmul.f32 %v2063, %v2063
    %v2903 = vmul.f32 %v2064, %v2064
    %v2904 = vmul.f32 %v2065, %v2065
    %v2905 = vmul.f32 %v2066, %v2066
    %v2906 = vmul.f32 %v2067, %v2067
    %v2907 = vmul.f32 %v2068, %v2068
    %v2908 = vmul.f32 %v2069, %v2069
    %v2909 = vmul.f32 %v2070, %v2070
    %v2910 = vmul.f32 %v2071, %v2071
    %v2911 = vmul.f32 %v2072, %v2072
    %v2912 = vmul.f32 %v2073, %v2073
    %v2913 = vmul.f32 %v2074, %v2074
    %v2914 = vmul.f32 %v2075, %v2075
    %v2915 = vmul.f32 %v2076, %v2076
    %v2916 = vmul.f32 %v2077, %v2077
    %v2917 = vmul.f32 %v2078, %v2078
    %v2918 = vmul.f32 %v2079, %v2079
    %v2919 = vmul.f32 %v2802, %v2507
    %v2920 = vmul.f32 %v2803, %v2508
    %v2921 = vmul.f32 %v2804, %v2509
    %v2922 = vmul.f32 %v2805, %v2510
    %v2923 = vmul.f32 %v2806, %v2511
    %v2924 = vmul.f32 %v2807, %v2512
    %v2925 = vmul.f32 %v2808, %v2513
    %v2926 = vmul.f32 %v2809, %v2514
    %v2927 = vmul.f32 %v2810, %v2515
    %v2928 = vmul.f32 %v2811, %v2507
    %v2929 = vmul.f32 %v2812, %v2508
    %v2930 = vmul.f32 %v2813, %v2509
    %v2931 = vmul.f32 %v2814, %v2510
    %v2932 = vmul.f32 %v2815, %v2511
    %v2933 = vmul.f32 %v2816, %v2512
    %v2934 = vmul.f32 %v2817, %v2513
    %v2935 = vmul.f32 %v2818, %v2514
    %v2936 = vmul.f32 %v2819, %v2515
    %v2937 = vmul.f32 %v2820, %v2507
    %v2938 = vmul.f32 %v2821, %v2508
    %v2939 = vmul.f32 %v2822, %v2509
    %v2940 = vmul.f32 %v2823, %v2510
    %v2941 = vmul.f32 %v2824, %v2511
    %v2942 = vmul.f32 %v2825, %v2512
    %v2943 = vmul.f32 %v2826, %v2513
    %v2944 = vmul.f32 %v2827, %v2514
    %v2945 = vmul.f32 %v2828, %v2515
    %v2946 = vmul.f32 %v2829, %v2507
    %v2947 = vmul.f32 %v2830, %v2508
    %v2948 = vmul.f32 %v2831, %v2509
    %v2949 = vmul.f32 %v2832, %v2510
    %v2950 = vmul.f32 %v2833, %v2511
    %v2951 = vmul.f32 %v2834, %v2512
    %v2952 = vmul.f32 %v2835, %v2513
    %v2953 = vmul.f32 %v2836, %v2514
    %v2954 = vmul.f32 %v2837, %v2515
    %v2955 = vmul.f32 %v2838, %v2507
    %v2956 = vmul.f32 %v2839, %v2508
    %v2957 = vmul.f32 %v2840, %v2509
    %v2958 = vmul.f32 %v2841, %v2510
    %v2959 = vmul.f32 %v2842, %v2511
    %v2960 = vmul.f32 %v2843, %v2512
    %v2961 = vmul.f32 %v2844, %v2513
    %v2962 = vmul.f32 %v2845, %v2514
    %v2963 = vmul.f32 %v2846, %v2515
    %v2964 = vmul.f32 %v2847, %v2507
    %v2965 = vmul.f32 %v2848, %v2508
    %v2966 = vmul.f32 %v2849, %v2509
    %v2967 = vmul.f32 %v2850, %v2510
    %v2968 = vmul.f32 %v2851, %v2511
    %v2969 = vmul.f32 %v2852, %v2512
    %v2970 = vmul.f32 %v2853, %v2513
    %v2971 = vmul.f32 %v2854, %v2514
    %v2972 = vmul.f32 %v2855, %v2515
    %v2973 = vmul.f32 %v2856, %v2507
    %v2974 = vmul.f32 %v2857, %v2508
    %v2975 = vmul.f32 %v2858, %v2509
    %v2976 = vmul.f32 %v2859, %v2510
    %v2977 = vmul.f32 %v2860, %v2511
    %v2978 = vmul.f32 %v2861, %v2512
    %v2979 = vmul.f32 %v2862, %v2513
    %v2980 = vmul.f32 %v2863, %v2514
    %v2981 = vmul.f32 %v2864, %v2515
    %v2982 = vmul.f32 %v2865, %v2507
    %v2983 = vmul.f32 %v2866, %v2508
    %v2984 = vmul.f32 %v2867, %v2509
    %v2985 = vmul.f32 %v2868, %v2510
    %v2986 = vmul.f32 %v2869, %v2511
    %v2987 = vmul.f32 %v2870, %v2512
    %v2988 = vmul.f32 %v2871, %v2513
    %v2989 = vmul.f32 %v2872, %v2514
    %v2990 = vmul.f32 %v2873, %v2515
    %v2991 = vmul.f32 %v2874, %v2507
    %v2992 = vmul.f32 %v2875, %v2508
    %v2993 = vmul.f32 %v2876, %v2509
    %v2994 = vmul.f32 %v2877, %v2510
    %v2995 = vmul.f32 %v2878, %v2511
    %v2996 = vmul.f32 %v2879, %v2512
    %v2997 = vmul.f32 %v2880, %v2513
    %v2998 = vmul.f32 %v2881, %v2514
    %v2999 = vmul.f32 %v2882, %v2515
    %v3000 = vmul.f32 %v2883, %v2507
    %v3001 = vmul.f32 %v2884, %v2508
    %v3002 = vmul.f32 %v2885, %v2509
    %v3003 = vmul.f32 %v2886, %v2510
    %v3004 = vmul.f32 %v2887, %v2511
    %v3005 = vmul.f32 %v2888, %v2512
    %v3006 = vmul.f32 %v2889, %v2513
    %v3007 = vmul.f32 %v2890, %v2514
    %v3008 = vmul.f32 %v2891, %v2515
    %v3009 = vmul.f32 %v2892, %v2507
    %v3010 = vmul.f32 %v2893, %v2508
    %v3011 = vmul.f32 %v2894, %v2509
    %v3012 = vmul.f32 %v2895, %v2510
    %v3013 = vmul.f32 %v2896, %v2511
    %v3014 = vmul.f32 %v2897, %v2512
    %v3015 = vmul.f32 %v2898, %v2513
    %v3016 = vmul.f32 %v2899, %v2514
    %v3017 = vmul.f32 %v2900, %v2515
    %v3018 = vmul.f32 %v2901, %v2507
    %v3019 = vmul.f32 %v2902, %v2508
    %v3020 = vmul.f32 %v2903, %v2509
    %v3021 = vmul.f32 %v2904, %v2510
    %v3022 = vmul.f32 %v2905, %v2511
    %v3023 = vmul.f32 %v2906, %v2512
    %v3024 = vmul.f32 %v2907, %v2513
    %v3025 = vmul.f32 %v2908, %v2514
    %v3026 = vmul.f32 %v2909, %v2515
    %v3027 = vmul.f32 %v2910, %v2507
    %v3028 = vmul.f32 %v2911, %v2508
    %v3029 = vmul.f32 %v2912, %v2509
    %v3030 = vmul.f32 %v2913, %v2510
    %v3031 = vmul.f32 %v2914, %v2511
    %v3032 = vmul.f32 %v2915, %v2512
    %v3033 = vmul.f32 %v2916, %v2513
    %v3034 = vmul.f32 %v2917, %v2514
    %v3035 = vmul.f32 %v2918, %v2515
    %v3036 = vadd.f32 %v2685, %v2919
    %v3037 = vadd.f32 %v2686, %v2920
    %v3038 = vadd.f32 %v2687, %v2921
    %v3039 = vadd.f32 %v2688, %v2922
    %v3040 = vadd.f32 %v2689, %v2923
    %v3041 = vadd.f32 %v2690, %v2924
    %v3042 = vadd.f32 %v2691, %v2925
    %v3043 = vadd.f32 %v2692, %v2926
    %v3044 = vadd.f32 %v2693, %v2927
    %v3045 = vadd.f32 %v2694, %v2928
    %v3046 = vadd.f32 %v2695, %v2929
    %v3047 = vadd.f32 %v2696, %v2930
    %v3048 = vadd.f32 %v2697, %v2931
    %v3049 = vadd.f32 %v2698, %v2932
    %v3050 = vadd.f32 %v2699, %v2933
    %v3051 = vadd.f32 %v2700, %v2934
    %v3052 = vadd.f32 %v2701, %v2935
    %v3053 = vadd.f32 %v2702, %v2936
    %v3054 = vadd.f32 %v2703, %v2937
    %v3055 = vadd.f32 %v2704, %v2938
    %v3056 = vadd.f32 %v2705, %v2939
    %v3057 = vadd.f32 %v2706, %v2940
    %v3058 = vadd.f32 %v2707, %v2941
    %v3059 = vadd.f32 %v2708, %v2942
    %v3060 = vadd.f32 %v2709, %v2943
    %v3061 = vadd.f32 %v2710, %v2944
    %v3062 = vadd.f32 %v2711, %v2945
    %v3063 = vadd.f32 %v2712, %v2946
    %v3064 = vadd.f32 %v2713, %v2947
    %v3065 = vadd.f32 %v2714, %v2948
    %v3066 = vadd.f32 %v2715, %v2949
    %v3067 = vadd.f32 %v2716, %v2950
    %v3068 = vadd.f32 %v2717, %v2951
    %v3069 = vadd.f32 %v2718, %v2952
    %v3070 = vadd.f32 %v2719, %v2953
    %v3071 = vadd.f32 %v2720, %v2954
    %v3072 = vadd.f32 %v2721, %v2955
    %v3073 = vadd.f32 %v2722, %v2956
    %v3074 = vadd.f32 %v2723, %v2957
    %v3075 = vadd.f32 %v2724, %v2958
    %v3076 = vadd.f32 %v2725, %v2959
    %v3077 = vadd.f32 %v2726, %v2960
    %v3078 = vadd.f32 %v2727, %v2961
    %v3079 = vadd.f32 %v2728, %v2962
    %v3080 = vadd.f32 %v2729, %v2963
    %v3081 = vadd.f32 %v2730, %v2964
    %v3082 = vadd.f32 %v2731, %v2965
    %v3083 = vadd.f32 %v2732, %v2966
    %v3084 = vadd.f32 %v2733, %v2967
    %v3085 = vadd.f32 %v2734, %v2968
    %v3086 = vadd.f32 %v2735, %v2969
    %v3087 = vadd.f32 %v2736, %v2970
    %v3088 = vadd.f32 %v2737, %v2971
    %v3089 = vadd.f32 %v2738, %v2972
    %v3090 = vadd.f32 %v2739, %v2973
    %v3091 = vadd.f32 %v2740, %v2974
    %v3092 = vadd.f32 %v2741, %v2975
    %v3093 = vadd.f32 %v2742, %v2976
    %v3094 = vadd.f32 %v2743, %v2977
    %v3095 = vadd.f32 %v2744, %v2978
    %v3096 = vadd.f32 %v2745, %v2979
    %v3097 = vadd.f32 %v2746, %v2980
    %v3098 = vadd.f32 %v2747, %v2981
    %v3099 = vadd.f32 %v2748, %v2982
    %v3100 = vadd.f32 %v2749, %v2983
    %v3101 = vadd.f32 %v2750, %v2984
    %v3102 = vadd.f32 %v2751, %v2985
    %v3103 = vadd.f32 %v2752, %v2986
    %v3104 = vadd.f32 %v2753, %v2987
    %v3105 = vadd.f32 %v2754, %v2988
    %v3106 = vadd.f32 %v2755, %v2989
    %v3107 = vadd.f32 %v2756, %v2990
    %v3108 = vadd.f32 %v2757, %v2991
    %v3109 = vadd.f32 %v2758, %v2992
    %v3110 = vadd.f32 %v2759, %v2993
    %v3111 = vadd.f32 %v2760, %v2994
    %v3112 = vadd.f32 %v2761, %v2995
    %v3113 = vadd.f32 %v2762, %v2996
    %v3114 = vadd.f32 %v2763, %v2997
    %v3115 = vadd.f32 %v2764, %v2998
    %v3116 = vadd.f32 %v2765, %v2999
    %v3117 = vadd.f32 %v2766, %v3000
    %v3118 = vadd.f32 %v2767, %v3001
    %v3119 = vadd.f32 %v2768, %v3002
    %v3120 = vadd.f32 %v2769, %v3003
    %v3121 = vadd.f32 %v2770, %v3004
    %v3122 = vadd.f32 %v2771, %v3005
    %v3123 = vadd.f32 %v2772, %v3006
    %v3124 = vadd.f32 %v2773, %v3007
    %v3125 = vadd.f32 %v2774, %v3008
    %v3126 = vadd.f32 %v2775, %v3009
    %v3127 = vadd.f32 %v2776, %v3010
    %v3128 = vadd.f32 %v2777, %v3011
    %v3129 = vadd.f32 %v2778, %v3012
    %v3130 = vadd.f32 %v2779, %v3013
    %v3131 = vadd.f32 %v2780, %v3014
    %v3132 = vadd.f32 %v2781, %v3015
    %v3133 = vadd.f32 %v2782, %v3016
    %v3134 = vadd.f32 %v2783, %v3017
    %v3135 = vadd.f32 %v2784, %v3018
    %v3136 = vadd.f32 %v2785, %v3019
    %v3137 = vadd.f32 %v2786, %v3020
    %v3138 = vadd.f32 %v2787, %v3021
    %v3139 = vadd.f32 %v2788, %v3022
    %v3140 = vadd.f32 %v2789, %v3023
    %v3141 = vadd.f32 %v2790, %v3024
    %v3142 = vadd.f32 %v2791, %v3025
    %v3143 = vadd.f32 %v2792, %v3026
    %v3144 = vadd.f32 %v2793, %v3027
    %v3145 = vadd.f32 %v2794, %v3028
    %v3146 = vadd.f32 %v2795, %v3029
    %v3147 = vadd.f32 %v2796, %v3030
    %v3148 = vadd.f32 %v2797, %v3031
    %v3149 = vadd.f32 %v2798, %v3032
    %v3150 = vadd.f32 %v2799, %v3033
    %v3151 = vadd.f32 %v2800, %v3034
    %v3152 = vadd.f32 %v2801, %v3035
    %v3153 = vmul.f32 %v2327, %v2327
    %v3154 = vmul.f32 %v2328, %v2328
    %v3155 = vmul.f32 %v2329, %v2329
    %v3156 = vmul.f32 %v2330, %v2330
    %v3157 = vmul.f32 %v2331, %v2331
    %v3158 = vmul.f32 %v2332, %v2332
    %v3159 = vmul.f32 %v2333, %v2333
    %v3160 = vmul.f32 %v2334, %v2334
    %v3161 = vmul.f32 %v2335, %v2335
    %v3162 = vmul.f32 %v2336, %v2336
    %v3163 = vmul.f32 %v2337, %v2337
    %v3164 = vmul.f32 %v2338, %v2338
    %v3165 = vmul.f32 %v2339, %v2339
    %v3166 = vmul.f32 %v2340, %v2340
    %v3167 = vmul.f32 %v2341, %v2341
    %v3168 = vmul.f32 %v2342, %v2342
    %v3169 = vmul.f32 %v2343, %v2343
    %v3170 = vmul.f32 %v2344, %v2344
    %v3171 = vmul.f32 %v2345, %v2345
    %v3172 = vmul.f32 %v2346, %v2346
    %v3173 = vmul.f32 %v2347, %v2347
    %v3174 = vmul.f32 %v2348, %v2348
    %v3175 = vmul.f32 %v2349, %v2349
    %v3176 = vmul.f32 %v2350, %v2350
    %v3177 = vmul.f32 %v2351, %v2351
    %v3178 = vmul.f32 %v2352, %v2352
    %v3179 = vmul.f32 %v2353, %v2353
    %v3180 = vmul.f32 %v2354, %v2354
    %v3181 = vmul.f32 %v2355, %v2355
    %v3182 = vmul.f32 %v2356, %v2356
    %v3183 = vmul.f32 %v2357, %v2357
    %v3184 = vmul.f32 %v2358, %v2358
    %v3185 = vmul.f32 %v2359, %v2359
    %v3186 = vmul.f32 %v2360, %v2360
    %v3187 = vmul.f32 %v2361, %v2361
    %v3188 = vmul.f32 %v2362, %v2362
    %v3189 = vmul.f32 %v2363, %v2363
    %v3190 = vmul.f32 %v2364, %v2364
    %v3191 = vmul.f32 %v2365, %v2365
    %v3192 = vmul.f32 %v2366, %v2366
    %v3193 = vmul.f32 %v2367, %v2367
    %v3194 = vmul.f32 %v2368, %v2368
    %v3195 = vmul.f32 %v2369, %v2369
    %v3196 = vmul.f32 %v2370, %v2370
    %v3197 = vmul.f32 %v2371, %v2371
    %v3198 = vmul.f32 %v2372, %v2372
    %v3199 = vmul.f32 %v2373, %v2373
    %v3200 = vmul.f32 %v2374, %v2374
    %v3201 = vmul.f32 %v2375, %v2375
    %v3202 = vmul.f32 %v2376, %v2376
    %v3203 = vmul.f32 %v2377, %v2377
    %v3204 = vmul.f32 %v2378, %v2378
    %v3205 = vmul.f32 %v2379, %v2379
    %v3206 = vmul.f32 %v2380, %v2380
    %v3207 = vmul.f32 %v2381, %v2381
    %v3208 = vmul.f32 %v2382, %v2382
    %v3209 = vmul.f32 %v2383, %v2383
    %v3210 = vmul.f32 %v2384, %v2384
    %v3211 = vmul.f32 %v2385, %v2385
    %v3212 = vmul.f32 %v2386, %v2386
    %v3213 = vmul.f32 %v2387, %v2387
    %v3214 = vmul.f32 %v2388, %v2388
    %v3215 = vmul.f32 %v2389, %v2389
    %v3216 = vmul.f32 %v2390, %v2390
    %v3217 = vmul.f32 %v2391, %v2391
    %v3218 = vmul.f32 %v2392, %v2392
    %v3219 = vmul.f32 %v2393, %v2393
    %v3220 = vmul.f32 %v2394, %v2394
    %v3221 = vmul.f32 %v2395, %v2395
    %v3222 = vmul.f32 %v2396, %v2396
    %v3223 = vmul.f32 %v2397, %v2397
    %v3224 = vmul.f32 %v2398, %v2398
    %v3225 = vmul.f32 %v2399, %v2399
    %v3226 = vmul.f32 %v2400, %v2400
    %v3227 = vmul.f32 %v2401, %v2401
    %v3228 = vmul.f32 %v2402, %v2402
    %v3229 = vmul.f32 %v2403, %v2403
    %v3230 = vmul.f32 %v2404, %v2404
    %v3231 = vmul.f32 %v2405, %v2405
    %v3232 = vmul.f32 %v2406, %v2406
    %v3233 = vmul.f32 %v2407, %v2407
    %v3234 = vmul.f32 %v2408, %v2408
    %v3235 = vmul.f32 %v2409, %v2409
    %v3236 = vmul.f32 %v2410, %v2410
    %v3237 = vmul.f32 %v2411, %v2411
    %v3238 = vmul.f32 %v2412, %v2412
    %v3239 = vmul.f32 %v2413, %v2413
    %v3240 = vmul.f32 %v2414, %v2414
    %v3241 = vmul.f32 %v2415, %v2415
    %v3242 = vmul.f32 %v2416, %v2416
    %v3243 = vmul.f32 %v2417, %v2417
    %v3244 = vmul.f32 %v2418, %v2418
    %v3245 = vmul.f32 %v2419, %v2419
    %v3246 = vmul.f32 %v2420, %v2420
    %v3247 = vmul.f32 %v2421, %v2421
    %v3248 = vmul.f32 %v2422, %v2422
    %v3249 = vmul.f32 %v2423, %v2423
    %v3250 = vmul.f32 %v2424, %v2424
    %v3251 = vmul.f32 %v2425, %v2425
    %v3252 = vmul.f32 %v2426, %v2426
    %v3253 = vmul.f32 %v2427, %v2427
    %v3254 = vmul.f32 %v2428, %v2428
    %v3255 = vmul.f32 %v2429, %v2429
    %v3256 = vmul.f32 %v2430, %v2430
    %v3257 = vmul.f32 %v2431, %v2431
    %v3258 = vmul.f32 %v2432, %v2432
    %v3259 = vmul.f32 %v2433, %v2433
    %v3260 = vmul.f32 %v2434, %v2434
    %v3261 = vmul.f32 %v2435, %v2435
    %v3262 = vmul.f32 %v2436, %v2436
    %v3263 = vmul.f32 %v2437, %v2437
    %v3264 = vmul.f32 %v2438, %v2438
    %v3265 = vmul.f32 %v2439, %v2439
    %v3266 = vmul.f32 %v2440, %v2440
    %v3267 = vmul.f32 %v2441, %v2441
    %v3268 = vmul.f32 %v2442, %v2442
    %v3269 = vmul.f32 %v2443, %v2443
    %v3270 = vmul.f32 %v3153, %v2555
    %v3271 = vmul.f32 %v3154, %v2555
    %v3272 = vmul.f32 %v3155, %v2555
    %v3273 = vmul.f32 %v3156, %v2555
    %v3274 = vmul.f32 %v3157, %v2555
    %v3275 = vmul.f32 %v3158, %v2555
    %v3276 = vmul.f32 %v3159, %v2555
    %v3277 = vmul.f32 %v3160, %v2555
    %v3278 = vmul.f32 %v3161, %v2555
    %v3279 = vmul.f32 %v3162, %v2556
    %v3280 = vmul.f32 %v3163, %v2556
    %v3281 = vmul.f32 %v3164, %v2556
    %v3282 = vmul.f32 %v3165, %v2556
    %v3283 = vmul.f32 %v3166, %v2556
    %v3284 = vmul.f32 %v3167, %v2556
    %v3285 = vmul.f32 %v3168, %v2556
    %v3286 = vmul.f32 %v3169, %v2556
    %v3287 = vmul.f32 %v3170, %v2556
    %v3288 = vmul.f32 %v3171, %v2557
    %v3289 = vmul.f32 %v3172, %v2557
    %v3290 = vmul.f32 %v3173, %v2557
    %v3291 = vmul.f32 %v3174, %v2557
    %v3292 = vmul.f32 %v3175, %v2557
    %v3293 = vmul.f32 %v3176, %v2557
    %v3294 = vmul.f32 %v3177, %v2557
    %v3295 = vmul.f32 %v3178, %v2557
    %v3296 = vmul.f32 %v3179, %v2557
    %v3297 = vmul.f32 %v3180, %v2558
    %v3298 = vmul.f32 %v3181, %v2558
    %v3299 = vmul.f32 %v3182, %v2558
    %v3300 = vmul.f32 %v3183, %v2558
    %v3301 = vmul.f32 %v3184, %v2558
    %v3302 = vmul.f32 %v3185, %v2558
    %v3303 = vmul.f32 %v3186, %v2558
    %v3304 = vmul.f32 %v3187, %v2558
    %v3305 = vmul.f32 %v3188, %v2558
    %v3306 = vmul.f32 %v3189, %v2559
    %v3307 = vmul.f32 %v3190, %v2559
    %v3308 = vmul.f32 %v3191, %v2559
    %v3309 = vmul.f32 %v3192, %v2559
    %v3310 = vmul.f32 %v3193, %v2559
    %v3311 = vmul.f32 %v3194, %v2559
    %v3312 = vmul.f32 %v3195, %v2559
    %v3313 = vmul.f32 %v3196, %v2559
    %v3314 = vmul.f32 %v3197, %v2559
    %v3315 = vmul.f32 %v3198, %v2560
    %v3316 = vmul.f32 %v3199, %v2560
    %v3317 = vmul.f32 %v3200, %v2560
    %v3318 = vmul.f32 %v3201, %v2560
    %v3319 = vmul.f32 %v3202, %v2560
    %v3320 = vmul.f32 %v3203, %v2560
    %v3321 = vmul.f32 %v3204, %v2560
    %v3322 = vmul.f32 %v3205, %v2560
    %v3323 = vmul.f32 %v3206, %v2560
    %v3324 = vmul.f32 %v3207, %v2561
    %v3325 = vmul.f32 %v3208, %v2561
    %v3326 = vmul.f32 %v3209, %v2561
    %v3327 = vmul.f32 %v3210, %v2561
    %v3328 = vmul.f32 %v3211, %v2561
    %v3329 = vmul.f32 %v3212, %v2561
    %v3330 = vmul.f32 %v3213, %v2561
    %v3331 = vmul.f32 %v3214, %v2561
    %v3332 = vmul.f32 %v3215, %v2561
    %v3333 = vmul.f32 %v3216, %v2562
    %v3334 = vmul.f32 %v3217, %v2562
    %v3335 = vmul.f32 %v3218, %v2562
    %v3336 = vmul.f32 %v3219, %v2562
    %v3337 = vmul.f32 %v3220, %v2562
    %v3338 = vmul.f32 %v3221, %v2562
    %v3339 = vmul.f32 %v3222, %v2562
    %v3340 = vmul.f32 %v3223, %v2562
    %v3341 = vmul.f32 %v3224, %v2562
    %v3342 = vmul.f32 %v3225, %v2563
    %v3343 = vmul.f32 %v3226, %v2563
    %v3344 = vmul.f32 %v3227, %v2563
    %v3345 = vmul.f32 %v3228, %v2563
    %v3346 = vmul.f32 %v3229, %v2563
    %v3347 = vmul.f32 %v3230, %v2563
    %v3348 = vmul.f32 %v3231, %v2563
    %v3349 = vmul.f32 %v3232, %v2563
    %v3350 = vmul.f32 %v3233, %v2563
    %v3351 = vmul.f32 %v3234, %v2564
    %v3352 = vmul.f32 %v3235, %v2564
    %v3353 = vmul.f32 %v3236, %v2564
    %v3354 = vmul.f32 %v3237, %v2564
    %v3355 = vmul.f32 %v3238, %v2564
    %v3356 = vmul.f32 %v3239, %v2564
    %v3357 = vmul.f32 %v3240, %v2564
    %v3358 = vmul.f32 %v3241, %v2564
    %v3359 = vmul.f32 %v3242, %v2564
    %v3360 = vmul.f32 %v3243, %v2565
    %v3361 = vmul.f32 %v3244, %v2565
    %v3362 = vmul.f32 %v3245, %v2565
    %v3363 = vmul.f32 %v3246, %v2565
    %v3364 = vmul.f32 %v3247, %v2565
    %v3365 = vmul.f32 %v3248, %v2565
    %v3366 = vmul.f32 %v3249, %v2565
    %v3367 = vmul.f32 %v3250, %v2565
    %v3368 = vmul.f32 %v3251, %v2565
    %v3369 = vmul.f32 %v3252, %v2566
    %v3370 = vmul.f32 %v3253, %v2566
    %v3371 = vmul.f32 %v3254, %v2566
    %v3372 = vmul.f32 %v3255, %v2566
    %v3373 = vmul.f32 %v3256, %v2566
    %v3374 = vmul.f32 %v3257, %v2566
    %v3375 = vmul.f32 %v3258, %v2566
    %v3376 = vmul.f32 %v3259, %v2566
    %v3377 = vmul.f32 %v3260, %v2566
    %v3378 = vmul.f32 %v3261, %v2567
    %v3379 = vmul.f32 %v3262, %v2567
    %v3380 = vmul.f32 %v3263, %v2567
    %v3381 = vmul.f32 %v3264, %v2567
    %v3382 = vmul.f32 %v3265, %v2567
    %v3383 = vmul.f32 %v3266, %v2567
    %v3384 = vmul.f32 %v3267, %v2567
    %v3385 = vmul.f32 %v3268, %v2567
    %v3386 = vmul.f32 %v3269, %v2567
    %v3387 = vadd.f32 %v3036, %v3270
    %v3388 = vadd.f32 %v3037, %v3271
    %v3389 = vadd.f32 %v3038, %v3272
    %v3390 = vadd.f32 %v3039, %v3273
    %v3391 = vadd.f32 %v3040, %v3274
    %v3392 = vadd.f32 %v3041, %v3275
    %v3393 = vadd.f32 %v3042, %v3276
    %v3394 = vadd.f32 %v3043, %v3277
    %v3395 = vadd.f32 %v3044, %v3278
    %v3396 = vadd.f32 %v3045, %v3279
    %v3397 = vadd.f32 %v3046, %v3280
    %v3398 = vadd.f32 %v3047, %v3281
    %v3399 = vadd.f32 %v3048, %v3282
    %v3400 = vadd.f32 %v3049, %v3283
    %v3401 = vadd.f32 %v3050, %v3284
    %v3402 = vadd.f32 %v3051, %v3285
    %v3403 = vadd.f32 %v3052, %v3286
    %v3404 = vadd.f32 %v3053, %v3287
    %v3405 = vadd.f32 %v3054, %v3288
    %v3406 = vadd.f32 %v3055, %v3289
    %v3407 = vadd.f32 %v3056, %v3290
    %v3408 = vadd.f32 %v3057, %v3291
    %v3409 = vadd.f32 %v3058, %v3292
    %v3410 = vadd.f32 %v3059, %v3293
    %v3411 = vadd.f32 %v3060, %v3294
    %v3412 = vadd.f32 %v3061, %v3295
    %v3413 = vadd.f32 %v3062, %v3296
    %v3414 = vadd.f32 %v3063, %v3297
    %v3415 = vadd.f32 %v3064, %v3298
    %v3416 = vadd.f32 %v3065, %v3299
    %v3417 = vadd.f32 %v3066, %v3300
    %v3418 = vadd.f32 %v3067, %v3301
    %v3419 = vadd.f32 %v3068, %v3302
    %v3420 = vadd.f32 %v3069, %v3303
    %v3421 = vadd.f32 %v3070, %v3304
    %v3422 = vadd.f32 %v3071, %v3305
    %v3423 = vadd.f32 %v3072, %v3306
    %v3424 = vadd.f32 %v3073, %v3307
    %v3425 = vadd.f32 %v3074, %v3308
    %v3426 = vadd.f32 %v3075, %v3309
    %v3427 = vadd.f32 %v3076, %v3310
    %v3428 = vadd.f32 %v3077, %v3311
    %v3429 = vadd.f32 %v3078, %v3312
    %v3430 = vadd.f32 %v3079, %v3313
    %v3431 = vadd.f32 %v3080, %v3314
    %v3432 = vadd.f32 %v3081, %v3315
    %v3433 = vadd.f32 %v3082, %v3316
    %v3434 = vadd.f32 %v3083, %v3317
    %v3435 = vadd.f32 %v3084, %v3318
    %v3436 = vadd.f32 %v3085, %v3319
    %v3437 = vadd.f32 %v3086, %v3320
    %v3438 = vadd.f32 %v3087, %v3321
    %v3439 = vadd.f32 %v3088, %v3322
    %v3440 = vadd.f32 %v3089, %v3323
    %v3441 = vadd.f32 %v3090, %v3324
    %v3442 = vadd.f32 %v3091, %v3325
    %v3443 = vadd.f32 %v3092, %v3326
    %v3444 = vadd.f32 %v3093, %v3327
    %v3445 = vadd.f32 %v3094, %v3328
    %v3446 = vadd.f32 %v3095, %v3329
    %v3447 = vadd.f32 %v3096, %v3330
    %v3448 = vadd.f32 %v3097, %v3331
    %v3449 = vadd.f32 %v3098, %v3332
    %v3450 = vadd.f32 %v3099, %v3333
    %v3451 = vadd.f32 %v3100, %v3334
    %v3452 = vadd.f32 %v3101, %v3335
    %v3453 = vadd.f32 %v3102, %v3336
    %v3454 = vadd.f32 %v3103, %v3337
    %v3455 = vadd.f32 %v3104, %v3338
    %v3456 = vadd.f32 %v3105, %v3339
    %v3457 = vadd.f32 %v3106, %v3340
    %v3458 = vadd.f32 %v3107, %v3341
    %v3459 = vadd.f32 %v3108, %v3342
    %v3460 = vadd.f32 %v3109, %v3343
    %v3461 = vadd.f32 %v3110, %v3344
    %v3462 = vadd.f32 %v3111, %v3345
    %v3463 = vadd.f32 %v3112, %v3346
    %v3464 = vadd.f32 %v3113, %v3347
    %v3465 = vadd.f32 %v3114, %v3348
    %v3466 = vadd.f32 %v3115, %v3349
    %v3467 = vadd.f32 %v3116, %v3350
    %v3468 = vadd.f32 %v3117, %v3351
    %v3469 = vadd.f32 %v3118, %v3352
    %v3470 = vadd.f32 %v3119, %v3353
    %v3471 = vadd.f32 %v3120, %v3354
    %v3472 = vadd.f32 %v3121, %v3355
    %v3473 = vadd.f32 %v3122, %v3356
    %v3474 = vadd.f32 %v3123, %v3357
    %v3475 = vadd.f32 %v3124, %v3358
    %v3476 = vadd.f32 %v3125, %v3359
    %v3477 = vadd.f32 %v3126, %v3360
    %v3478 = vadd.f32 %v3127, %v3361
    %v3479 = vadd.f32 %v3128, %v3362
    %v3480 = vadd.f32 %v3129, %v3363
    %v3481 = vadd.f32 %v3130, %v3364
    %v3482 = vadd.f32 %v3131, %v3365
    %v3483 = vadd.f32 %v3132, %v3366
    %v3484 = vadd.f32 %v3133, %v3367
    %v3485 = vadd.f32 %v3134, %v3368
    %v3486 = vadd.f32 %v3135, %v3369
    %v3487 = vadd.f32 %v3136, %v3370
    %v3488 = vadd.f32 %v3137, %v3371
    %v3489 = vadd.f32 %v3138, %v3372
    %v3490 = vadd.f32 %v3139, %v3373
    %v3491 = vadd.f32 %v3140, %v3374
    %v3492 = vadd.f32 %v3141, %v3375
    %v3493 = vadd.f32 %v3142, %v3376
    %v3494 = vadd.f32 %v3143, %v3377
    %v3495 = vadd.f32 %v3144, %v3378
    %v3496 = vadd.f32 %v3145, %v3379
    %v3497 = vadd.f32 %v3146, %v3380
    %v3498 = vadd.f32 %v3147, %v3381
    %v3499 = vadd.f32 %v3148, %v3382
    %v3500 = vadd.f32 %v3149, %v3383
    %v3501 = vadd.f32 %v3150, %v3384
    %v3502 = vadd.f32 %v3151, %v3385
    %v3503 = vadd.f32 %v3152, %v3386
    %v3504 = vmax.f32 %v1603, 0.0
    %v3505 = vmax.f32 %v1604, 0.0
    %v3506 = vmax.f32 %v1605, 0.0
    %v3507 = vmax.f32 %v1606, 0.0
    %v3508 = vmax.f32 %v1607, 0.0
    %v3509 = vmax.f32 %v1608, 0.0
    %v3510 = vmax.f32 %v1609, 0.0
    %v3511 = vmax.f32 %v1610, 0.0
    %v3512 = vmax.f32 %v1611, 0.0
    %v3513 = vmax.f32 %v1612, 0.0
    %v3514 = vmax.f32 %v1613, 0.0
    %v3515 = vmax.f32 %v1614, 0.0
    %v3516 = vmax.f32 %v1615, 0.0
    %v3517 = vmax.f32 %v1616, 0.0
    %v3518 = vmax.f32 %v1617, 0.0
    %v3519 = vmax.f32 %v1618, 0.0
    %v3520 = vmax.f32 %v1619, 0.0
    %v3521 = vmax.f32 %v1620, 0.0
    %v3522 = vmax.f32 %v1621, 0.0
    %v3523 = vmax.f32 %v1622, 0.0
    %v3524 = vmax.f32 %v1623, 0.0
    %v3525 = vmax.f32 %v1624, 0.0
    %v3526 = vmax.f32 %v1625, 0.0
    %v3527 = vmax.f32 %v1626, 0.0
    %v3528 = vmax.f32 %v1627, 0.0
    %v3529 = vmax.f32 %v1628, 0.0
    %v3530 = vmax.f32 %v1629, 0.0
    %v3531 = vmax.f32 %v1630, 0.0
    %v3532 = vmax.f32 %v1631, 0.0
    %v3533 = vmax.f32 %v1632, 0.0
    %v3534 = vmax.f32 %v1633, 0.0
    %v3535 = vmax.f32 %v1634, 0.0
    %v3536 = vmax.f32 %v1635, 0.0
    %v3537 = vmax.f32 %v1636, 0.0
    %v3538 = vmax.f32 %v1637, 0.0
    %v3539 = vmax.f32 %v1638, 0.0
    %v3540 = vmax.f32 %v1639, 0.0
    %v3541 = vmax.f32 %v1640, 0.0
    %v3542 = vmax.f32 %v1641, 0.0
    %v3543 = vmax.f32 %v1642, 0.0
    %v3544 = vmax.f32 %v1643, 0.0
    %v3545 = vmax.f32 %v1644, 0.0
    %v3546 = vmax.f32 %v1645, 0.0
    %v3547 = vmax.f32 %v1646, 0.0
    %v3548 = vmax.f32 %v1647, 0.0
    %v3549 = vmax.f32 %v1648, 0.0
    %v3550 = vmax.f32 %v1649, 0.0
    %v3551 = vmax.f32 %v1650, 0.0
    %v3552 = vmax.f32 %v1651, 0.0
    %v3553 = vmax.f32 %v1652, 0.0
    %v3554 = vmax.f32 %v1653, 0.0
    %v3555 = vmax.f32 %v1654, 0.0
    %v3556 = vmax.f32 %v1655, 0.0
    %v3557 = vmax.f32 %v1656, 0.0
    %v3558 = vmax.f32 %v1657, 0.0
    %v3559 = vmax.f32 %v1658, 0.0
    %v3560 = vmax.f32 %v1659, 0.0
    %v3561 = vmax.f32 %v1660, 0.0
    %v3562 = vmax.f32 %v1661, 0.0
    %v3563 = vmax.f32 %v1662, 0.0
    %v3564 = vmax.f32 %v1663, 0.0
    %v3565 = vmax.f32 %v1664, 0.0
    %v3566 = vmax.f32 %v1665, 0.0
    %v3567 = vmax.f32 %v1666, 0.0
    %v3568 = vmax.f32 %v1667, 0.0
    %v3569 = vmax.f32 %v1668, 0.0
    %v3570 = vmax.f32 %v1669, 0.0
    %v3571 = vmax.f32 %v1670, 0.0
    %v3572 = vmax.f32 %v1671, 0.0
    %v3573 = vmax.f32 %v1672, 0.0
    %v3574 = vmax.f32 %v1673, 0.0
    %v3575 = vmax.f32 %v1674, 0.0
    %v3576 = vmax.f32 %v1675, 0.0
    %v3577 = vmax.f32 %v1676, 0.0
    %v3578 = vmax.f32 %v1677, 0.0
    %v3579 = vmax.f32 %v1678, 0.0
    %v3580 = vmax.f32 %v1679, 0.0
    %v3581 = vmax.f32 %v1680, 0.0
    %v3582 = vmax.f32 %v1681, 0.0
    %v3583 = vmax.f32 %v1682, 0.0
    %v3584 = vmax.f32 %v1683, 0.0
    %v3585 = vmax.f32 %v1684, 0.0
    %v3586 = vmax.f32 %v1685, 0.0
    %v3587 = vmax.f32 %v1686, 0.0
    %v3588 = vmax.f32 %v1687, 0.0
    %v3589 = vmax.f32 %v1688, 0.0
    %v3590 = vmax.f32 %v1689, 0.0
    %v3591 = vmax.f32 %v1690, 0.0
    %v3592 = vmax.f32 %v1691, 0.0
    %v3593 = vmax.f32 %v1692, 0.0
    %v3594 = vmax.f32 %v1693, 0.0
    %v3595 = vmax.f32 %v1694, 0.0
    %v3596 = vmax.f32 %v1695, 0.0
    %v3597 = vmax.f32 %v1696, 0.0
    %v3598 = vmax.f32 %v1697, 0.0
    %v3599 = vmax.f32 %v1698, 0.0
    %v3600 = vmax.f32 %v1699, 0.0
    %v3601 = vmax.f32 %v1700, 0.0
    %v3602 = vmax.f32 %v1701, 0.0
    %v3603 = vmax.f32 %v1702, 0.0
    %v3604 = vmax.f32 %v1703, 0.0
    %v3605 = vmax.f32 %v1704, 0.0
    %v3606 = vmax.f32 %v1705, 0.0
    %v3607 = vmax.f32 %v1706, 0.0
    %v3608 = vmax.f32 %v1707, 0.0
    %v3609 = vmax.f32 %v1708, 0.0
    %v3610 = vmax.f32 %v1709, 0.0
    %v3611 = vmax.f32 %v1710, 0.0
    %v3612 = vmax.f32 %v1711, 0.0
    %v3613 = vmax.f32 %v1712, 0.0
    %v3614 = vmax.f32 %v1713, 0.0
    %v3615 = vmax.f32 %v1714, 0.0
    %v3616 = vmax.f32 %v1715, 0.0
    %v3617 = vmax.f32 %v1716, 0.0
    %v3618 = vmax.f32 %v1717, 0.0
    %v3619 = vmax.f32 %v1718, 0.0
    %v3620 = vmax.f32 %v1719, 0.0
    %v3621 = vmax.f32 %v1963, 0.0
    %v3622 = vmax.f32 %v1964, 0.0
    %v3623 = vmax.f32 %v1965, 0.0
    %v3624 = vmax.f32 %v1966, 0.0
    %v3625 = vmax.f32 %v1967, 0.0
    %v3626 = vmax.f32 %v1968, 0.0
    %v3627 = vmax.f32 %v1969, 0.0
    %v3628 = vmax.f32 %v1970, 0.0
    %v3629 = vmax.f32 %v1971, 0.0
    %v3630 = vmax.f32 %v1972, 0.0
    %v3631 = vmax.f32 %v1973, 0.0
    %v3632 = vmax.f32 %v1974, 0.0
    %v3633 = vmax.f32 %v1975, 0.0
    %v3634 = vmax.f32 %v1976, 0.0
    %v3635 = vmax.f32 %v1977, 0.0
    %v3636 = vmax.f32 %v1978, 0.0
    %v3637 = vmax.f32 %v1979, 0.0
    %v3638 = vmax.f32 %v1980, 0.0
    %v3639 = vmax.f32 %v1981, 0.0
    %v3640 = vmax.f32 %v1982, 0.0
    %v3641 = vmax.f32 %v1983, 0.0
    %v3642 = vmax.f32 %v1984, 0.0
    %v3643 = vmax.f32 %v1985, 0.0
    %v3644 = vmax.f32 %v1986, 0.0
    %v3645 = vmax.f32 %v1987, 0.0
    %v3646 = vmax.f32 %v1988, 0.0
    %v3647 = vmax.f32 %v1989, 0.0
    %v3648 = vmax.f32 %v1990, 0.0
    %v3649 = vmax.f32 %v1991, 0.0
    %v3650 = vmax.f32 %v1992, 0.0
    %v3651 = vmax.f32 %v1993, 0.0
    %v3652 = vmax.f32 %v1994, 0.0
    %v3653 = vmax.f32 %v1995, 0.0
    %v3654 = vmax.f32 %v1996, 0.0
    %v3655 = vmax.f32 %v1997, 0.0
    %v3656 = vmax.f32 %v1998, 0.0
    %v3657 = vmax.f32 %v1999, 0.0
    %v3658 = vmax.f32 %v2000, 0.0
    %v3659 = vmax.f32 %v2001, 0.0
    %v3660 = vmax.f32 %v2002, 0.0
    %v3661 = vmax.f32 %v2003, 0.0
    %v3662 = vmax.f32 %v2004, 0.0
    %v3663 = vmax.f32 %v2005, 0.0
    %v3664 = vmax.f32 %v2006, 0.0
    %v3665 = vmax.f32 %v2007, 0.0
    %v3666 = vmax.f32 %v2008, 0.0
    %v3667 = vmax.f32 %v2009, 0.0
    %v3668 = vmax.f32 %v2010, 0.0
    %v3669 = vmax.f32 %v2011, 0.0
    %v3670 = vmax.f32 %v2012, 0.0
    %v3671 = vmax.f32 %v2013, 0.0
    %v3672 = vmax.f32 %v2014, 0.0
    %v3673 = vmax.f32 %v2015, 0.0
    %v3674 = vmax.f32 %v2016, 0.0
    %v3675 = vmax.f32 %v2017, 0.0
    %v3676 = vmax.f32 %v2018, 0.0
    %v3677 = vmax.f32 %v2019, 0.0
    %v3678 = vmax.f32 %v2020, 0.0
    %v3679 = vmax.f32 %v2021, 0.0
    %v3680 = vmax.f32 %v2022, 0.0
    %v3681 = vmax.f32 %v2023, 0.0
    %v3682 = vmax.f32 %v2024, 0.0
    %v3683 = vmax.f32 %v2025, 0.0
    %v3684 = vmax.f32 %v2026, 0.0
    %v3685 = vmax.f32 %v2027, 0.0
    %v3686 = vmax.f32 %v2028, 0.0
    %v3687 = vmax.f32 %v2029, 0.0
    %v3688 = vmax.f32 %v2030, 0.0
    %v3689 = vmax.f32 %v2031, 0.0
    %v3690 = vmax.f32 %v2032, 0.0
    %v3691 = vmax.f32 %v2033, 0.0
    %v3692 = vmax.f32 %v2034, 0.0
    %v3693 = vmax.f32 %v2035, 0.0
    %v3694 = vmax.f32 %v2036, 0.0
    %v3695 = vmax.f32 %v2037, 0.0
    %v3696 = vmax.f32 %v2038, 0.0
    %v3697 = vmax.f32 %v2039, 0.0
    %v3698 = vmax.f32 %v2040, 0.0
    %v3699 = vmax.f32 %v2041, 0.0
    %v3700 = vmax.f32 %v2042, 0.0
    %v3701 = vmax.f32 %v2043, 0.0
    %v3702 = vmax.f32 %v2044, 0.0
    %v3703 = vmax.f32 %v2045, 0.0
    %v3704 = vmax.f32 %v2046, 0.0
    %v3705 = vmax.f32 %v2047, 0.0
    %v3706 = vmax.f32 %v2048, 0.0
    %v3707 = vmax.f32 %v2049, 0.0
    %v3708 = vmax.f32 %v2050, 0.0
    %v3709 = vmax.f32 %v2051, 0.0
    %v3710 = vmax.f32 %v2052, 0.0
    %v3711 = vmax.f32 %v2053, 0.0
    %v3712 = vmax.f32 %v2054, 0.0
    %v3713 = vmax.f32 %v2055, 0.0
    %v3714 = vmax.f32 %v2056, 0.0
    %v3715 = vmax.f32 %v2057, 0.0
    %v3716 = vmax.f32 %v2058, 0.0
    %v3717 = vmax.f32 %v2059, 0.0
    %v3718 = vmax.f32 %v2060, 0.0
    %v3719 = vmax.f32 %v2061, 0.0
    %v3720 = vmax.f32 %v2062, 0.0
    %v3721 = vmax.f32 %v2063, 0.0
    %v3722 = vmax.f32 %v2064, 0.0
    %v3723 = vmax.f32 %v2065, 0.0
    %v3724 = vmax.f32 %v2066, 0.0
    %v3725 = vmax.f32 %v2067, 0.0
    %v3726 = vmax.f32 %v2068, 0.0
    %v3727 = vmax.f32 %v2069, 0.0
    %v3728 = vmax.f32 %v2070, 0.0
    %v3729 = vmax.f32 %v2071, 0.0
    %v3730 = vmax.f32 %v2072, 0.0
    %v3731 = vmax.f32 %v2073, 0.0
    %v3732 = vmax.f32 %v2074, 0.0
    %v3733 = vmax.f32 %v2075, 0.0
    %v3734 = vmax.f32 %v2076, 0.0
    %v3735 = vmax.f32 %v2077, 0.0
    %v3736 = vmax.f32 %v2078, 0.0
    %v3737 = vmax.f32 %v2079, 0.0
    %v3738 = vadd.f32 %v3504, %v3621
    %v3739 = vadd.f32 %v3505, %v3622
    %v3740 = vadd.f32 %v3506, %v3623
    %v3741 = vadd.f32 %v3507, %v3624
    %v3742 = vadd.f32 %v3508, %v3625
    %v3743 = vadd.f32 %v3509, %v3626
    %v3744 = vadd.f32 %v3510, %v3627
    %v3745 = vadd.f32 %v3511, %v3628
    %v3746 = vadd.f32 %v3512, %v3629
    %v3747 = vadd.f32 %v3513, %v3630
    %v3748 = vadd.f32 %v3514, %v3631
    %v3749 = vadd.f32 %v3515, %v3632
    %v3750 = vadd.f32 %v3516, %v3633
    %v3751 = vadd.f32 %v3517, %v3634
    %v3752 = vadd.f32 %v3518, %v3635
    %v3753 = vadd.f32 %v3519, %v3636
    %v3754 = vadd.f32 %v3520, %v3637
    %v3755 = vadd.f32 %v3521, %v3638
    %v3756 = vadd.f32 %v3522, %v3639
    %v3757 = vadd.f32 %v3523, %v3640
    %v3758 = vadd.f32 %v3524, %v3641
    %v3759 = vadd.f32 %v3525, %v3642
    %v3760 = vadd.f32 %v3526, %v3643
    %v3761 = vadd.f32 %v3527, %v3644
    %v3762 = vadd.f32 %v3528, %v3645
    %v3763 = vadd.f32 %v3529, %v3646
    %v3764 = vadd.f32 %v3530, %v3647
    %v3765 = vadd.f32 %v3531, %v3648
    %v3766 = vadd.f32 %v3532, %v3649
    %v3767 = vadd.f32 %v3533, %v3650
    %v3768 = vadd.f32 %v3534, %v3651
    %v3769 = vadd.f32 %v3535, %v3652
    %v3770 = vadd.f32 %v3536, %v3653
    %v3771 = vadd.f32 %v3537, %v3654
    %v3772 = vadd.f32 %v3538, %v3655
    %v3773 = vadd.f32 %v3539, %v3656
    %v3774 = vadd.f32 %v3540, %v3657
    %v3775 = vadd.f32 %v3541, %v3658
    %v3776 = vadd.f32 %v3542, %v3659
    %v3777 = vadd.f32 %v3543, %v3660
    %v3778 = vadd.f32 %v3544, %v3661
    %v3779 = vadd.f32 %v3545, %v3662
    %v3780 = vadd.f32 %v3546, %v3663
    %v3781 = vadd.f32 %v3547, %v3664
    %v3782 = vadd.f32 %v3548, %v3665
    %v3783 = vadd.f32 %v3549, %v3666
    %v3784 = vadd.f32 %v3550, %v3667
    %v3785 = vadd.f32 %v3551, %v3668
    %v3786 = vadd.f32 %v3552, %v3669
    %v3787 = vadd.f32 %v3553, %v3670
    %v3788 = vadd.f32 %v3554, %v3671
    %v3789 = vadd.f32 %v3555, %v3672
    %v3790 = vadd.f32 %v3556, %v3673
    %v3791 = vadd.f32 %v3557, %v3674
    %v3792 = vadd.f32 %v3558, %v3675
    %v3793 = vadd.f32 %v3559, %v3676
    %v3794 = vadd.f32 %v3560, %v3677
    %v3795 = vadd.f32 %v3561, %v3678
    %v3796 = vadd.f32 %v3562, %v3679
    %v3797 = vadd.f32 %v3563, %v3680
    %v3798 = vadd.f32 %v3564, %v3681
    %v3799 = vadd.f32 %v3565, %v3682
    %v3800 = vadd.f32 %v3566, %v3683
    %v3801 = vadd.f32 %v3567, %v3684
    %v3802 = vadd.f32 %v3568, %v3685
    %v3803 = vadd.f32 %v3569, %v3686
    %v3804 = vadd.f32 %v3570, %v3687
    %v3805 = vadd.f32 %v3571, %v3688
    %v3806 = vadd.f32 %v3572, %v3689
    %v3807 = vadd.f32 %v3573, %v3690
    %v3808 = vadd.f32 %v3574, %v3691
    %v3809 = vadd.f32 %v3575, %v3692
    %v3810 = vadd.f32 %v3576, %v3693
    %v3811 = vadd.f32 %v3577, %v3694
    %v3812 = vadd.f32 %v3578, %v3695
    %v3813 = vadd.f32 %v3579, %v3696
    %v3814 = vadd.f32 %v3580, %v3697
    %v3815 = vadd.f32 %v3581, %v3698
    %v3816 = vadd.f32 %v3582, %v3699
    %v3817 = vadd.f32 %v3583, %v3700
    %v3818 = vadd.f32 %v3584, %v3701
    %v3819 = vadd.f32 %v3585, %v3702
    %v3820 = vadd.f32 %v3586, %v3703
    %v3821 = vadd.f32 %v3587, %v3704
    %v3822 = vadd.f32 %v3588, %v3705
    %v3823 = vadd.f32 %v3589, %v3706
    %v3824 = vadd.f32 %v3590, %v3707
    %v3825 = vadd.f32 %v3591, %v3708
    %v3826 = vadd.f32 %v3592, %v3709
    %v3827 = vadd.f32 %v3593, %v3710
    %v3828 = vadd.f32 %v3594, %v3711
    %v3829 = vadd.f32 %v3595, %v3712
    %v3830 = vadd.f32 %v3596, %v3713
    %v3831 = vadd.f32 %v3597, %v3714
    %v3832 = vadd.f32 %v3598, %v3715
    %v3833 = vadd.f32 %v3599, %v3716
    %v3834 = vadd.f32 %v3600, %v3717
    %v3835 = vadd.f32 %v3601, %v3718
    %v3836 = vadd.f32 %v3602, %v3719
    %v3837 = vadd.f32 %v3603, %v3720
    %v3838 = vadd.f32 %v3604, %v3721
    %v3839 = vadd.f32 %v3605, %v3722
    %v3840 = vadd.f32 %v3606, %v3723
    %v3841 = vadd.f32 %v3607, %v3724
    %v3842 = vadd.f32 %v3608, %v3725
    %v3843 = vadd.f32 %v3609, %v3726
    %v3844 = vadd.f32 %v3610, %v3727
    %v3845 = vadd.f32 %v3611, %v3728
    %v3846 = vadd.f32 %v3612, %v3729
    %v3847 = vadd.f32 %v3613, %v3730
    %v3848 = vadd.f32 %v3614, %v3731
    %v3849 = vadd.f32 %v3615, %v3732
    %v3850 = vadd.f32 %v3616, %v3733
    %v3851 = vadd.f32 %v3617, %v3734
    %v3852 = vadd.f32 %v3618, %v3735
    %v3853 = vadd.f32 %v3619, %v3736
    %v3854 = vadd.f32 %v3620, %v3737
    %v3855 = vmax.f32 %v2327, 0.0
    %v3856 = vmax.f32 %v2328, 0.0
    %v3857 = vmax.f32 %v2329, 0.0
    %v3858 = vmax.f32 %v2330, 0.0
    %v3859 = vmax.f32 %v2331, 0.0
    %v3860 = vmax.f32 %v2332, 0.0
    %v3861 = vmax.f32 %v2333, 0.0
    %v3862 = vmax.f32 %v2334, 0.0
    %v3863 = vmax.f32 %v2335, 0.0
    %v3864 = vmax.f32 %v2336, 0.0
    %v3865 = vmax.f32 %v2337, 0.0
    %v3866 = vmax.f32 %v2338, 0.0
    %v3867 = vmax.f32 %v2339, 0.0
    %v3868 = vmax.f32 %v2340, 0.0
    %v3869 = vmax.f32 %v2341, 0.0
    %v3870 = vmax.f32 %v2342, 0.0
    %v3871 = vmax.f32 %v2343, 0.0
    %v3872 = vmax.f32 %v2344, 0.0
    %v3873 = vmax.f32 %v2345, 0.0
    %v3874 = vmax.f32 %v2346, 0.0
    %v3875 = vmax.f32 %v2347, 0.0
    %v3876 = vmax.f32 %v2348, 0.0
    %v3877 = vmax.f32 %v2349, 0.0
    %v3878 = vmax.f32 %v2350, 0.0
    %v3879 = vmax.f32 %v2351, 0.0
    %v3880 = vmax.f32 %v2352, 0.0
    %v3881 = vmax.f32 %v2353, 0.0
    %v3882 = vmax.f32 %v2354, 0.0
    %v3883 = vmax.f32 %v2355, 0.0
    %v3884 = vmax.f32 %v2356, 0.0
    %v3885 = vmax.f32 %v2357, 0.0
    %v3886 = vmax.f32 %v2358, 0.0
    %v3887 = vmax.f32 %v2359, 0.0
    %v3888 = vmax.f32 %v2360, 0.0
    %v3889 = vmax.f32 %v2361, 0.0
    %v3890 = vmax.f32 %v2362, 0.0
    %v3891 = vmax.f32 %v2363, 0.0
    %v3892 = vmax.f32 %v2364, 0.0
    %v3893 = vmax.f32 %v2365, 0.0
    %v3894 = vmax.f32 %v2366, 0.0
    %v3895 = vmax.f32 %v2367, 0.0
    %v3896 = vmax.f32 %v2368, 0.0
    %v3897 = vmax.f32 %v2369, 0.0
    %v3898 = vmax.f32 %v2370, 0.0
    %v3899 = vmax.f32 %v2371, 0.0
    %v3900 = vmax.f32 %v2372, 0.0
    %v3901 = vmax.f32 %v2373, 0.0
    %v3902 = vmax.f32 %v2374, 0.0
    %v3903 = vmax.f32 %v2375, 0.0
    %v3904 = vmax.f32 %v2376, 0.0
    %v3905 = vmax.f32 %v2377, 0.0
    %v3906 = vmax.f32 %v2378, 0.0
    %v3907 = vmax.f32 %v2379, 0.0
    %v3908 = vmax.f32 %v2380, 0.0
    %v3909 = vmax.f32 %v2381, 0.0
    %v3910 = vmax.f32 %v2382, 0.0
    %v3911 = vmax.f32 %v2383, 0.0
    %v3912 = vmax.f32 %v2384, 0.0
    %v3913 = vmax.f32 %v2385, 0.0
    %v3914 = vmax.f32 %v2386, 0.0
    %v3915 = vmax.f32 %v2387, 0.0
    %v3916 = vmax.f32 %v2388, 0.0
    %v3917 = vmax.f32 %v2389, 0.0
    %v3918 = vmax.f32 %v2390, 0.0
    %v3919 = vmax.f32 %v2391, 0.0
    %v3920 = vmax.f32 %v2392, 0.0
    %v3921 = vmax.f32 %v2393, 0.0
    %v3922 = vmax.f32 %v2394, 0.0
    %v3923 = vmax.f32 %v2395, 0.0
    %v3924 = vmax.f32 %v2396, 0.0
    %v3925 = vmax.f32 %v2397, 0.0
    %v3926 = vmax.f32 %v2398, 0.0
    %v3927 = vmax.f32 %v2399, 0.0
    %v3928 = vmax.f32 %v2400, 0.0
    %v3929 = vmax.f32 %v2401, 0.0
    %v3930 = vmax.f32 %v2402, 0.0
    %v3931 = vmax.f32 %v2403, 0.0
    %v3932 = vmax.f32 %v2404, 0.0
    %v3933 = vmax.f32 %v2405, 0.0
    %v3934 = vmax.f32 %v2406, 0.0
    %v3935 = vmax.f32 %v2407, 0.0
    %v3936 = vmax.f32 %v2408, 0.0
    %v3937 = vmax.f32 %v2409, 0.0
    %v3938 = vmax.f32 %v2410, 0.0
    %v3939 = vmax.f32 %v2411, 0.0
    %v3940 = vmax.f32 %v2412, 0.0
    %v3941 = vmax.f32 %v2413, 0.0
    %v3942 = vmax.f32 %v2414, 0.0
    %v3943 = vmax.f32 %v2415, 0.0
    %v3944 = vmax.f32 %v2416, 0.0
    %v3945 = vmax.f32 %v2417, 0.0
    %v3946 = vmax.f32 %v2418, 0.0
    %v3947 = vmax.f32 %v2419, 0.0
    %v3948 = vmax.f32 %v2420, 0.0
    %v3949 = vmax.f32 %v2421, 0.0
    %v3950 = vmax.f32 %v2422, 0.0
    %v3951 = vmax.f32 %v2423, 0.0
    %v3952 = vmax.f32 %v2424, 0.0
    %v3953 = vmax.f32 %v2425, 0.0
    %v3954 = vmax.f32 %v2426, 0.0
    %v3955 = vmax.f32 %v2427, 0.0
    %v3956 = vmax.f32 %v2428, 0.0
    %v3957 = vmax.f32 %v2429, 0.0
    %v3958 = vmax.f32 %v2430, 0.0
    %v3959 = vmax.f32 %v2431, 0.0
    %v3960 = vmax.f32 %v2432, 0.0
    %v3961 = vmax.f32 %v2433, 0.0
    %v3962 = vmax.f32 %v2434, 0.0
    %v3963 = vmax.f32 %v2435, 0.0
    %v3964 = vmax.f32 %v2436, 0.0
    %v3965 = vmax.f32 %v2437, 0.0
    %v3966 = vmax.f32 %v2438, 0.0
    %v3967 = vmax.f32 %v2439, 0.0
    %v3968 = vmax.f32 %v2440, 0.0
    %v3969 = vmax.f32 %v2441, 0.0
    %v3970 = vmax.f32 %v2442, 0.0
    %v3971 = vmax.f32 %v2443, 0.0
    %v3972 = vadd.f32 %v3738, %v3855
    %v3973 = vadd.f32 %v3739, %v3856
    %v3974 = vadd.f32 %v3740, %v3857
    %v3975 = vadd.f32 %v3741, %v3858
    %v3976 = vadd.f32 %v3742, %v3859
    %v3977 = vadd.f32 %v3743, %v3860
    %v3978 = vadd.f32 %v3744, %v3861
    %v3979 = vadd.f32 %v3745, %v3862
    %v3980 = vadd.f32 %v3746, %v3863
    %v3981 = vadd.f32 %v3747, %v3864
    %v3982 = vadd.f32 %v3748, %v3865
    %v3983 = vadd.f32 %v3749, %v3866
    %v3984 = vadd.f32 %v3750, %v3867
    %v3985 = vadd.f32 %v3751, %v3868
    %v3986 = vadd.f32 %v3752, %v3869
    %v3987 = vadd.f32 %v3753, %v3870
    %v3988 = vadd.f32 %v3754, %v3871
    %v3989 = vadd.f32 %v3755, %v3872
    %v3990 = vadd.f32 %v3756, %v3873
    %v3991 = vadd.f32 %v3757, %v3874
    %v3992 = vadd.f32 %v3758, %v3875
    %v3993 = vadd.f32 %v3759, %v3876
    %v3994 = vadd.f32 %v3760, %v3877
    %v3995 = vadd.f32 %v3761, %v3878
    %v3996 = vadd.f32 %v3762, %v3879
    %v3997 = vadd.f32 %v3763, %v3880
    %v3998 = vadd.f32 %v3764, %v3881
    %v3999 = vadd.f32 %v3765, %v3882
    %v4000 = vadd.f32 %v3766, %v3883
    %v4001 = vadd.f32 %v3767, %v3884
    %v4002 = vadd.f32 %v3768, %v3885
    %v4003 = vadd.f32 %v3769, %v3886
    %v4004 = vadd.f32 %v3770, %v3887
    %v4005 = vadd.f32 %v3771, %v3888
    %v4006 = vadd.f32 %v3772, %v3889
    %v4007 = vadd.f32 %v3773, %v3890
    %v4008 = vadd.f32 %v3774, %v3891
    %v4009 = vadd.f32 %v3775, %v3892
    %v4010 = vadd.f32 %v3776, %v3893
    %v4011 = vadd.f32 %v3777, %v3894
    %v4012 = vadd.f32 %v3778, %v3895
    %v4013 = vadd.f32 %v3779, %v3896
    %v4014 = vadd.f32 %v3780, %v3897
    %v4015 = vadd.f32 %v3781, %v3898
    %v4016 = vadd.f32 %v3782, %v3899
    %v4017 = vadd.f32 %v3783, %v3900
    %v4018 = vadd.f32 %v3784, %v3901
    %v4019 = vadd.f32 %v3785, %v3902
    %v4020 = vadd.f32 %v3786, %v3903
    %v4021 = vadd.f32 %v3787, %v3904
    %v4022 = vadd.f32 %v3788, %v3905
    %v4023 = vadd.f32 %v3789, %v3906
    %v4024 = vadd.f32 %v3790, %v3907
    %v4025 = vadd.f32 %v3791, %v3908
    %v4026 = vadd.f32 %v3792, %v3909
    %v4027 = vadd.f32 %v3793, %v3910
    %v4028 = vadd.f32 %v3794, %v3911
    %v4029 = vadd.f32 %v3795, %v3912
    %v4030 = vadd.f32 %v3796, %v3913
    %v4031 = vadd.f32 %v3797, %v3914
    %v4032 = vadd.f32 %v3798, %v3915
    %v4033 = vadd.f32 %v3799, %v3916
    %v4034 = vadd.f32 %v3800, %v3917
    %v4035 = vadd.f32 %v3801, %v3918
    %v4036 = vadd.f32 %v3802, %v3919
    %v4037 = vadd.f32 %v3803, %v3920
    %v4038 = vadd.f32 %v3804, %v3921
    %v4039 = vadd.f32 %v3805, %v3922
    %v4040 = vadd.f32 %v3806, %v3923
    %v4041 = vadd.f32 %v3807, %v3924
    %v4042 = vadd.f32 %v3808, %v3925
    %v4043 = vadd.f32 %v3809, %v3926
    %v4044 = vadd.f32 %v3810, %v3927
    %v4045 = vadd.f32 %v3811, %v3928
    %v4046 = vadd.f32 %v3812, %v3929
    %v4047 = vadd.f32 %v3813, %v3930
    %v4048 = vadd.f32 %v3814, %v3931
    %v4049 = vadd.f32 %v3815, %v3932
    %v4050 = vadd.f32 %v3816, %v3933
    %v4051 = vadd.f32 %v3817, %v3934
    %v4052 = vadd.f32 %v3818, %v3935
    %v4053 = vadd.f32 %v3819, %v3936
    %v4054 = vadd.f32 %v3820, %v3937
    %v4055 = vadd.f32 %v3821, %v3938
    %v4056 = vadd.f32 %v3822, %v3939
    %v4057 = vadd.f32 %v3823, %v3940
    %v4058 = vadd.f32 %v3824, %v3941
    %v4059 = vadd.f32 %v3825, %v3942
    %v4060 = vadd.f32 %v3826, %v3943
    %v4061 = vadd.f32 %v3827, %v3944
    %v4062 = vadd.f32 %v3828, %v3945
    %v4063 = vadd.f32 %v3829, %v3946
    %v4064 = vadd.f32 %v3830, %v3947
    %v4065 = vadd.f32 %v3831, %v3948
    %v4066 = vadd.f32 %v3832, %v3949
    %v4067 = vadd.f32 %v3833, %v3950
    %v4068 = vadd.f32 %v3834, %v3951
    %v4069 = vadd.f32 %v3835, %v3952
    %v4070 = vadd.f32 %v3836, %v3953
    %v4071 = vadd.f32 %v3837, %v3954
    %v4072 = vadd.f32 %v3838, %v3955
    %v4073 = vadd.f32 %v3839, %v3956
    %v4074 = vadd.f32 %v3840, %v3957
    %v4075 = vadd.f32 %v3841, %v3958
    %v4076 = vadd.f32 %v3842, %v3959
    %v4077 = vadd.f32 %v3843, %v3960
    %v4078 = vadd.f32 %v3844, %v3961
    %v4079 = vadd.f32 %v3845, %v3962
    %v4080 = vadd.f32 %v3846, %v3963
    %v4081 = vadd.f32 %v3847, %v3964
    %v4082 = vadd.f32 %v3848, %v3965
    %v4083 = vadd.f32 %v3849, %v3966
    %v4084 = vadd.f32 %v3850, %v3967
    %v4085 = vadd.f32 %v3851, %v3968
    %v4086 = vadd.f32 %v3852, %v3969
    %v4087 = vadd.f32 %v3853, %v3970
    %v4088 = vadd.f32 %v3854, %v3971
    %v4089 = vadd.f32 %v3387, %v3388
    %v4090 = vadd.f32 %v4089, %v3389
    %v4091 = vadd.f32 %v4090, %v3390
    %v4092 = vadd.f32 %v4091, %v3391
    %v4093 = vadd.f32 %v4092, %v3392
    %v4094 = vadd.f32 %v4093, %v3393
    %v4095 = vadd.f32 %v4094, %v3394
    %v4096 = vadd.f32 %v4095, %v3395
    %v4097 = vadd.f32 %v4096, %v3396
    %v4098 = vadd.f32 %v4097, %v3397
    %v4099 = vadd.f32 %v4098, %v3398
    %v4100 = vadd.f32 %v4099, %v3399
    %v4101 = vadd.f32 %v4100, %v3400
    %v4102 = vadd.f32 %v4101, %v3401
    %v4103 = vadd.f32 %v4102, %v3402
    %v4104 = vadd.f32 %v4103, %v3403
    %v4105 = vadd.f32 %v4104, %v3404
    %v4106 = vadd.f32 %v4105, %v3405
    %v4107 = vadd.f32 %v4106, %v3406
    %v4108 = vadd.f32 %v4107, %v3407
    %v4109 = vadd.f32 %v4108, %v3408
    %v4110 = vadd.f32 %v4109, %v3409
    %v4111 = vadd.f32 %v4110, %v3410
    %v4112 = vadd.f32 %v4111, %v3411
    %v4113 = vadd.f32 %v4112, %v3412
    %v4114 = vadd.f32 %v4113, %v3413
    %v4115 = vadd.f32 %v4114, %v3414
    %v4116 = vadd.f32 %v4115, %v3415
    %v4117 = vadd.f32 %v4116, %v3416
    %v4118 = vadd.f32 %v4117, %v3417
    %v4119 = vadd.f32 %v4118, %v3418
    %v4120 = vadd.f32 %v4119, %v3419
    %v4121 = vadd.f32 %v4120, %v3420
    %v4122 = vadd.f32 %v4121, %v3421
    %v4123 = vadd.f32 %v4122, %v3422
    %v4124 = vadd.f32 %v4123, %v3423
    %v4125 = vadd.f32 %v4124, %v3424
    %v4126 = vadd.f32 %v4125, %v3425
    %v4127 = vadd.f32 %v4126, %v3426
    %v4128 = vadd.f32 %v4127, %v3427
    %v4129 = vadd.f32 %v4128, %v3428
    %v4130 = vadd.f32 %v4129, %v3429
    %v4131 = vadd.f32 %v4130, %v3430
    %v4132 = vadd.f32 %v4131, %v3431
    %v4133 = vadd.f32 %v4132, %v3432
    %v4134 = vadd.f32 %v4133, %v3433
    %v4135 = vadd.f32 %v4134, %v3434
    %v4136 = vadd.f32 %v4135, %v3435
    %v4137 = vadd.f32 %v4136, %v3436
    %v4138 = vadd.f32 %v4137, %v3437
    %v4139 = vadd.f32 %v4138, %v3438
    %v4140 = vadd.f32 %v4139, %v3439
    %v4141 = vadd.f32 %v4140, %v3440
    %v4142 = vadd.f32 %v4141, %v3441
    %v4143 = vadd.f32 %v4142, %v3442
    %v4144 = vadd.f32 %v4143, %v3443
    %v4145 = vadd.f32 %v4144, %v3444
    %v4146 = vadd.f32 %v4145, %v3445
    %v4147 = vadd.f32 %v4146, %v3446
    %v4148 = vadd.f32 %v4147, %v3447
    %v4149 = vadd.f32 %v4148, %v3448
    %v4150 = vadd.f32 %v4149, %v3449
    %v4151 = vadd.f32 %v4150, %v3450
    %v4152 = vadd.f32 %v4151, %v3451
    %v4153 = vadd.f32 %v4152, %v3452
    %v4154 = vadd.f32 %v4153, %v3453
    %v4155 = vadd.f32 %v4154, %v3454
    %v4156 = vadd.f32 %v4155, %v3455
    %v4157 = vadd.f32 %v4156, %v3456
    %v4158 = vadd.f32 %v4157, %v3457
    %v4159 = vadd.f32 %v4158, %v3458
    %v4160 = vadd.f32 %v4159, %v3459
    %v4161 = vadd.f32 %v4160, %v3460
    %v4162 = vadd.f32 %v4161, %v3461
    %v4163 = vadd.f32 %v4162, %v3462
    %v4164 = vadd.f32 %v4163, %v3463
    %v4165 = vadd.f32 %v4164, %v3464
    %v4166 = vadd.f32 %v4165, %v3465
    %v4167 = vadd.f32 %v4166, %v3466
    %v4168 = vadd.f32 %v4167, %v3467
    %v4169 = vadd.f32 %v4168, %v3468
    %v4170 = vadd.f32 %v4169, %v3469
    %v4171 = vadd.f32 %v4170, %v3470
    %v4172 = vadd.f32 %v4171, %v3471
    %v4173 = vadd.f32 %v4172, %v3472
    %v4174 = vadd.f32 %v4173, %v3473
    %v4175 = vadd.f32 %v4174, %v3474
    %v4176 = vadd.f32 %v4175, %v3475
    %v4177 = vadd.f32 %v4176, %v3476
    %v4178 = vadd.f32 %v4177, %v3477
    %v4179 = vadd.f32 %v4178, %v3478
    %v4180 = vadd.f32 %v4179, %v3479
    %v4181 = vadd.f32 %v4180, %v3480
    %v4182 = vadd.f32 %v4181, %v3481
    %v4183 = vadd.f32 %v4182, %v3482
    %v4184 = vadd.f32 %v4183, %v3483
    %v4185 = vadd.f32 %v4184, %v3484
    %v4186 = vadd.f32 %v4185, %v3485
    %v4187 = vadd.f32 %v4186, %v3486
    %v4188 = vadd.f32 %v4187, %v3487
    %v4189 = vadd.f32 %v4188, %v3488
    %v4190 = vadd.f32 %v4189, %v3489
    %v4191 = vadd.f32 %v4190, %v3490
    %v4192 = vadd.f32 %v4191, %v3491
    %v4193 = vadd.f32 %v4192, %v3492
    %v4194 = vadd.f32 %v4193, %v3493
    %v4195 = vadd.f32 %v4194, %v3494
    %v4196 = vadd.f32 %v4195, %v3495
    %v4197 = vadd.f32 %v4196, %v3496
    %v4198 = vadd.f32 %v4197, %v3497
    %v4199 = vadd.f32 %v4198, %v3498
    %v4200 = vadd.f32 %v4199, %v3499
    %v4201 = vadd.f32 %v4200, %v3500
    %v4202 = vadd.f32 %v4201, %v3501
    %v4203 = vadd.f32 %v4202, %v3502
    %v4204 = vadd.f32 %v4203, %v3503
    %4205 = vadd.xlane.f32.xlu0 %v4204
    %v4206 = vpop.xlane.xlu0 %4205
    %v4207 = vrot.slane %v4206, 4
    %v4208 = vadd.f32 %v4206, %v4207
    %v4209 = vrot.slane %v4208, 2
    %v4210 = vadd.f32 %v4208, %v4209
    %v4211 = vrot.slane %v4210, 1
    %v4212 = vadd.f32 %v4210, %v4211
    %s4213 = vtos %v4212
    %s4214 = smul.f32 %s4213, 9.56535e-06
    %s4215 = scalar_lea.smem [#allocation2], 0
    %4216 = sst [smem:[%s4215]] %s4214
    %v4217 = vadd.f32 %v3972, %v3973
    %v4218 = vadd.f32 %v4217, %v3974
    %v4219 = vadd.f32 %v4218, %v3975
    %v4220 = vadd.f32 %v4219, %v3976
    %v4221 = vadd.f32 %v4220, %v3977
    %v4222 = vadd.f32 %v4221, %v3978
    %v4223 = vadd.f32 %v4222, %v3979
    %v4224 = vadd.f32 %v4223, %v3980
    %v4225 = vadd.f32 %v4224, %v3981
    %v4226 = vadd.f32 %v4225, %v3982
    %v4227 = vadd.f32 %v4226, %v3983
    %v4228 = vadd.f32 %v4227, %v3984
    %v4229 = vadd.f32 %v4228, %v3985
    %v4230 = vadd.f32 %v4229, %v3986
    %v4231 = vadd.f32 %v4230, %v3987
    %v4232 = vadd.f32 %v4231, %v3988
    %v4233 = vadd.f32 %v4232, %v3989
    %v4234 = vadd.f32 %v4233, %v3990
    %v4235 = vadd.f32 %v4234, %v3991
    %v4236 = vadd.f32 %v4235, %v3992
    %v4237 = vadd.f32 %v4236, %v3993
    %v4238 = vadd.f32 %v4237, %v3994
    %v4239 = vadd.f32 %v4238, %v3995
    %v4240 = vadd.f32 %v4239, %v3996
    %v4241 = vadd.f32 %v4240, %v3997
    %v4242 = vadd.f32 %v4241, %v3998
    %v4243 = vadd.f32 %v4242, %v3999
    %v4244 = vadd.f32 %v4243, %v4000
    %v4245 = vadd.f32 %v4244, %v4001
    %v4246 = vadd.f32 %v4245, %v4002
    %v4247 = vadd.f32 %v4246, %v4003
    %v4248 = vadd.f32 %v4247, %v4004
    %v4249 = vadd.f32 %v4248, %v4005
    %v4250 = vadd.f32 %v4249, %v4006
    %v4251 = vadd.f32 %v4250, %v4007
    %v4252 = vadd.f32 %v4251, %v4008
    %v4253 = vadd.f32 %v4252, %v4009
    %v4254 = vadd.f32 %v4253, %v4010
    %v4255 = vadd.f32 %v4254, %v4011
    %v4256 = vadd.f32 %v4255, %v4012
    %v4257 = vadd.f32 %v4256, %v4013
    %v4258 = vadd.f32 %v4257, %v4014
    %v4259 = vadd.f32 %v4258, %v4015
    %v4260 = vadd.f32 %v4259, %v4016
    %v4261 = vadd.f32 %v4260, %v4017
    %v4262 = vadd.f32 %v4261, %v4018
    %v4263 = vadd.f32 %v4262, %v4019
    %v4264 = vadd.f32 %v4263, %v4020
    %v4265 = vadd.f32 %v4264, %v4021
    %v4266 = vadd.f32 %v4265, %v4022
    %v4267 = vadd.f32 %v4266, %v4023
    %v4268 = vadd.f32 %v4267, %v4024
    %v4269 = vadd.f32 %v4268, %v4025
    %v4270 = vadd.f32 %v4269, %v4026
    %v4271 = vadd.f32 %v4270, %v4027
    %v4272 = vadd.f32 %v4271, %v4028
    %v4273 = vadd.f32 %v4272, %v4029
    %v4274 = vadd.f32 %v4273, %v4030
    %v4275 = vadd.f32 %v4274, %v4031
    %v4276 = vadd.f32 %v4275, %v4032
    %v4277 = vadd.f32 %v4276, %v4033
    %v4278 = vadd.f32 %v4277, %v4034
    %v4279 = vadd.f32 %v4278, %v4035
    %v4280 = vadd.f32 %v4279, %v4036
    %v4281 = vadd.f32 %v4280, %v4037
    %v4282 = vadd.f32 %v4281, %v4038
    %v4283 = vadd.f32 %v4282, %v4039
    %v4284 = vadd.f32 %v4283, %v4040
    %v4285 = vadd.f32 %v4284, %v4041
    %v4286 = vadd.f32 %v4285, %v4042
    %v4287 = vadd.f32 %v4286, %v4043
    %v4288 = vadd.f32 %v4287, %v4044
    %v4289 = vadd.f32 %v4288, %v4045
    %v4290 = vadd.f32 %v4289, %v4046
    %v4291 = vadd.f32 %v4290, %v4047
    %v4292 = vadd.f32 %v4291, %v4048
    %v4293 = vadd.f32 %v4292, %v4049
    %v4294 = vadd.f32 %v4293, %v4050
    %v4295 = vadd.f32 %v4294, %v4051
    %v4296 = vadd.f32 %v4295, %v4052
    %v4297 = vadd.f32 %v4296, %v4053
    %v4298 = vadd.f32 %v4297, %v4054
    %v4299 = vadd.f32 %v4298, %v4055
    %v4300 = vadd.f32 %v4299, %v4056
    %v4301 = vadd.f32 %v4300, %v4057
    %v4302 = vadd.f32 %v4301, %v4058
    %v4303 = vadd.f32 %v4302, %v4059
    %v4304 = vadd.f32 %v4303, %v4060
    %v4305 = vadd.f32 %v4304, %v4061
    %v4306 = vadd.f32 %v4305, %v4062
    %v4307 = vadd.f32 %v4306, %v4063
    %v4308 = vadd.f32 %v4307, %v4064
    %v4309 = vadd.f32 %v4308, %v4065
    %v4310 = vadd.f32 %v4309, %v4066
    %v4311 = vadd.f32 %v4310, %v4067
    %v4312 = vadd.f32 %v4311, %v4068
    %v4313 = vadd.f32 %v4312, %v4069
    %v4314 = vadd.f32 %v4313, %v4070
    %v4315 = vadd.f32 %v4314, %v4071
    %v4316 = vadd.f32 %v4315, %v4072
    %v4317 = vadd.f32 %v4316, %v4073
    %v4318 = vadd.f32 %v4317, %v4074
    %v4319 = vadd.f32 %v4318, %v4075
    %v4320 = vadd.f32 %v4319, %v4076
    %v4321 = vadd.f32 %v4320, %v4077
    %v4322 = vadd.f32 %v4321, %v4078
    %v4323 = vadd.f32 %v4322, %v4079
    %v4324 = vadd.f32 %v4323, %v4080
    %v4325 = vadd.f32 %v4324, %v4081
    %v4326 = vadd.f32 %v4325, %v4082
    %v4327 = vadd.f32 %v4326, %v4083
    %v4328 = vadd.f32 %v4327, %v4084
    %v4329 = vadd.f32 %v4328, %v4085
    %v4330 = vadd.f32 %v4329, %v4086
    %v4331 = vadd.f32 %v4330, %v4087
    %v4332 = vadd.f32 %v4331, %v4088
    %4333 = vadd.xlane.f32.xlu0 %v4332
    %v4334 = vpop.xlane.xlu0 %4333
    %v4335 = vrot.slane %v4334, 4
    %v4336 = vadd.f32 %v4334, %v4335
    %v4337 = vrot.slane %v4336, 2
    %v4338 = vadd.f32 %v4336, %v4337
    %v4339 = vrot.slane %v4338, 1
    %v4340 = vadd.f32 %v4338, %v4339
    %s4341 = vtos %v4340
    %s4342 = smul.f32 %s4341, 9.56535e-06
    %s4343 = scalar_lea.smem [#allocation2], 1
    %4344 = sst [smem:[%s4343]] %s4342
    // Predicated region
    $region6: #{tv3d_pallas.1} parent=1 // pred_check
      _
    $region7: #{tv3d_pallas.1} parent=1 // pred_check_branch
      %4346 = sbr.rel (0) target = $region9
    $region8: #{tv3d_pallas.1} parent=1 // pred_region
      %s4348 = ssub.s32 16, 16
      %4349 = vsyncadd [#allocation3], %s4348
      %s4351 = sshll.u32 %s1, 4
      %s4352 = int_to_ptr.vmem [resolvable:$true] %s4351
      %4354 = dma.smem_to_vmem [#allocation2], 16, %s4352, [#allocation3]
    $region9: #{tv3d_pallas.1} parent=1 // pred_fallthru
      _
    // Predicated region
    $region10: #{tv3d_pallas.1} parent=1 // pred_check
      _
    $region11: #{tv3d_pallas.1} parent=1 // pred_check_branch
      %4356 = sbr.rel (0) target = $region13
    $region12: #{tv3d_pallas.1} parent=1 // pred_region
      %4357 = dma.done [#allocation3], 16
    $region13: #{tv3d_pallas.1} parent=1 // pred_fallthru
      _
    %4358 = sfence
    %4359 = vsyncpa [#allocation3], 1

</llo_original>
